<compile_context>
chip_gen: v5e
topology: v5e:2x2
jax: 0.10.0
libtpu: 0.0.40
codegen_flags: <defaults>
</compile_context>

<pallas_src>
import functools

import jax
import jax.numpy as jnp
from jax.experimental import pallas as pl
from jax.experimental.pallas import tpu as pltpu

EPS = 1e-5


# ---------------------------------------------------------------------------
# Kernels
# ---------------------------------------------------------------------------
def ln_noaffine_kernel(x_ref, o_ref):
    x = x_ref[...]
    mean = jnp.mean(x, axis=-1, keepdims=True)
    var = jnp.mean((x - mean) ** 2, axis=-1, keepdims=True)
    o_ref[...] = (x - mean) * jax.lax.rsqrt(var + EPS)


def ln_affine_kernel(x_ref, g_ref, b_ref, o_ref):
    x = x_ref[...]
    mean = jnp.mean(x, axis=-1, keepdims=True)
    var = jnp.mean((x - mean) ** 2, axis=-1, keepdims=True)
    o_ref[...] = (x - mean) * jax.lax.rsqrt(var + EPS) * g_ref[...] + b_ref[...]


def matmul_bias_kernel(x_ref, w_ref, b_ref, o_ref):
    """Row-tiled Y = X @ W + b.  Operands cast to the weight dtype (bf16 for the
    hoisted projection / fused prediction heads), accumulation in f32."""
    x = x_ref[...].astype(w_ref.dtype)
    acc = jnp.dot(x, w_ref[...], preferred_element_type=jnp.float32)
    o_ref[...] = acc + b_ref[...]


def lstm_recurrence_kernel(gx_ref, whh_ref, out_ref, h_scr, c_scr):
    """Recurrent LSTM core.  gates_x (= x @ W_ih + b_ih + b_hh) is precomputed,
    so each timestep is only h @ W_hh + elementwise gate math.  Grid axis 0
    walks time chunks sequentially; the h/c carry lives in VMEM scratch."""
    @pl.when(pl.program_id(0) == 0)
    def _():
        h_scr[...] = jnp.zeros_like(h_scr)
        c_scr[...] = jnp.zeros_like(c_scr)

    tc = gx_ref.shape[0]
    H = h_scr.shape[-1]
    whh = whh_ref[...]        # (H, 4H), hoisted out of the unrolled time loop
    h = h_scr[...]
    c = c_scr[...]
    # Statically unrolled time chunk: every gx_ref[j] / out_ref[j] access has a
    # static index and the scheduler gets a TC-step window to overlap units.
    for j in range(tc):
        gates = gx_ref[j] + jnp.dot(h, whh, preferred_element_type=jnp.float32)
        # PyTorch gate order: i, f, g, o.  (Pick H % 128 == 0 for real configs
        # so every gate slice is lane-aligned and stores are lane-dense.)
        i_g = jax.nn.sigmoid(gates[:, 0 * H:1 * H])
        f_g = jax.nn.sigmoid(gates[:, 1 * H:2 * H])
        g_g = jnp.tanh(gates[:, 2 * H:3 * H])
        o_g = jax.nn.sigmoid(gates[:, 3 * H:4 * H])
        c = f_g * c + i_g * g_g
        h = o_g * jnp.tanh(c)
        out_ref[j] = h
    h_scr[...] = h
    c_scr[...] = c


def l1_loss_kernel(p_ref, t_ref, o_ref, acc_scr, *, n_rows, rb):
    """loss = mean over rows of sum over features |t - p|, accumulated across
    row tiles in a VMEM scratch (sequential 'arbitrary' grid axis)."""
    i = pl.program_id(0)

    @pl.when(i == 0)
    def _():
        acc_scr[...] = jnp.zeros_like(acc_scr)

    diff = jnp.abs(t_ref[...] - p_ref[...])
    # Mask rows past the true row count (the last tile may overhang N).
    row = jax.lax.broadcasted_iota(jnp.int32, diff.shape, 0) + i * rb
    diff = jnp.where(row < n_rows, diff, 0.0)
    acc_scr[...] += jnp.sum(diff)

    @pl.when(i == pl.num_programs(0) - 1)
    def _():
        o_ref[...] = acc_scr[...] * (1.0 / n_rows)


# ---------------------------------------------------------------------------
# Pallas wrappers
# ---------------------------------------------------------------------------
def layernorm_noaffine(x2d, rb_max=256):
    N, D = x2d.shape
    rb = min(rb_max, N)
    return pl.pallas_call(
        ln_noaffine_kernel,
        out_shape=jax.ShapeDtypeStruct((N, D), jnp.float32),
        grid=(pl.cdiv(N, rb),),
        in_specs=[pl.BlockSpec((rb, D), lambda i: (i, 0))],
        out_specs=pl.BlockSpec((rb, D), lambda i: (i, 0)),
        compiler_params=pltpu.CompilerParams(dimension_semantics=("parallel",)),
    )(x2d)


def layernorm_affine(x2d, gamma, beta, rb_max=256):
    N, D = x2d.shape
    rb = min(rb_max, N)
    return pl.pallas_call(
        ln_affine_kernel,
        out_shape=jax.ShapeDtypeStruct((N, D), jnp.float32),
        grid=(pl.cdiv(N, rb),),
        in_specs=[pl.BlockSpec((rb, D), lambda i: (i, 0)),
                  pl.BlockSpec((1, D), lambda i: (0, 0)),
                  pl.BlockSpec((1, D), lambda i: (0, 0))],
        out_specs=pl.BlockSpec((rb, D), lambda i: (i, 0)),
        compiler_params=pltpu.CompilerParams(dimension_semantics=("parallel",)),
    )(x2d, gamma, beta)


def matmul_bias(x2d, w, b, rb_max=256):
    """Row-tiled X @ W + b.  W/b are kept resident (constant index map)."""
    N, Din = x2d.shape
    Dout = w.shape[1]
    rb = min(rb_max, N)
    return pl.pallas_call(
        matmul_bias_kernel,
        out_shape=jax.ShapeDtypeStruct((N, Dout), jnp.float32),
        grid=(pl.cdiv(N, rb),),
        in_specs=[pl.BlockSpec((rb, Din), lambda i: (i, 0)),
                  pl.BlockSpec((Din, Dout), lambda i: (0, 0)),
                  pl.BlockSpec((1, Dout), lambda i: (0, 0))],
        out_specs=pl.BlockSpec((rb, Dout), lambda i: (i, 0)),
        compiler_params=pltpu.CompilerParams(dimension_semantics=("parallel",)),
    )(x2d, w, b)


def lstm_recurrence(gates_tm, whh_t, time_chunk):
    """gates_tm: (T, B, 4H) time-major precomputed input gates.
    Returns hidden states (T, B, H)."""
    T, B, H4 = gates_tm.shape
    H = whh_t.shape[0]
    assert T % time_chunk == 0
    return pl.pallas_call(
        lstm_recurrence_kernel,
        out_shape=jax.ShapeDtypeStruct((T, B, H), jnp.float32),
        grid_spec=pltpu.PrefetchScalarGridSpec(
            num_scalar_prefetch=0,
            grid=(T // time_chunk,),
            in_specs=[
                pl.BlockSpec((time_chunk, B, H4), lambda t: (t, 0, 0)),
                pl.BlockSpec((H, H4), lambda t: (0, 0)),
            ],
            out_specs=pl.BlockSpec((time_chunk, B, H), lambda t: (t, 0, 0)),
            scratch_shapes=[pltpu.VMEM((B, H), jnp.float32),   # h carry
                            pltpu.VMEM((B, H), jnp.float32)],  # c carry
        ),
        compiler_params=pltpu.CompilerParams(
            dimension_semantics=("arbitrary",)),  # sequential carry over time
    )(gates_tm, whh_t)


def l1_mean_loss(pred2d, target2d, rb_max=512):
    N, D = pred2d.shape
    rb = min(rb_max, N)
    kernel = functools.partial(l1_loss_kernel, n_rows=N, rb=rb)
    return pl.pallas_call(
        kernel,
        out_shape=jax.ShapeDtypeStruct((1, 1), jnp.float32),
        grid_spec=pltpu.PrefetchScalarGridSpec(
            num_scalar_prefetch=0,
            grid=(pl.cdiv(N, rb),),
            in_specs=[pl.BlockSpec((rb, D), lambda i: (i, 0)),
                      pl.BlockSpec((rb, D), lambda i: (i, 0))],
            out_specs=pl.BlockSpec((1, 1), lambda i: (0, 0)),
            scratch_shapes=[pltpu.VMEM((1, 1), jnp.float32)],
        ),
        compiler_params=pltpu.CompilerParams(
            dimension_semantics=("arbitrary",)),  # sequential accumulation
    )(pred2d, target2d)


# ---------------------------------------------------------------------------
# APCModel forward (Pallas)
# ---------------------------------------------------------------------------
def _pick_time_chunk(T, target=16):
    for c in range(min(target, T), 0, -1):
        if T % c == 0:
            return c
    return 1


@functools.partial(jax.jit, static_argnames=("prediction_steps",))
def apc_forward(signal, params, prediction_steps):
    B, T, D = signal.shape
    K = prediction_steps

    # 1) input LayerNorm (no affine), row-tiled over B*T rows.
    sig = layernorm_noaffine(signal.reshape(B * T, D)).reshape(B, T, D)

    # 2) go time-major once (small, D-wide); the whole LSTM stack stays
    #    time-major so no per-layer transposes are needed.
    x_tm = jnp.transpose(sig, (1, 0, 2))                        # (T, B, D)

    tc = _pick_time_chunk(T)
    for (wih_t, whh_t, b) in params["lstm"]:
        H = whh_t.shape[0]
        # hoisted input projection: one big lane-dense bf16 MXU matmul over all
        # T*B rows, bias (b_ih + b_hh) folded in -> gates_x time-major.
        gates = matmul_bias(x_tm.reshape(T * B, x_tm.shape[-1]), wih_t, b)
        gates = gates.reshape(T, B, 4 * H)
        # sequential recurrence, time-chunked.
        x_tm = lstm_recurrence(gates, whh_t, tc)                # (T, B, H)
        # TODO(synk): for large B, add a leading batch grid axis marked
        # "parallel" (independent h/c carries per slice) to use both v7x TCs.

    # 3) back to batch-major once (this transpose is required anyway for the
    #    returned (B, T, H) `output` layout).
    H = x_tm.shape[-1]
    out_bm = jnp.transpose(x_tm, (1, 0, 2))                     # (B, T, H)
    # TODO(synk): fold this transpose into the last LSTM layer by writing a
    # (B, TC, H) batch-major output block from inside the kernel.

    # 4) output LayerNorm (affine), row-tiled.
    output = layernorm_affine(out_bm.reshape(B * T, H),
                              params["gamma"], params["beta"]).reshape(B, T, H)

    # 5) fused prediction heads: a single (H, K*D) matmul over all B*T rows
    #    (reads `output` from HBM once, lane-dense result).
    w_all = jnp.concatenate([w for (w, _) in params["pred"]], axis=1)    # (H, K*D)
    b_all = jnp.concatenate([bp for (_, bp) in params["pred"]], axis=1)  # (1, K*D)
    preds_all = matmul_bias(output.reshape(B * T, H), w_all, b_all)
    preds_all = preds_all.reshape(B, T, K * D)

    # 6) shifted L1 losses (row-tiled accumulating reduction per step).
    losses, predictions = [], []
    for step in range(1, K + 1):
        pred_k = preds_all[:, :T - step, (step - 1) * D: step * D]       # (B, T-k, D)
        target_k = sig[:, step:, :]                                      # (B, T-k, D)
        n_rows = B * (T - step)
        loss = l1_mean_loss(pred_k.reshape(n_rows, D), target_k.reshape(n_rows, D))
        predictions.append(pred_k)
        losses.append(loss[0, 0])

    return dict(losses=losses, output=output, predictions=predictions)


# ---------------------------------------------------------------------------
# Pure-JAX f32 reference (for the sanity check)
# ---------------------------------------------------------------------------
def ref_forward(signal, params, prediction_steps):
    def ln(x):
        m = x.mean(-1, keepdims=True)
        v = ((x - m) ** 2).mean(-1, keepdims=True)
        return (x - m) / jnp.sqrt(v + EPS)

    sig = ln(signal)
    x = sig
    B = x.shape[0]
    for (wih_t, whh_t, b) in params["lstm"]:
        wih = wih_t.astype(jnp.float32)
        whh = whh_t.astype(jnp.float32)
        H = whh.shape[0]

        def step_fn(carry, xt):
            h, c = carry
            gates = xt @ wih + h @ whh + b
            i = jax.nn.sigmoid(gates[:, :H])
            f = jax.nn.sigmoid(gates[:, H:2 * H])
            g = jnp.tanh(gates[:, 2 * H:3 * H])
            o = jax.nn.sigmoid(gates[:, 3 * H:])
            c = f * c + i * g
            h = o * jnp.tanh(c)
            return (h, c), h

        init = (jnp.zeros((B, H)), jnp.zeros((B, H)))
        _, hs = jax.lax.scan(step_fn, init, jnp.transpose(x, (1, 0, 2)))
        x = jnp.transpose(hs, (1, 0, 2))

    out = ln(x) * params["gamma"] + params["beta"]
    losses, preds = [], []
    for k in range(1, prediction_steps + 1):
        w_t, bp = params["pred"][k - 1]
        p = out[:, :-k, :] @ w_t.astype(jnp.float32) + bp
        preds.append(p)
        losses.append(jnp.abs(sig[:, k:, :] - p).sum(-1).mean())
    return dict(losses=losses, output=out, predictions=preds)


# ---------------------------------------------------------------------------
# Parameter construction (deterministic, PyTorch-like shapes)
# ---------------------------------------------------------------------------
def make_params(key, input_dim, rnn_size, rnn_layers, prediction_steps):
    H = rnn_size
    k = 1.0 / jnp.sqrt(jnp.float32(H))
    params = {"lstm": [], "pred": []}
    for layer in range(rnn_layers):
        din = input_dim if layer == 0 else H
        key, k1, k2, k3, k4 = jax.random.split(key, 5)
        w_ih = jax.random.uniform(k1, (4 * H, din), jnp.float32, -k, k)   # PyTorch (4H, Din)
        w_hh = jax.random.uniform(k2, (4 * H, H), jnp.float32, -k, k)     # PyTorch (4H, H)
        b_ih = jax.random.uniform(k3, (4 * H,), jnp.float32, -k, k)
        b_hh = jax.random.uniform(k4, (4 * H,), jnp.float32, -k, k)
        # W_ih^T stored in bf16 (used by the hoisted MXU projection);
        # W_hh^T stays f32 (recurrent path, avoids compounding rounding);
        # folded bias (b_ih + b_hh) in f32.
        params["lstm"].append((w_ih.T.astype(jnp.bfloat16),
                               w_hh.T,
                               (b_ih + b_hh).reshape(1, 4 * H)))
    key, kg, kb = jax.random.split(key, 3)
    params["gamma"] = 1.0 + 0.1 * jax.random.normal(kg, (1, H), jnp.float32)
    params["beta"] = 0.1 * jax.random.normal(kb, (1, H), jnp.float32)
    kl = 1.0 / jnp.sqrt(jnp.float32(H))
    for _ in range(prediction_steps):
        key, kw, kbp = jax.random.split(key, 3)
        w = jax.random.uniform(kw, (input_dim, H), jnp.float32, -kl, kl)  # PyTorch (D, H)
        bp = jax.random.uniform(kbp, (input_dim,), jnp.float32, -kl, kl)
        params["pred"].append((w.T.astype(jnp.bfloat16), bp.reshape(1, input_dim)))
    return params


# ---------------------------------------------------------------------------
if __name__ == "__main__":
    # small config consistent with the module: (batch, seq, input_dim), rnn_size, layers, steps
    B, T, D = 2, 8, 16
    H, LAYERS, STEPS = 32, 2, 3

    key = jax.random.PRNGKey(0)
    key, ksig = jax.random.split(key)
    signal = jax.random.normal(ksig, (B, T, D), jnp.float32)

    params = make_params(key, D, H, LAYERS, STEPS)

    out = apc_forward(signal, params, STEPS)
    jax.block_until_ready(out["output"])
    jax.block_until_ready(out["losses"][-1])
    jax.block_until_ready(out["predictions"][-1])

    # sanity check against a pure-JAX f32 reference (kernel matmuls are bf16
    # with f32 accumulation, hence the looser tolerance).
    ref = ref_forward(signal, params, STEPS)
    import numpy as np
    TOL = dict(rtol=3e-2, atol=3e-2)
    np.testing.assert_allclose(np.asarray(out["output"]), np.asarray(ref["output"]), **TOL)
    for a, b in zip(out["losses"], ref["losses"]):
        np.testing.assert_allclose(np.asarray(a), np.asarray(b), **TOL)
    for a, b in zip(out["predictions"], ref["predictions"]):
        np.testing.assert_allclose(np.asarray(a), np.asarray(b), **TOL)

    print("KERNEL_OK")
</pallas_src>

<mosaic_0001>
module attributes {stable_mosaic.version = 11 : i64} {
  func.func @lstm_recurrence_kernel(%arg0: i32, %arg1: memref<8x2x128xf32, #tpu.memory_space<vmem>>, %arg2: memref<32x128xf32, #tpu.memory_space<vmem>>, %arg3: memref<8x2x32xf32, #tpu.memory_space<vmem>>, %arg4: memref<2x32xf32, #tpu.memory_space<vmem>>, %arg5: memref<2x32xf32, #tpu.memory_space<vmem>>) attributes {dimension_semantics = [#tpu.dimension_semantics<arbitrary>], iteration_bounds = array<i64: 1>, scalar_prefetch = 0 : i64, scratch_operands = 2 : i64, tpu.core_type = #tpu.core_type<tc>, window_params = [{transform_indices = @transform_0, window_bounds = array<i64: 8, 2, 128>}, {pipeline_mode = #tpu.pipeline_mode<synchronous>, transform_indices = @transform_1, window_bounds = array<i64: 32, 128>}, {transform_indices = @transform_2, window_bounds = array<i64: 8, 2, 32>}]} {
    %c0_i32 = arith.constant 0 : i32
    %0 = arith.cmpi eq, %arg0, %c0_i32 : i32
    %1 = arith.extui %0 : i1 to i32
    %c0_i32_0 = arith.constant 0 : i32
    %2 = arith.cmpi ne, %1, %c0_i32_0 : i32
    scf.if %2 {
      %cst_82 = arith.constant 0.000000e+00 : f32
      %264 = vector.broadcast %cst_82 : f32 to vector<2x32xf32>
      %c0_83 = arith.constant 0 : index
      %c0_84 = arith.constant 0 : index
      %265 = vector.load %arg4[%c0_83, %c0_84] : memref<2x32xf32, #tpu.memory_space<vmem>>, vector<2x32xf32>
      tpu.vector_store %arg4[%c0_83, %c0_84], %264 {strides = array<i32>} : memref<2x32xf32, #tpu.memory_space<vmem>>, vector<2x32xf32>,
      %cst_85 = arith.constant 0.000000e+00 : f32
      %266 = vector.broadcast %cst_85 : f32 to vector<2x32xf32>
      %c0_86 = arith.constant 0 : index
      %c0_87 = arith.constant 0 : index
      %267 = vector.load %arg5[%c0_86, %c0_87] : memref<2x32xf32, #tpu.memory_space<vmem>>, vector<2x32xf32>
      tpu.vector_store %arg5[%c0_86, %c0_87], %266 {strides = array<i32>} : memref<2x32xf32, #tpu.memory_space<vmem>>, vector<2x32xf32>,
    } else {
    }
    %c0 = arith.constant 0 : index
    %c0_1 = arith.constant 0 : index
    %3 = vector.load %arg2[%c0, %c0_1] : memref<32x128xf32, #tpu.memory_space<vmem>>, vector<32x128xf32>
    %c0_2 = arith.constant 0 : index
    %c0_3 = arith.constant 0 : index
    %4 = vector.load %arg4[%c0_2, %c0_3] : memref<2x32xf32, #tpu.memory_space<vmem>>, vector<2x32xf32>
    %c0_4 = arith.constant 0 : index
    %c0_5 = arith.constant 0 : index
    %5 = vector.load %arg5[%c0_4, %c0_5] : memref<2x32xf32, #tpu.memory_space<vmem>>, vector<2x32xf32>
    %c0_6 = arith.constant 0 : index
    %c0_7 = arith.constant 0 : index
    %c0_8 = arith.constant 0 : index
    %6 = vector.load %arg1[%c0_6, %c0_7, %c0_8] : memref<8x2x128xf32, #tpu.memory_space<vmem>>, vector<1x2x128xf32>
    %7 = vector.shape_cast %6 : vector<1x2x128xf32> to vector<2x128xf32>
    %cst = arith.constant dense<0.000000e+00> : vector<2x128xf32>
    %8 = tpu.matmul %4, %3, %cst {dimension_numbers = #tpu.dot_dimension_numbers<[1], [0], [0], [1], [0, 0, 1, 1], [], []>} : vector<2x32xf32>, vector<32x128xf32>, vector<2x128xf32> -> vector<2x128xf32>
    %9 = arith.addf %7, %8 : vector<2x128xf32>
    %10 = vector.extract_strided_slice %9 {offsets = [0, 0], sizes = [2, 32], strides = [1, 1]} : vector<2x128xf32> to vector<2x32xf32>
    %11 = arith.negf %10 : vector<2x32xf32>
    %12 = math.exp %11 : vector<2x32xf32>
    %cst_9 = arith.constant 1.000000e+00 : f32
    %13 = vector.broadcast %cst_9 : f32 to vector<2x32xf32>
    %14 = arith.addf %13, %12 : vector<2x32xf32>
    %15 = arith.divf %13, %14 : vector<2x32xf32>
    %16 = vector.extract_strided_slice %9 {offsets = [0, 32], sizes = [2, 32], strides = [1, 1]} : vector<2x128xf32> to vector<2x32xf32>
    %17 = arith.negf %16 : vector<2x32xf32>
    %18 = math.exp %17 : vector<2x32xf32>
    %cst_10 = arith.constant 1.000000e+00 : f32
    %19 = vector.broadcast %cst_10 : f32 to vector<2x32xf32>
    %20 = arith.addf %19, %18 : vector<2x32xf32>
    %21 = arith.divf %19, %20 : vector<2x32xf32>
    %22 = vector.extract_strided_slice %9 {offsets = [0, 64], sizes = [2, 32], strides = [1, 1]} : vector<2x128xf32> to vector<2x32xf32>
    %23 = math.tanh %22 : vector<2x32xf32>
    %24 = vector.extract_strided_slice %9 {offsets = [0, 96], sizes = [2, 32], strides = [1, 1]} : vector<2x128xf32> to vector<2x32xf32>
    %25 = arith.negf %24 : vector<2x32xf32>
    %26 = math.exp %25 : vector<2x32xf32>
    %cst_11 = arith.constant 1.000000e+00 : f32
    %27 = vector.broadcast %cst_11 : f32 to vector<2x32xf32>
    %28 = arith.addf %27, %26 : vector<2x32xf32>
    %29 = arith.divf %27, %28 : vector<2x32xf32>
    %30 = arith.mulf %21, %5 : vector<2x32xf32>
    %31 = arith.mulf %15, %23 : vector<2x32xf32>
    %32 = arith.addf %30, %31 : vector<2x32xf32>
    %33 = math.tanh %32 : vector<2x32xf32>
    %34 = arith.mulf %29, %33 : vector<2x32xf32>
    %c0_12 = arith.constant 0 : index
    %c0_13 = arith.constant 0 : index
    %c0_14 = arith.constant 0 : index
    %35 = vector.load %arg3[%c0_12, %c0_13, %c0_14] : memref<8x2x32xf32, #tpu.memory_space<vmem>>, vector<1x2x32xf32>
    %36 = vector.shape_cast %35 : vector<1x2x32xf32> to vector<2x32xf32>
    %37 = vector.shape_cast %34 : vector<2x32xf32> to vector<1x2x32xf32>
    tpu.vector_store %arg3[%c0_12, %c0_13, %c0_14], %37 {strides = array<i32>} : memref<8x2x32xf32, #tpu.memory_space<vmem>>, vector<1x2x32xf32>,
    %c1 = arith.constant 1 : index
    %c0_15 = arith.constant 0 : index
    %c0_16 = arith.constant 0 : index
    %38 = vector.load %arg1[%c1, %c0_15, %c0_16] : memref<8x2x128xf32, #tpu.memory_space<vmem>>, vector<1x2x128xf32>
    %39 = vector.shape_cast %38 : vector<1x2x128xf32> to vector<2x128xf32>
    %cst_17 = arith.constant dense<0.000000e+00> : vector<2x128xf32>
    %40 = tpu.matmul %34, %3, %cst_17 {dimension_numbers = #tpu.dot_dimension_numbers<[1], [0], [0], [1], [0, 0, 1, 1], [], []>} : vector<2x32xf32>, vector<32x128xf32>, vector<2x128xf32> -> vector<2x128xf32>
    %41 = arith.addf %39, %40 : vector<2x128xf32>
    %42 = vector.extract_strided_slice %41 {offsets = [0, 0], sizes = [2, 32], strides = [1, 1]} : vector<2x128xf32> to vector<2x32xf32>
    %43 = arith.negf %42 : vector<2x32xf32>
    %44 = math.exp %43 : vector<2x32xf32>
    %cst_18 = arith.constant 1.000000e+00 : f32
    %45 = vector.broadcast %cst_18 : f32 to vector<2x32xf32>
    %46 = arith.addf %45, %44 : vector<2x32xf32>
    %47 = arith.divf %45, %46 : vector<2x32xf32>
    %48 = vector.extract_strided_slice %41 {offsets = [0, 32], sizes = [2, 32], strides = [1, 1]} : vector<2x128xf32> to vector<2x32xf32>
    %49 = arith.negf %48 : vector<2x32xf32>
    %50 = math.exp %49 : vector<2x32xf32>
    %cst_19 = arith.constant 1.000000e+00 : f32
    %51 = vector.broadcast %cst_19 : f32 to vector<2x32xf32>
    %52 = arith.addf %51, %50 : vector<2x32xf32>
    %53 = arith.divf %51, %52 : vector<2x32xf32>
    %54 = vector.extract_strided_slice %41 {offsets = [0, 64], sizes = [2, 32], strides = [1, 1]} : vector<2x128xf32> to vector<2x32xf32>
    %55 = math.tanh %54 : vector<2x32xf32>
    %56 = vector.extract_strided_slice %41 {offsets = [0, 96], sizes = [2, 32], strides = [1, 1]} : vector<2x128xf32> to vector<2x32xf32>
    %57 = arith.negf %56 : vector<2x32xf32>
    %58 = math.exp %57 : vector<2x32xf32>
    %cst_20 = arith.constant 1.000000e+00 : f32
    %59 = vector.broadcast %cst_20 : f32 to vector<2x32xf32>
    %60 = arith.addf %59, %58 : vector<2x32xf32>
    %61 = arith.divf %59, %60 : vector<2x32xf32>
    %62 = arith.mulf %53, %32 : vector<2x32xf32>
    %63 = arith.mulf %47, %55 : vector<2x32xf32>
    %64 = arith.addf %62, %63 : vector<2x32xf32>
    %65 = math.tanh %64 : vector<2x32xf32>
    %66 = arith.mulf %61, %65 : vector<2x32xf32>
    %c1_21 = arith.constant 1 : index
    %c0_22 = arith.constant 0 : index
    %c0_23 = arith.constant 0 : index
    %67 = vector.load %arg3[%c1_21, %c0_22, %c0_23] : memref<8x2x32xf32, #tpu.memory_space<vmem>>, vector<1x2x32xf32>
    %68 = vector.shape_cast %67 : vector<1x2x32xf32> to vector<2x32xf32>
    %69 = vector.shape_cast %66 : vector<2x32xf32> to vector<1x2x32xf32>
    tpu.vector_store %arg3[%c1_21, %c0_22, %c0_23], %69 {strides = array<i32>} : memref<8x2x32xf32, #tpu.memory_space<vmem>>, vector<1x2x32xf32>,
    %c2 = arith.constant 2 : index
    %c0_24 = arith.constant 0 : index
    %c0_25 = arith.constant 0 : index
    %70 = vector.load %arg1[%c2, %c0_24, %c0_25] : memref<8x2x128xf32, #tpu.memory_space<vmem>>, vector<1x2x128xf32>
    %71 = vector.shape_cast %70 : vector<1x2x128xf32> to vector<2x128xf32>
    %cst_26 = arith.constant dense<0.000000e+00> : vector<2x128xf32>
    %72 = tpu.matmul %66, %3, %cst_26 {dimension_numbers = #tpu.dot_dimension_numbers<[1], [0], [0], [1], [0, 0, 1, 1], [], []>} : vector<2x32xf32>, vector<32x128xf32>, vector<2x128xf32> -> vector<2x128xf32>
    %73 = arith.addf %71, %72 : vector<2x128xf32>
    %74 = vector.extract_strided_slice %73 {offsets = [0, 0], sizes = [2, 32], strides = [1, 1]} : vector<2x128xf32> to vector<2x32xf32>
    %75 = arith.negf %74 : vector<2x32xf32>
    %76 = math.exp %75 : vector<2x32xf32>
    %cst_27 = arith.constant 1.000000e+00 : f32
    %77 = vector.broadcast %cst_27 : f32 to vector<2x32xf32>
    %78 = arith.addf %77, %76 : vector<2x32xf32>
    %79 = arith.divf %77, %78 : vector<2x32xf32>
    %80 = vector.extract_strided_slice %73 {offsets = [0, 32], sizes = [2, 32], strides = [1, 1]} : vector<2x128xf32> to vector<2x32xf32>
    %81 = arith.negf %80 : vector<2x32xf32>
    %82 = math.exp %81 : vector<2x32xf32>
    %cst_28 = arith.constant 1.000000e+00 : f32
    %83 = vector.broadcast %cst_28 : f32 to vector<2x32xf32>
    %84 = arith.addf %83, %82 : vector<2x32xf32>
    %85 = arith.divf %83, %84 : vector<2x32xf32>
    %86 = vector.extract_strided_slice %73 {offsets = [0, 64], sizes = [2, 32], strides = [1, 1]} : vector<2x128xf32> to vector<2x32xf32>
    %87 = math.tanh %86 : vector<2x32xf32>
    %88 = vector.extract_strided_slice %73 {offsets = [0, 96], sizes = [2, 32], strides = [1, 1]} : vector<2x128xf32> to vector<2x32xf32>
    %89 = arith.negf %88 : vector<2x32xf32>
    %90 = math.exp %89 : vector<2x32xf32>
    %cst_29 = arith.constant 1.000000e+00 : f32
    %91 = vector.broadcast %cst_29 : f32 to vector<2x32xf32>
    %92 = arith.addf %91, %90 : vector<2x32xf32>
    %93 = arith.divf %91, %92 : vector<2x32xf32>
    %94 = arith.mulf %85, %64 : vector<2x32xf32>
    %95 = arith.mulf %79, %87 : vector<2x32xf32>
    %96 = arith.addf %94, %95 : vector<2x32xf32>
    %97 = math.tanh %96 : vector<2x32xf32>
    %98 = arith.mulf %93, %97 : vector<2x32xf32>
    %c2_30 = arith.constant 2 : index
    %c0_31 = arith.constant 0 : index
    %c0_32 = arith.constant 0 : index
    %99 = vector.load %arg3[%c2_30, %c0_31, %c0_32] : memref<8x2x32xf32, #tpu.memory_space<vmem>>, vector<1x2x32xf32>
    %100 = vector.shape_cast %99 : vector<1x2x32xf32> to vector<2x32xf32>
    %101 = vector.shape_cast %98 : vector<2x32xf32> to vector<1x2x32xf32>
    tpu.vector_store %arg3[%c2_30, %c0_31, %c0_32], %101 {strides = array<i32>} : memref<8x2x32xf32, #tpu.memory_space<vmem>>, vector<1x2x32xf32>,
    %c3 = arith.constant 3 : index
    %c0_33 = arith.constant 0 : index
    %c0_34 = arith.constant 0 : index
    %102 = vector.load %arg1[%c3, %c0_33, %c0_34] : memref<8x2x128xf32, #tpu.memory_space<vmem>>, vector<1x2x128xf32>
    %103 = vector.shape_cast %102 : vector<1x2x128xf32> to vector<2x128xf32>
    %cst_35 = arith.constant dense<0.000000e+00> : vector<2x128xf32>
    %104 = tpu.matmul %98, %3, %cst_35 {dimension_numbers = #tpu.dot_dimension_numbers<[1], [0], [0], [1], [0, 0, 1, 1], [], []>} : vector<2x32xf32>, vector<32x128xf32>, vector<2x128xf32> -> vector<2x128xf32>
    %105 = arith.addf %103, %104 : vector<2x128xf32>
    %106 = vector.extract_strided_slice %105 {offsets = [0, 0], sizes = [2, 32], strides = [1, 1]} : vector<2x128xf32> to vector<2x32xf32>
    %107 = arith.negf %106 : vector<2x32xf32>
    %108 = math.exp %107 : vector<2x32xf32>
    %cst_36 = arith.constant 1.000000e+00 : f32
    %109 = vector.broadcast %cst_36 : f32 to vector<2x32xf32>
    %110 = arith.addf %109, %108 : vector<2x32xf32>
    %111 = arith.divf %109, %110 : vector<2x32xf32>
    %112 = vector.extract_strided_slice %105 {offsets = [0, 32], sizes = [2, 32], strides = [1, 1]} : vector<2x128xf32> to vector<2x32xf32>
    %113 = arith.negf %112 : vector<2x32xf32>
    %114 = math.exp %113 : vector<2x32xf32>
    %cst_37 = arith.constant 1.000000e+00 : f32
    %115 = vector.broadcast %cst_37 : f32 to vector<2x32xf32>
    %116 = arith.addf %115, %114 : vector<2x32xf32>
    %117 = arith.divf %115, %116 : vector<2x32xf32>
    %118 = vector.extract_strided_slice %105 {offsets = [0, 64], sizes = [2, 32], strides = [1, 1]} : vector<2x128xf32> to vector<2x32xf32>
    %119 = math.tanh %118 : vector<2x32xf32>
    %120 = vector.extract_strided_slice %105 {offsets = [0, 96], sizes = [2, 32], strides = [1, 1]} : vector<2x128xf32> to vector<2x32xf32>
    %121 = arith.negf %120 : vector<2x32xf32>
    %122 = math.exp %121 : vector<2x32xf32>
    %cst_38 = arith.constant 1.000000e+00 : f32
    %123 = vector.broadcast %cst_38 : f32 to vector<2x32xf32>
    %124 = arith.addf %123, %122 : vector<2x32xf32>
    %125 = arith.divf %123, %124 : vector<2x32xf32>
    %126 = arith.mulf %117, %96 : vector<2x32xf32>
    %127 = arith.mulf %111, %119 : vector<2x32xf32>
    %128 = arith.addf %126, %127 : vector<2x32xf32>
    %129 = math.tanh %128 : vector<2x32xf32>
    %130 = arith.mulf %125, %129 : vector<2x32xf32>
    %c3_39 = arith.constant 3 : index
    %c0_40 = arith.constant 0 : index
    %c0_41 = arith.constant 0 : index
    %131 = vector.load %arg3[%c3_39, %c0_40, %c0_41] : memref<8x2x32xf32, #tpu.memory_space<vmem>>, vector<1x2x32xf32>
    %132 = vector.shape_cast %131 : vector<1x2x32xf32> to vector<2x32xf32>
    %133 = vector.shape_cast %130 : vector<2x32xf32> to vector<1x2x32xf32>
    tpu.vector_store %arg3[%c3_39, %c0_40, %c0_41], %133 {strides = array<i32>} : memref<8x2x32xf32, #tpu.memory_space<vmem>>, vector<1x2x32xf32>,
    %c4 = arith.constant 4 : index
    %c0_42 = arith.constant 0 : index
    %c0_43 = arith.constant 0 : index
    %134 = vector.load %arg1[%c4, %c0_42, %c0_43] : memref<8x2x128xf32, #tpu.memory_space<vmem>>, vector<1x2x128xf32>
    %135 = vector.shape_cast %134 : vector<1x2x128xf32> to vector<2x128xf32>
    %cst_44 = arith.constant dense<0.000000e+00> : vector<2x128xf32>
    %136 = tpu.matmul %130, %3, %cst_44 {dimension_numbers = #tpu.dot_dimension_numbers<[1], [0], [0], [1], [0, 0, 1, 1], [], []>} : vector<2x32xf32>, vector<32x128xf32>, vector<2x128xf32> -> vector<2x128xf32>
    %137 = arith.addf %135, %136 : vector<2x128xf32>
    %138 = vector.extract_strided_slice %137 {offsets = [0, 0], sizes = [2, 32], strides = [1, 1]} : vector<2x128xf32> to vector<2x32xf32>
    %139 = arith.negf %138 : vector<2x32xf32>
    %140 = math.exp %139 : vector<2x32xf32>
    %cst_45 = arith.constant 1.000000e+00 : f32
    %141 = vector.broadcast %cst_45 : f32 to vector<2x32xf32>
    %142 = arith.addf %141, %140 : vector<2x32xf32>
    %143 = arith.divf %141, %142 : vector<2x32xf32>
    %144 = vector.extract_strided_slice %137 {offsets = [0, 32], sizes = [2, 32], strides = [1, 1]} : vector<2x128xf32> to vector<2x32xf32>
    %145 = arith.negf %144 : vector<2x32xf32>
    %146 = math.exp %145 : vector<2x32xf32>
    %cst_46 = arith.constant 1.000000e+00 : f32
    %147 = vector.broadcast %cst_46 : f32 to vector<2x32xf32>
    %148 = arith.addf %147, %146 : vector<2x32xf32>
    %149 = arith.divf %147, %148 : vector<2x32xf32>
    %150 = vector.extract_strided_slice %137 {offsets = [0, 64], sizes = [2, 32], strides = [1, 1]} : vector<2x128xf32> to vector<2x32xf32>
    %151 = math.tanh %150 : vector<2x32xf32>
    %152 = vector.extract_strided_slice %137 {offsets = [0, 96], sizes = [2, 32], strides = [1, 1]} : vector<2x128xf32> to vector<2x32xf32>
    %153 = arith.negf %152 : vector<2x32xf32>
    %154 = math.exp %153 : vector<2x32xf32>
    %cst_47 = arith.constant 1.000000e+00 : f32
    %155 = vector.broadcast %cst_47 : f32 to vector<2x32xf32>
    %156 = arith.addf %155, %154 : vector<2x32xf32>
    %157 = arith.divf %155, %156 : vector<2x32xf32>
    %158 = arith.mulf %149, %128 : vector<2x32xf32>
    %159 = arith.mulf %143, %151 : vector<2x32xf32>
    %160 = arith.addf %158, %159 : vector<2x32xf32>
    %161 = math.tanh %160 : vector<2x32xf32>
    %162 = arith.mulf %157, %161 : vector<2x32xf32>
    %c4_48 = arith.constant 4 : index
    %c0_49 = arith.constant 0 : index
    %c0_50 = arith.constant 0 : index
    %163 = vector.load %arg3[%c4_48, %c0_49, %c0_50] : memref<8x2x32xf32, #tpu.memory_space<vmem>>, vector<1x2x32xf32>
    %164 = vector.shape_cast %163 : vector<1x2x32xf32> to vector<2x32xf32>
    %165 = vector.shape_cast %162 : vector<2x32xf32> to vector<1x2x32xf32>
    tpu.vector_store %arg3[%c4_48, %c0_49, %c0_50], %165 {strides = array<i32>} : memref<8x2x32xf32, #tpu.memory_space<vmem>>, vector<1x2x32xf32>,
    %c5 = arith.constant 5 : index
    %c0_51 = arith.constant 0 : index
    %c0_52 = arith.constant 0 : index
    %166 = vector.load %arg1[%c5, %c0_51, %c0_52] : memref<8x2x128xf32, #tpu.memory_space<vmem>>, vector<1x2x128xf32>
    %167 = vector.shape_cast %166 : vector<1x2x128xf32> to vector<2x128xf32>
    %cst_53 = arith.constant dense<0.000000e+00> : vector<2x128xf32>
    %168 = tpu.matmul %162, %3, %cst_53 {dimension_numbers = #tpu.dot_dimension_numbers<[1], [0], [0], [1], [0, 0, 1, 1], [], []>} : vector<2x32xf32>, vector<32x128xf32>, vector<2x128xf32> -> vector<2x128xf32>
    %169 = arith.addf %167, %168 : vector<2x128xf32>
    %170 = vector.extract_strided_slice %169 {offsets = [0, 0], sizes = [2, 32], strides = [1, 1]} : vector<2x128xf32> to vector<2x32xf32>
    %171 = arith.negf %170 : vector<2x32xf32>
    %172 = math.exp %171 : vector<2x32xf32>
    %cst_54 = arith.constant 1.000000e+00 : f32
    %173 = vector.broadcast %cst_54 : f32 to vector<2x32xf32>
    %174 = arith.addf %173, %172 : vector<2x32xf32>
    %175 = arith.divf %173, %174 : vector<2x32xf32>
    %176 = vector.extract_strided_slice %169 {offsets = [0, 32], sizes = [2, 32], strides = [1, 1]} : vector<2x128xf32> to vector<2x32xf32>
    %177 = arith.negf %176 : vector<2x32xf32>
    %178 = math.exp %177 : vector<2x32xf32>
    %cst_55 = arith.constant 1.000000e+00 : f32
    %179 = vector.broadcast %cst_55 : f32 to vector<2x32xf32>
    %180 = arith.addf %179, %178 : vector<2x32xf32>
    %181 = arith.divf %179, %180 : vector<2x32xf32>
    %182 = vector.extract_strided_slice %169 {offsets = [0, 64], sizes = [2, 32], strides = [1, 1]} : vector<2x128xf32> to vector<2x32xf32>
    %183 = math.tanh %182 : vector<2x32xf32>
    %184 = vector.extract_strided_slice %169 {offsets = [0, 96], sizes = [2, 32], strides = [1, 1]} : vector<2x128xf32> to vector<2x32xf32>
    %185 = arith.negf %184 : vector<2x32xf32>
    %186 = math.exp %185 : vector<2x32xf32>
    %cst_56 = arith.constant 1.000000e+00 : f32
    %187 = vector.broadcast %cst_56 : f32 to vector<2x32xf32>
    %188 = arith.addf %187, %186 : vector<2x32xf32>
    %189 = arith.divf %187, %188 : vector<2x32xf32>
    %190 = arith.mulf %181, %160 : vector<2x32xf32>
    %191 = arith.mulf %175, %183 : vector<2x32xf32>
    %192 = arith.addf %190, %191 : vector<2x32xf32>
    %193 = math.tanh %192 : vector<2x32xf32>
    %194 = arith.mulf %189, %193 : vector<2x32xf32>
    %c5_57 = arith.constant 5 : index
    %c0_58 = arith.constant 0 : index
    %c0_59 = arith.constant 0 : index
    %195 = vector.load %arg3[%c5_57, %c0_58, %c0_59] : memref<8x2x32xf32, #tpu.memory_space<vmem>>, vector<1x2x32xf32>
    %196 = vector.shape_cast %195 : vector<1x2x32xf32> to vector<2x32xf32>
    %197 = vector.shape_cast %194 : vector<2x32xf32> to vector<1x2x32xf32>
    tpu.vector_store %arg3[%c5_57, %c0_58, %c0_59], %197 {strides = array<i32>} : memref<8x2x32xf32, #tpu.memory_space<vmem>>, vector<1x2x32xf32>,
    %c6 = arith.constant 6 : index
    %c0_60 = arith.constant 0 : index
    %c0_61 = arith.constant 0 : index
    %198 = vector.load %arg1[%c6, %c0_60, %c0_61] : memref<8x2x128xf32, #tpu.memory_space<vmem>>, vector<1x2x128xf32>
    %199 = vector.shape_cast %198 : vector<1x2x128xf32> to vector<2x128xf32>
    %cst_62 = arith.constant dense<0.000000e+00> : vector<2x128xf32>
    %200 = tpu.matmul %194, %3, %cst_62 {dimension_numbers = #tpu.dot_dimension_numbers<[1], [0], [0], [1], [0, 0, 1, 1], [], []>} : vector<2x32xf32>, vector<32x128xf32>, vector<2x128xf32> -> vector<2x128xf32>
    %201 = arith.addf %199, %200 : vector<2x128xf32>
    %202 = vector.extract_strided_slice %201 {offsets = [0, 0], sizes = [2, 32], strides = [1, 1]} : vector<2x128xf32> to vector<2x32xf32>
    %203 = arith.negf %202 : vector<2x32xf32>
    %204 = math.exp %203 : vector<2x32xf32>
    %cst_63 = arith.constant 1.000000e+00 : f32
    %205 = vector.broadcast %cst_63 : f32 to vector<2x32xf32>
    %206 = arith.addf %205, %204 : vector<2x32xf32>
    %207 = arith.divf %205, %206 : vector<2x32xf32>
    %208 = vector.extract_strided_slice %201 {offsets = [0, 32], sizes = [2, 32], strides = [1, 1]} : vector<2x128xf32> to vector<2x32xf32>
    %209 = arith.negf %208 : vector<2x32xf32>
    %210 = math.exp %209 : vector<2x32xf32>
    %cst_64 = arith.constant 1.000000e+00 : f32
    %211 = vector.broadcast %cst_64 : f32 to vector<2x32xf32>
    %212 = arith.addf %211, %210 : vector<2x32xf32>
    %213 = arith.divf %211, %212 : vector<2x32xf32>
    %214 = vector.extract_strided_slice %201 {offsets = [0, 64], sizes = [2, 32], strides = [1, 1]} : vector<2x128xf32> to vector<2x32xf32>
    %215 = math.tanh %214 : vector<2x32xf32>
    %216 = vector.extract_strided_slice %201 {offsets = [0, 96], sizes = [2, 32], strides = [1, 1]} : vector<2x128xf32> to vector<2x32xf32>
    %217 = arith.negf %216 : vector<2x32xf32>
    %218 = math.exp %217 : vector<2x32xf32>
    %cst_65 = arith.constant 1.000000e+00 : f32
    %219 = vector.broadcast %cst_65 : f32 to vector<2x32xf32>
    %220 = arith.addf %219, %218 : vector<2x32xf32>
    %221 = arith.divf %219, %220 : vector<2x32xf32>
    %222 = arith.mulf %213, %192 : vector<2x32xf32>
    %223 = arith.mulf %207, %215 : vector<2x32xf32>
    %224 = arith.addf %222, %223 : vector<2x32xf32>
    %225 = math.tanh %224 : vector<2x32xf32>
    %226 = arith.mulf %221, %225 : vector<2x32xf32>
    %c6_66 = arith.constant 6 : index
    %c0_67 = arith.constant 0 : index
    %c0_68 = arith.constant 0 : index
    %227 = vector.load %arg3[%c6_66, %c0_67, %c0_68] : memref<8x2x32xf32, #tpu.memory_space<vmem>>, vector<1x2x32xf32>
    %228 = vector.shape_cast %227 : vector<1x2x32xf32> to vector<2x32xf32>
    %229 = vector.shape_cast %226 : vector<2x32xf32> to vector<1x2x32xf32>
    tpu.vector_store %arg3[%c6_66, %c0_67, %c0_68], %229 {strides = array<i32>} : memref<8x2x32xf32, #tpu.memory_space<vmem>>, vector<1x2x32xf32>,
    %c7 = arith.constant 7 : index
    %c0_69 = arith.constant 0 : index
    %c0_70 = arith.constant 0 : index
    %230 = vector.load %arg1[%c7, %c0_69, %c0_70] : memref<8x2x128xf32, #tpu.memory_space<vmem>>, vector<1x2x128xf32>
    %231 = vector.shape_cast %230 : vector<1x2x128xf32> to vector<2x128xf32>
    %cst_71 = arith.constant dense<0.000000e+00> : vector<2x128xf32>
    %232 = tpu.matmul %226, %3, %cst_71 {dimension_numbers = #tpu.dot_dimension_numbers<[1], [0], [0], [1], [0, 0, 1, 1], [], []>} : vector<2x32xf32>, vector<32x128xf32>, vector<2x128xf32> -> vector<2x128xf32>
    %233 = arith.addf %231, %232 : vector<2x128xf32>
    %234 = vector.extract_strided_slice %233 {offsets = [0, 0], sizes = [2, 32], strides = [1, 1]} : vector<2x128xf32> to vector<2x32xf32>
    %235 = arith.negf %234 : vector<2x32xf32>
    %236 = math.exp %235 : vector<2x32xf32>
    %cst_72 = arith.constant 1.000000e+00 : f32
    %237 = vector.broadcast %cst_72 : f32 to vector<2x32xf32>
    %238 = arith.addf %237, %236 : vector<2x32xf32>
    %239 = arith.divf %237, %238 : vector<2x32xf32>
    %240 = vector.extract_strided_slice %233 {offsets = [0, 32], sizes = [2, 32], strides = [1, 1]} : vector<2x128xf32> to vector<2x32xf32>
    %241 = arith.negf %240 : vector<2x32xf32>
    %242 = math.exp %241 : vector<2x32xf32>
    %cst_73 = arith.constant 1.000000e+00 : f32
    %243 = vector.broadcast %cst_73 : f32 to vector<2x32xf32>
    %244 = arith.addf %243, %242 : vector<2x32xf32>
    %245 = arith.divf %243, %244 : vector<2x32xf32>
    %246 = vector.extract_strided_slice %233 {offsets = [0, 64], sizes = [2, 32], strides = [1, 1]} : vector<2x128xf32> to vector<2x32xf32>
    %247 = math.tanh %246 : vector<2x32xf32>
    %248 = vector.extract_strided_slice %233 {offsets = [0, 96], sizes = [2, 32], strides = [1, 1]} : vector<2x128xf32> to vector<2x32xf32>
    %249 = arith.negf %248 : vector<2x32xf32>
    %250 = math.exp %249 : vector<2x32xf32>
    %cst_74 = arith.constant 1.000000e+00 : f32
    %251 = vector.broadcast %cst_74 : f32 to vector<2x32xf32>
    %252 = arith.addf %251, %250 : vector<2x32xf32>
    %253 = arith.divf %251, %252 : vector<2x32xf32>
    %254 = arith.mulf %245, %224 : vector<2x32xf32>
    %255 = arith.mulf %239, %247 : vector<2x32xf32>
    %256 = arith.addf %254, %255 : vector<2x32xf32>
    %257 = math.tanh %256 : vector<2x32xf32>
    %258 = arith.mulf %253, %257 : vector<2x32xf32>
    %c7_75 = arith.constant 7 : index
    %c0_76 = arith.constant 0 : index
    %c0_77 = arith.constant 0 : index
    %259 = vector.load %arg3[%c7_75, %c0_76, %c0_77] : memref<8x2x32xf32, #tpu.memory_space<vmem>>, vector<1x2x32xf32>
    %260 = vector.shape_cast %259 : vector<1x2x32xf32> to vector<2x32xf32>
    %261 = vector.shape_cast %258 : vector<2x32xf32> to vector<1x2x32xf32>
    tpu.vector_store %arg3[%c7_75, %c0_76, %c0_77], %261 {strides = array<i32>} : memref<8x2x32xf32, #tpu.memory_space<vmem>>, vector<1x2x32xf32>,
    %c0_78 = arith.constant 0 : index
    %c0_79 = arith.constant 0 : index
    %262 = vector.load %arg4[%c0_78, %c0_79] : memref<2x32xf32, #tpu.memory_space<vmem>>, vector<2x32xf32>
    tpu.vector_store %arg4[%c0_78, %c0_79], %258 {strides = array<i32>} : memref<2x32xf32, #tpu.memory_space<vmem>>, vector<2x32xf32>,
    %c0_80 = arith.constant 0 : index
    %c0_81 = arith.constant 0 : index
    %263 = vector.load %arg5[%c0_80, %c0_81] : memref<2x32xf32, #tpu.memory_space<vmem>>, vector<2x32xf32>
    tpu.vector_store %arg5[%c0_80, %c0_81], %256 {strides = array<i32>} : memref<2x32xf32, #tpu.memory_space<vmem>>, vector<2x32xf32>,
    return
  }
  func.func @transform_0(%arg0: i32) -> (i32, i32, i32) {
    %c0_i32 = arith.constant 0 : i32
    %c0_i32_0 = arith.constant 0 : i32
    %c0_i32_1 = arith.constant 0 : i32
    return %arg0, %c0_i32, %c0_i32_0 : i32, i32, i32
  }
  func.func @transform_1(%arg0: i32) -> (i32, i32) {
    %c0_i32 = arith.constant 0 : i32
    %c0_i32_0 = arith.constant 0 : i32
    %c0_i32_1 = arith.constant 0 : i32
    return %c0_i32, %c0_i32_0 : i32, i32
  }
  func.func @transform_2(%arg0: i32) -> (i32, i32, i32) {
    %c0_i32 = arith.constant 0 : i32
    %c0_i32_0 = arith.constant 0 : i32
    %c0_i32_1 = arith.constant 0 : i32
    return %arg0, %c0_i32, %c0_i32_0 : i32, i32, i32
  }
}

module attributes {stable_mosaic.version = 11 : i64} {
  func.func @matmul_bias_kernel(%arg0: i32, %arg1: memref<16x16xf32, #tpu.memory_space<vmem>>, %arg2: memref<16x128xbf16, #tpu.memory_space<vmem>>, %arg3: memref<1x128xf32, #tpu.memory_space<vmem>>, %arg4: memref<16x128xf32, #tpu.memory_space<vmem>>) attributes {dimension_semantics = [#tpu.dimension_semantics<parallel>], iteration_bounds = array<i64: 1>, scalar_prefetch = 0 : i64, scratch_operands = 0 : i64, tpu.core_type = #tpu.core_type<tc>, window_params = [{transform_indices = @transform_0, window_bounds = array<i64: 16, 16>}, {pipeline_mode = #tpu.pipeline_mode<synchronous>, transform_indices = @transform_1, window_bounds = array<i64: 16, 128>}, {pipeline_mode = #tpu.pipeline_mode<synchronous>, transform_indices = @transform_2, window_bounds = array<i64: 1, 128>}, {transform_indices = @transform_3, window_bounds = array<i64: 16, 128>}]} {
    %c0 = arith.constant 0 : index
    %c0_0 = arith.constant 0 : index
    %0 = vector.load %arg1[%c0, %c0_0] : memref<16x16xf32, #tpu.memory_space<vmem>>, vector<16x16xf32>
    %1 = arith.truncf %0 : vector<16x16xf32> to vector<16x16xbf16>
    %c0_1 = arith.constant 0 : index
    %c0_2 = arith.constant 0 : index
    %2 = vector.load %arg2[%c0_1, %c0_2] : memref<16x128xbf16, #tpu.memory_space<vmem>>, vector<16x128xbf16>
    %cst = arith.constant dense<0.000000e+00> : vector<16x128xf32>
    %3 = tpu.matmul %1, %2, %cst {dimension_numbers = #tpu.dot_dimension_numbers<[1], [0], [0], [1], [0, 0, 1, 1], [], []>} : vector<16x16xbf16>, vector<16x128xbf16>, vector<16x128xf32> -> vector<16x128xf32>
    %c0_3 = arith.constant 0 : index
    %c0_4 = arith.constant 0 : index
    %4 = vector.load %arg3[%c0_3, %c0_4] : memref<1x128xf32, #tpu.memory_space<vmem>>, vector<1x128xf32>
    %5 = vector.broadcast %4 : vector<1x128xf32> to vector<16x128xf32>
    %6 = arith.addf %3, %5 : vector<16x128xf32>
    %c0_5 = arith.constant 0 : index
    %c0_6 = arith.constant 0 : index
    %7 = vector.load %arg4[%c0_5, %c0_6] : memref<16x128xf32, #tpu.memory_space<vmem>>, vector<16x128xf32>
    tpu.vector_store %arg4[%c0_5, %c0_6], %6 {strides = array<i32>} : memref<16x128xf32, #tpu.memory_space<vmem>>, vector<16x128xf32>,
    return
  }
  func.func @transform_0(%arg0: i32) -> (i32, i32) {
    %c0_i32 = arith.constant 0 : i32
    %c0_i32_0 = arith.constant 0 : i32
    return %arg0, %c0_i32 : i32, i32
  }
  func.func @transform_1(%arg0: i32) -> (i32, i32) {
    %c0_i32 = arith.constant 0 : i32
    %c0_i32_0 = arith.constant 0 : i32
    %c0_i32_1 = arith.constant 0 : i32
    return %c0_i32, %c0_i32_0 : i32, i32
  }
  func.func @transform_2(%arg0: i32) -> (i32, i32) {
    %c0_i32 = arith.constant 0 : i32
    %c0_i32_0 = arith.constant 0 : i32
    %c0_i32_1 = arith.constant 0 : i32
    return %c0_i32, %c0_i32_0 : i32, i32
  }
  func.func @transform_3(%arg0: i32) -> (i32, i32) {
    %c0_i32 = arith.constant 0 : i32
    %c0_i32_0 = arith.constant 0 : i32
    return %arg0, %c0_i32 : i32, i32
  }
}

module attributes {stable_mosaic.version = 11 : i64} {
  func.func @ln_noaffine_kernel(%arg0: i32, %arg1: memref<16x16xf32, #tpu.memory_space<vmem>>, %arg2: memref<16x16xf32, #tpu.memory_space<vmem>>) attributes {dimension_semantics = [#tpu.dimension_semantics<parallel>], iteration_bounds = array<i64: 1>, scalar_prefetch = 0 : i64, scratch_operands = 0 : i64, tpu.core_type = #tpu.core_type<tc>, window_params = [{transform_indices = @transform_0, window_bounds = array<i64: 16, 16>}, {transform_indices = @transform_1, window_bounds = array<i64: 16, 16>}]} {
    %c0 = arith.constant 0 : index
    %c0_0 = arith.constant 0 : index
    %0 = vector.load %arg1[%c0, %c0_0] : memref<16x16xf32, #tpu.memory_space<vmem>>, vector<16x16xf32>
    %cst = arith.constant dense<0.000000e+00> : vector<16xf32>
    %1 = vector.multi_reduction <add>, %0, %cst [1] : vector<16x16xf32> to vector<16xf32>
    %2 = vector.shape_cast %1 : vector<16xf32> to vector<16x1xf32>
    %cst_1 = arith.constant 1.600000e+01 : f32
    %3 = vector.broadcast %cst_1 : f32 to vector<16x1xf32>
    %4 = arith.divf %2, %3 : vector<16x1xf32>
    %5 = vector.broadcast %4 : vector<16x1xf32> to vector<16x16xf32>
    %6 = arith.subf %0, %5 : vector<16x16xf32>
    %7 = arith.mulf %6, %6 : vector<16x16xf32>
    %cst_2 = arith.constant dense<0.000000e+00> : vector<16xf32>
    %8 = vector.multi_reduction <add>, %7, %cst_2 [1] : vector<16x16xf32> to vector<16xf32>
    %9 = vector.shape_cast %8 : vector<16xf32> to vector<16x1xf32>
    %cst_3 = arith.constant 1.600000e+01 : f32
    %10 = vector.broadcast %cst_3 : f32 to vector<16x1xf32>
    %11 = arith.divf %9, %10 : vector<16x1xf32>
    %12 = vector.broadcast %4 : vector<16x1xf32> to vector<16x16xf32>
    %13 = arith.subf %0, %12 : vector<16x16xf32>
    %cst_4 = arith.constant 9.99999974E-6 : f32
    %14 = vector.broadcast %cst_4 : f32 to vector<16x1xf32>
    %15 = arith.addf %11, %14 : vector<16x1xf32>
    %16 = math.rsqrt %15 : vector<16x1xf32>
    %17 = vector.broadcast %16 : vector<16x1xf32> to vector<16x16xf32>
    %18 = arith.mulf %13, %17 : vector<16x16xf32>
    %c0_5 = arith.constant 0 : index
    %c0_6 = arith.constant 0 : index
    %19 = vector.load %arg2[%c0_5, %c0_6] : memref<16x16xf32, #tpu.memory_space<vmem>>, vector<16x16xf32>
    tpu.vector_store %arg2[%c0_5, %c0_6], %18 {strides = array<i32>} : memref<16x16xf32, #tpu.memory_space<vmem>>, vector<16x16xf32>,
    return
  }
  func.func @transform_0(%arg0: i32) -> (i32, i32) {
    %c0_i32 = arith.constant 0 : i32
    %c0_i32_0 = arith.constant 0 : i32
    return %arg0, %c0_i32 : i32, i32
  }
  func.func @transform_1(%arg0: i32) -> (i32, i32) {
    %c0_i32 = arith.constant 0 : i32
    %c0_i32_0 = arith.constant 0 : i32
    return %arg0, %c0_i32 : i32, i32
  }
}

module attributes {stable_mosaic.version = 11 : i64} {
  func.func @matmul_bias_kernel(%arg0: i32, %arg1: memref<16x32xf32, #tpu.memory_space<vmem>>, %arg2: memref<32x128xbf16, #tpu.memory_space<vmem>>, %arg3: memref<1x128xf32, #tpu.memory_space<vmem>>, %arg4: memref<16x128xf32, #tpu.memory_space<vmem>>) attributes {dimension_semantics = [#tpu.dimension_semantics<parallel>], iteration_bounds = array<i64: 1>, scalar_prefetch = 0 : i64, scratch_operands = 0 : i64, tpu.core_type = #tpu.core_type<tc>, window_params = [{transform_indices = @transform_0, window_bounds = array<i64: 16, 32>}, {pipeline_mode = #tpu.pipeline_mode<synchronous>, transform_indices = @transform_1, window_bounds = array<i64: 32, 128>}, {pipeline_mode = #tpu.pipeline_mode<synchronous>, transform_indices = @transform_2, window_bounds = array<i64: 1, 128>}, {transform_indices = @transform_3, window_bounds = array<i64: 16, 128>}]} {
    %c0 = arith.constant 0 : index
    %c0_0 = arith.constant 0 : index
    %0 = vector.load %arg1[%c0, %c0_0] : memref<16x32xf32, #tpu.memory_space<vmem>>, vector<16x32xf32>
    %1 = arith.truncf %0 : vector<16x32xf32> to vector<16x32xbf16>
    %c0_1 = arith.constant 0 : index
    %c0_2 = arith.constant 0 : index
    %2 = vector.load %arg2[%c0_1, %c0_2] : memref<32x128xbf16, #tpu.memory_space<vmem>>, vector<32x128xbf16>
    %cst = arith.constant dense<0.000000e+00> : vector<16x128xf32>
    %3 = tpu.matmul %1, %2, %cst {dimension_numbers = #tpu.dot_dimension_numbers<[1], [0], [0], [1], [0, 0, 1, 1], [], []>} : vector<16x32xbf16>, vector<32x128xbf16>, vector<16x128xf32> -> vector<16x128xf32>
    %c0_3 = arith.constant 0 : index
    %c0_4 = arith.constant 0 : index
    %4 = vector.load %arg3[%c0_3, %c0_4] : memref<1x128xf32, #tpu.memory_space<vmem>>, vector<1x128xf32>
    %5 = vector.broadcast %4 : vector<1x128xf32> to vector<16x128xf32>
    %6 = arith.addf %3, %5 : vector<16x128xf32>
    %c0_5 = arith.constant 0 : index
    %c0_6 = arith.constant 0 : index
    %7 = vector.load %arg4[%c0_5, %c0_6] : memref<16x128xf32, #tpu.memory_space<vmem>>, vector<16x128xf32>
    tpu.vector_store %arg4[%c0_5, %c0_6], %6 {strides = array<i32>} : memref<16x128xf32, #tpu.memory_space<vmem>>, vector<16x128xf32>,
    return
  }
  func.func @transform_0(%arg0: i32) -> (i32, i32) {
    %c0_i32 = arith.constant 0 : i32
    %c0_i32_0 = arith.constant 0 : i32
    return %arg0, %c0_i32 : i32, i32
  }
  func.func @transform_1(%arg0: i32) -> (i32, i32) {
    %c0_i32 = arith.constant 0 : i32
    %c0_i32_0 = arith.constant 0 : i32
    %c0_i32_1 = arith.constant 0 : i32
    return %c0_i32, %c0_i32_0 : i32, i32
  }
  func.func @transform_2(%arg0: i32) -> (i32, i32) {
    %c0_i32 = arith.constant 0 : i32
    %c0_i32_0 = arith.constant 0 : i32
    %c0_i32_1 = arith.constant 0 : i32
    return %c0_i32, %c0_i32_0 : i32, i32
  }
  func.func @transform_3(%arg0: i32) -> (i32, i32) {
    %c0_i32 = arith.constant 0 : i32
    %c0_i32_0 = arith.constant 0 : i32
    return %arg0, %c0_i32 : i32, i32
  }
}

module attributes {stable_mosaic.version = 11 : i64} {
  func.func @ln_affine_kernel(%arg0: i32, %arg1: memref<16x32xf32, #tpu.memory_space<vmem>>, %arg2: memref<1x32xf32, #tpu.memory_space<vmem>>, %arg3: memref<1x32xf32, #tpu.memory_space<vmem>>, %arg4: memref<16x32xf32, #tpu.memory_space<vmem>>) attributes {dimension_semantics = [#tpu.dimension_semantics<parallel>], iteration_bounds = array<i64: 1>, scalar_prefetch = 0 : i64, scratch_operands = 0 : i64, tpu.core_type = #tpu.core_type<tc>, window_params = [{transform_indices = @transform_0, window_bounds = array<i64: 16, 32>}, {pipeline_mode = #tpu.pipeline_mode<synchronous>, transform_indices = @transform_1, window_bounds = array<i64: 1, 32>}, {pipeline_mode = #tpu.pipeline_mode<synchronous>, transform_indices = @transform_2, window_bounds = array<i64: 1, 32>}, {transform_indices = @transform_3, window_bounds = array<i64: 16, 32>}]} {
    %c0 = arith.constant 0 : index
    %c0_0 = arith.constant 0 : index
    %0 = vector.load %arg1[%c0, %c0_0] : memref<16x32xf32, #tpu.memory_space<vmem>>, vector<16x32xf32>
    %cst = arith.constant dense<0.000000e+00> : vector<16xf32>
    %1 = vector.multi_reduction <add>, %0, %cst [1] : vector<16x32xf32> to vector<16xf32>
    %2 = vector.shape_cast %1 : vector<16xf32> to vector<16x1xf32>
    %cst_1 = arith.constant 3.200000e+01 : f32
    %3 = vector.broadcast %cst_1 : f32 to vector<16x1xf32>
    %4 = arith.divf %2, %3 : vector<16x1xf32>
    %5 = vector.broadcast %4 : vector<16x1xf32> to vector<16x32xf32>
    %6 = arith.subf %0, %5 : vector<16x32xf32>
    %7 = arith.mulf %6, %6 : vector<16x32xf32>
    %cst_2 = arith.constant dense<0.000000e+00> : vector<16xf32>
    %8 = vector.multi_reduction <add>, %7, %cst_2 [1] : vector<16x32xf32> to vector<16xf32>
    %9 = vector.shape_cast %8 : vector<16xf32> to vector<16x1xf32>
    %cst_3 = arith.constant 3.200000e+01 : f32
    %10 = vector.broadcast %cst_3 : f32 to vector<16x1xf32>
    %11 = arith.divf %9, %10 : vector<16x1xf32>
    %12 = vector.broadcast %4 : vector<16x1xf32> to vector<16x32xf32>
    %13 = arith.subf %0, %12 : vector<16x32xf32>
    %cst_4 = arith.constant 9.99999974E-6 : f32
    %14 = vector.broadcast %cst_4 : f32 to vector<16x1xf32>
    %15 = arith.addf %11, %14 : vector<16x1xf32>
    %16 = math.rsqrt %15 : vector<16x1xf32>
    %17 = vector.broadcast %16 : vector<16x1xf32> to vector<16x32xf32>
    %18 = arith.mulf %13, %17 : vector<16x32xf32>
    %c0_5 = arith.constant 0 : index
    %c0_6 = arith.constant 0 : index
    %19 = vector.load %arg2[%c0_5, %c0_6] : memref<1x32xf32, #tpu.memory_space<vmem>>, vector<1x32xf32>
    %20 = vector.broadcast %19 : vector<1x32xf32> to vector<16x32xf32>
    %21 = arith.mulf %18, %20 : vector<16x32xf32>
    %c0_7 = arith.constant 0 : index
    %c0_8 = arith.constant 0 : index
    %22 = vector.load %arg3[%c0_7, %c0_8] : memref<1x32xf32, #tpu.memory_space<vmem>>, vector<1x32xf32>
    %23 = vector.broadcast %22 : vector<1x32xf32> to vector<16x32xf32>
    %24 = arith.addf %21, %23 : vector<16x32xf32>
    %c0_9 = arith.constant 0 : index
    %c0_10 = arith.constant 0 : index
    %25 = vector.load %arg4[%c0_9, %c0_10] : memref<16x32xf32, #tpu.memory_space<vmem>>, vector<16x32xf32>
    tpu.vector_store %arg4[%c0_9, %c0_10], %24 {strides = array<i32>} : memref<16x32xf32, #tpu.memory_space<vmem>>, vector<16x32xf32>,
    return
  }
  func.func @transform_0(%arg0: i32) -> (i32, i32) {
    %c0_i32 = arith.constant 0 : i32
    %c0_i32_0 = arith.constant 0 : i32
    return %arg0, %c0_i32 : i32, i32
  }
  func.func @transform_1(%arg0: i32) -> (i32, i32) {
    %c0_i32 = arith.constant 0 : i32
    %c0_i32_0 = arith.constant 0 : i32
    %c0_i32_1 = arith.constant 0 : i32
    return %c0_i32, %c0_i32_0 : i32, i32
  }
  func.func @transform_2(%arg0: i32) -> (i32, i32) {
    %c0_i32 = arith.constant 0 : i32
    %c0_i32_0 = arith.constant 0 : i32
    %c0_i32_1 = arith.constant 0 : i32
    return %c0_i32, %c0_i32_0 : i32, i32
  }
  func.func @transform_3(%arg0: i32) -> (i32, i32) {
    %c0_i32 = arith.constant 0 : i32
    %c0_i32_0 = arith.constant 0 : i32
    return %arg0, %c0_i32 : i32, i32
  }
}

module attributes {stable_mosaic.version = 11 : i64} {
  func.func @lstm_recurrence_kernel(%arg0: i32, %arg1: memref<8x2x128xf32, #tpu.memory_space<vmem>>, %arg2: memref<32x128xf32, #tpu.memory_space<vmem>>, %arg3: memref<8x2x32xf32, #tpu.memory_space<vmem>>, %arg4: memref<2x32xf32, #tpu.memory_space<vmem>>, %arg5: memref<2x32xf32, #tpu.memory_space<vmem>>) attributes {dimension_semantics = [#tpu.dimension_semantics<arbitrary>], iteration_bounds = array<i64: 1>, scalar_prefetch = 0 : i64, scratch_operands = 2 : i64, tpu.core_type = #tpu.core_type<tc>, window_params = [{transform_indices = @transform_0, window_bounds = array<i64: 8, 2, 128>}, {pipeline_mode = #tpu.pipeline_mode<synchronous>, transform_indices = @transform_1, window_bounds = array<i64: 32, 128>}, {transform_indices = @transform_2, window_bounds = array<i64: 8, 2, 32>}]} {
    %c0_i32 = arith.constant 0 : i32
    %0 = arith.cmpi eq, %arg0, %c0_i32 : i32
    %1 = arith.extui %0 : i1 to i32
    %c0_i32_0 = arith.constant 0 : i32
    %2 = arith.cmpi ne, %1, %c0_i32_0 : i32
    scf.if %2 {
      %cst_82 = arith.constant 0.000000e+00 : f32
      %264 = vector.broadcast %cst_82 : f32 to vector<2x32xf32>
      %c0_83 = arith.constant 0 : index
      %c0_84 = arith.constant 0 : index
      %265 = vector.load %arg4[%c0_83, %c0_84] : memref<2x32xf32, #tpu.memory_space<vmem>>, vector<2x32xf32>
      tpu.vector_store %arg4[%c0_83, %c0_84], %264 {strides = array<i32>} : memref<2x32xf32, #tpu.memory_space<vmem>>, vector<2x32xf32>,
      %cst_85 = arith.constant 0.000000e+00 : f32
      %266 = vector.broadcast %cst_85 : f32 to vector<2x32xf32>
      %c0_86 = arith.constant 0 : index
      %c0_87 = arith.constant 0 : index
      %267 = vector.load %arg5[%c0_86, %c0_87] : memref<2x32xf32, #tpu.memory_space<vmem>>, vector<2x32xf32>
      tpu.vector_store %arg5[%c0_86, %c0_87], %266 {strides = array<i32>} : memref<2x32xf32, #tpu.memory_space<vmem>>, vector<2x32xf32>,
    } else {
    }
    %c0 = arith.constant 0 : index
    %c0_1 = arith.constant 0 : index
    %3 = vector.load %arg2[%c0, %c0_1] : memref<32x128xf32, #tpu.memory_space<vmem>>, vector<32x128xf32>
    %c0_2 = arith.constant 0 : index
    %c0_3 = arith.constant 0 : index
    %4 = vector.load %arg4[%c0_2, %c0_3] : memref<2x32xf32, #tpu.memory_space<vmem>>, vector<2x32xf32>
    %c0_4 = arith.constant 0 : index
    %c0_5 = arith.constant 0 : index
    %5 = vector.load %arg5[%c0_4, %c0_5] : memref<2x32xf32, #tpu.memory_space<vmem>>, vector<2x32xf32>
    %c0_6 = arith.constant 0 : index
    %c0_7 = arith.constant 0 : index
    %c0_8 = arith.constant 0 : index
    %6 = vector.load %arg1[%c0_6, %c0_7, %c0_8] : memref<8x2x128xf32, #tpu.memory_space<vmem>>, vector<1x2x128xf32>
    %7 = vector.shape_cast %6 : vector<1x2x128xf32> to vector<2x128xf32>
    %cst = arith.constant dense<0.000000e+00> : vector<2x128xf32>
    %8 = tpu.matmul %4, %3, %cst {dimension_numbers = #tpu.dot_dimension_numbers<[1], [0], [0], [1], [0, 0, 1, 1], [], []>} : vector<2x32xf32>, vector<32x128xf32>, vector<2x128xf32> -> vector<2x128xf32>
    %9 = arith.addf %7, %8 : vector<2x128xf32>
    %10 = vector.extract_strided_slice %9 {offsets = [0, 0], sizes = [2, 32], strides = [1, 1]} : vector<2x128xf32> to vector<2x32xf32>
    %11 = arith.negf %10 : vector<2x32xf32>
    %12 = math.exp %11 : vector<2x32xf32>
    %cst_9 = arith.constant 1.000000e+00 : f32
    %13 = vector.broadcast %cst_9 : f32 to vector<2x32xf32>
    %14 = arith.addf %13, %12 : vector<2x32xf32>
    %15 = arith.divf %13, %14 : vector<2x32xf32>
    %16 = vector.extract_strided_slice %9 {offsets = [0, 32], sizes = [2, 32], strides = [1, 1]} : vector<2x128xf32> to vector<2x32xf32>
    %17 = arith.negf %16 : vector<2x32xf32>
    %18 = math.exp %17 : vector<2x32xf32>
    %cst_10 = arith.constant 1.000000e+00 : f32
    %19 = vector.broadcast %cst_10 : f32 to vector<2x32xf32>
    %20 = arith.addf %19, %18 : vector<2x32xf32>
    %21 = arith.divf %19, %20 : vector<2x32xf32>
    %22 = vector.extract_strided_slice %9 {offsets = [0, 64], sizes = [2, 32], strides = [1, 1]} : vector<2x128xf32> to vector<2x32xf32>
    %23 = math.tanh %22 : vector<2x32xf32>
    %24 = vector.extract_strided_slice %9 {offsets = [0, 96], sizes = [2, 32], strides = [1, 1]} : vector<2x128xf32> to vector<2x32xf32>
    %25 = arith.negf %24 : vector<2x32xf32>
    %26 = math.exp %25 : vector<2x32xf32>
    %cst_11 = arith.constant 1.000000e+00 : f32
    %27 = vector.broadcast %cst_11 : f32 to vector<2x32xf32>
    %28 = arith.addf %27, %26 : vector<2x32xf32>
    %29 = arith.divf %27, %28 : vector<2x32xf32>
    %30 = arith.mulf %21, %5 : vector<2x32xf32>
    %31 = arith.mulf %15, %23 : vector<2x32xf32>
    %32 = arith.addf %30, %31 : vector<2x32xf32>
    %33 = math.tanh %32 : vector<2x32xf32>
    %34 = arith.mulf %29, %33 : vector<2x32xf32>
    %c0_12 = arith.constant 0 : index
    %c0_13 = arith.constant 0 : index
    %c0_14 = arith.constant 0 : index
    %35 = vector.load %arg3[%c0_12, %c0_13, %c0_14] : memref<8x2x32xf32, #tpu.memory_space<vmem>>, vector<1x2x32xf32>
    %36 = vector.shape_cast %35 : vector<1x2x32xf32> to vector<2x32xf32>
    %37 = vector.shape_cast %34 : vector<2x32xf32> to vector<1x2x32xf32>
    tpu.vector_store %arg3[%c0_12, %c0_13, %c0_14], %37 {strides = array<i32>} : memref<8x2x32xf32, #tpu.memory_space<vmem>>, vector<1x2x32xf32>,
    %c1 = arith.constant 1 : index
    %c0_15 = arith.constant 0 : index
    %c0_16 = arith.constant 0 : index
    %38 = vector.load %arg1[%c1, %c0_15, %c0_16] : memref<8x2x128xf32, #tpu.memory_space<vmem>>, vector<1x2x128xf32>
    %39 = vector.shape_cast %38 : vector<1x2x128xf32> to vector<2x128xf32>
    %cst_17 = arith.constant dense<0.000000e+00> : vector<2x128xf32>
    %40 = tpu.matmul %34, %3, %cst_17 {dimension_numbers = #tpu.dot_dimension_numbers<[1], [0], [0], [1], [0, 0, 1, 1], [], []>} : vector<2x32xf32>, vector<32x128xf32>, vector<2x128xf32> -> vector<2x128xf32>
    %41 = arith.addf %39, %40 : vector<2x128xf32>
    %42 = vector.extract_strided_slice %41 {offsets = [0, 0], sizes = [2, 32], strides = [1, 1]} : vector<2x128xf32> to vector<2x32xf32>
    %43 = arith.negf %42 : vector<2x32xf32>
    %44 = math.exp %43 : vector<2x32xf32>
    %cst_18 = arith.constant 1.000000e+00 : f32
    %45 = vector.broadcast %cst_18 : f32 to vector<2x32xf32>
    %46 = arith.addf %45, %44 : vector<2x32xf32>
    %47 = arith.divf %45, %46 : vector<2x32xf32>
    %48 = vector.extract_strided_slice %41 {offsets = [0, 32], sizes = [2, 32], strides = [1, 1]} : vector<2x128xf32> to vector<2x32xf32>
    %49 = arith.negf %48 : vector<2x32xf32>
    %50 = math.exp %49 : vector<2x32xf32>
    %cst_19 = arith.constant 1.000000e+00 : f32
    %51 = vector.broadcast %cst_19 : f32 to vector<2x32xf32>
    %52 = arith.addf %51, %50 : vector<2x32xf32>
    %53 = arith.divf %51, %52 : vector<2x32xf32>
    %54 = vector.extract_strided_slice %41 {offsets = [0, 64], sizes = [2, 32], strides = [1, 1]} : vector<2x128xf32> to vector<2x32xf32>
    %55 = math.tanh %54 : vector<2x32xf32>
    %56 = vector.extract_strided_slice %41 {offsets = [0, 96], sizes = [2, 32], strides = [1, 1]} : vector<2x128xf32> to vector<2x32xf32>
    %57 = arith.negf %56 : vector<2x32xf32>
    %58 = math.exp %57 : vector<2x32xf32>
    %cst_20 = arith.constant 1.000000e+00 : f32
    %59 = vector.broadcast %cst_20 : f32 to vector<2x32xf32>
    %60 = arith.addf %59, %58 : vector<2x32xf32>
    %61 = arith.divf %59, %60 : vector<2x32xf32>
    %62 = arith.mulf %53, %32 : vector<2x32xf32>
    %63 = arith.mulf %47, %55 : vector<2x32xf32>
    %64 = arith.addf %62, %63 : vector<2x32xf32>
    %65 = math.tanh %64 : vector<2x32xf32>
    %66 = arith.mulf %61, %65 : vector<2x32xf32>
    %c1_21 = arith.constant 1 : index
    %c0_22 = arith.constant 0 : index
    %c0_23 = arith.constant 0 : index
    %67 = vector.load %arg3[%c1_21, %c0_22, %c0_23] : memref<8x2x32xf32, #tpu.memory_space<vmem>>, vector<1x2x32xf32>
    %68 = vector.shape_cast %67 : vector<1x2x32xf32> to vector<2x32xf32>
    %69 = vector.shape_cast %66 : vector<2x32xf32> to vector<1x2x32xf32>
    tpu.vector_store %arg3[%c1_21, %c0_22, %c0_23], %69 {strides = array<i32>} : memref<8x2x32xf32, #tpu.memory_space<vmem>>, vector<1x2x32xf32>,
    %c2 = arith.constant 2 : index
    %c0_24 = arith.constant 0 : index
    %c0_25 = arith.constant 0 : index
    %70 = vector.load %arg1[%c2, %c0_24, %c0_25] : memref<8x2x128xf32, #tpu.memory_space<vmem>>, vector<1x2x128xf32>
    %71 = vector.shape_cast %70 : vector<1x2x128xf32> to vector<2x128xf32>
    %cst_26 = arith.constant dense<0.000000e+00> : vector<2x128xf32>
    %72 = tpu.matmul %66, %3, %cst_26 {dimension_numbers = #tpu.dot_dimension_numbers<[1], [0], [0], [1], [0, 0, 1, 1], [], []>} : vector<2x32xf32>, vector<32x128xf32>, vector<2x128xf32> -> vector<2x128xf32>
    %73 = arith.addf %71, %72 : vector<2x128xf32>
    %74 = vector.extract_strided_slice %73 {offsets = [0, 0], sizes = [2, 32], strides = [1, 1]} : vector<2x128xf32> to vector<2x32xf32>
    %75 = arith.negf %74 : vector<2x32xf32>
    %76 = math.exp %75 : vector<2x32xf32>
    %cst_27 = arith.constant 1.000000e+00 : f32
    %77 = vector.broadcast %cst_27 : f32 to vector<2x32xf32>
    %78 = arith.addf %77, %76 : vector<2x32xf32>
    %79 = arith.divf %77, %78 : vector<2x32xf32>
    %80 = vector.extract_strided_slice %73 {offsets = [0, 32], sizes = [2, 32], strides = [1, 1]} : vector<2x128xf32> to vector<2x32xf32>
    %81 = arith.negf %80 : vector<2x32xf32>
    %82 = math.exp %81 : vector<2x32xf32>
    %cst_28 = arith.constant 1.000000e+00 : f32
    %83 = vector.broadcast %cst_28 : f32 to vector<2x32xf32>
    %84 = arith.addf %83, %82 : vector<2x32xf32>
    %85 = arith.divf %83, %84 : vector<2x32xf32>
    %86 = vector.extract_strided_slice %73 {offsets = [0, 64], sizes = [2, 32], strides = [1, 1]} : vector<2x128xf32> to vector<2x32xf32>
    %87 = math.tanh %86 : vector<2x32xf32>
    %88 = vector.extract_strided_slice %73 {offsets = [0, 96], sizes = [2, 32], strides = [1, 1]} : vector<2x128xf32> to vector<2x32xf32>
    %89 = arith.negf %88 : vector<2x32xf32>
    %90 = math.exp %89 : vector<2x32xf32>
    %cst_29 = arith.constant 1.000000e+00 : f32
    %91 = vector.broadcast %cst_29 : f32 to vector<2x32xf32>
    %92 = arith.addf %91, %90 : vector<2x32xf32>
    %93 = arith.divf %91, %92 : vector<2x32xf32>
    %94 = arith.mulf %85, %64 : vector<2x32xf32>
    %95 = arith.mulf %79, %87 : vector<2x32xf32>
    %96 = arith.addf %94, %95 : vector<2x32xf32>
    %97 = math.tanh %96 : vector<2x32xf32>
    %98 = arith.mulf %93, %97 : vector<2x32xf32>
    %c2_30 = arith.constant 2 : index
    %c0_31 = arith.constant 0 : index
    %c0_32 = arith.constant 0 : index
    %99 = vector.load %arg3[%c2_30, %c0_31, %c0_32] : memref<8x2x32xf32, #tpu.memory_space<vmem>>, vector<1x2x32xf32>
    %100 = vector.shape_cast %99 : vector<1x2x32xf32> to vector<2x32xf32>
    %101 = vector.shape_cast %98 : vector<2x32xf32> to vector<1x2x32xf32>
    tpu.vector_store %arg3[%c2_30, %c0_31, %c0_32], %101 {strides = array<i32>} : memref<8x2x32xf32, #tpu.memory_space<vmem>>, vector<1x2x32xf32>,
    %c3 = arith.constant 3 : index
    %c0_33 = arith.constant 0 : index
    %c0_34 = arith.constant 0 : index
    %102 = vector.load %arg1[%c3, %c0_33, %c0_34] : memref<8x2x128xf32, #tpu.memory_space<vmem>>, vector<1x2x128xf32>
    %103 = vector.shape_cast %102 : vector<1x2x128xf32> to vector<2x128xf32>
    %cst_35 = arith.constant dense<0.000000e+00> : vector<2x128xf32>
    %104 = tpu.matmul %98, %3, %cst_35 {dimension_numbers = #tpu.dot_dimension_numbers<[1], [0], [0], [1], [0, 0, 1, 1], [], []>} : vector<2x32xf32>, vector<32x128xf32>, vector<2x128xf32> -> vector<2x128xf32>
    %105 = arith.addf %103, %104 : vector<2x128xf32>
    %106 = vector.extract_strided_slice %105 {offsets = [0, 0], sizes = [2, 32], strides = [1, 1]} : vector<2x128xf32> to vector<2x32xf32>
    %107 = arith.negf %106 : vector<2x32xf32>
    %108 = math.exp %107 : vector<2x32xf32>
    %cst_36 = arith.constant 1.000000e+00 : f32
    %109 = vector.broadcast %cst_36 : f32 to vector<2x32xf32>
    %110 = arith.addf %109, %108 : vector<2x32xf32>
    %111 = arith.divf %109, %110 : vector<2x32xf32>
    %112 = vector.extract_strided_slice %105 {offsets = [0, 32], sizes = [2, 32], strides = [1, 1]} : vector<2x128xf32> to vector<2x32xf32>
    %113 = arith.negf %112 : vector<2x32xf32>
    %114 = math.exp %113 : vector<2x32xf32>
    %cst_37 = arith.constant 1.000000e+00 : f32
    %115 = vector.broadcast %cst_37 : f32 to vector<2x32xf32>
    %116 = arith.addf %115, %114 : vector<2x32xf32>
    %117 = arith.divf %115, %116 : vector<2x32xf32>
    %118 = vector.extract_strided_slice %105 {offsets = [0, 64], sizes = [2, 32], strides = [1, 1]} : vector<2x128xf32> to vector<2x32xf32>
    %119 = math.tanh %118 : vector<2x32xf32>
    %120 = vector.extract_strided_slice %105 {offsets = [0, 96], sizes = [2, 32], strides = [1, 1]} : vector<2x128xf32> to vector<2x32xf32>
    %121 = arith.negf %120 : vector<2x32xf32>
    %122 = math.exp %121 : vector<2x32xf32>
    %cst_38 = arith.constant 1.000000e+00 : f32
    %123 = vector.broadcast %cst_38 : f32 to vector<2x32xf32>
    %124 = arith.addf %123, %122 : vector<2x32xf32>
    %125 = arith.divf %123, %124 : vector<2x32xf32>
    %126 = arith.mulf %117, %96 : vector<2x32xf32>
    %127 = arith.mulf %111, %119 : vector<2x32xf32>
    %128 = arith.addf %126, %127 : vector<2x32xf32>
    %129 = math.tanh %128 : vector<2x32xf32>
    %130 = arith.mulf %125, %129 : vector<2x32xf32>
    %c3_39 = arith.constant 3 : index
    %c0_40 = arith.constant 0 : index
    %c0_41 = arith.constant 0 : index
    %131 = vector.load %arg3[%c3_39, %c0_40, %c0_41] : memref<8x2x32xf32, #tpu.memory_space<vmem>>, vector<1x2x32xf32>
    %132 = vector.shape_cast %131 : vector<1x2x32xf32> to vector<2x32xf32>
    %133 = vector.shape_cast %130 : vector<2x32xf32> to vector<1x2x32xf32>
    tpu.vector_store %arg3[%c3_39, %c0_40, %c0_41], %133 {strides = array<i32>} : memref<8x2x32xf32, #tpu.memory_space<vmem>>, vector<1x2x32xf32>,
    %c4 = arith.constant 4 : index
    %c0_42 = arith.constant 0 : index
    %c0_43 = arith.constant 0 : index
    %134 = vector.load %arg1[%c4, %c0_42, %c0_43] : memref<8x2x128xf32, #tpu.memory_space<vmem>>, vector<1x2x128xf32>
    %135 = vector.shape_cast %134 : vector<1x2x128xf32> to vector<2x128xf32>
    %cst_44 = arith.constant dense<0.000000e+00> : vector<2x128xf32>
    %136 = tpu.matmul %130, %3, %cst_44 {dimension_numbers = #tpu.dot_dimension_numbers<[1], [0], [0], [1], [0, 0, 1, 1], [], []>} : vector<2x32xf32>, vector<32x128xf32>, vector<2x128xf32> -> vector<2x128xf32>
    %137 = arith.addf %135, %136 : vector<2x128xf32>
    %138 = vector.extract_strided_slice %137 {offsets = [0, 0], sizes = [2, 32], strides = [1, 1]} : vector<2x128xf32> to vector<2x32xf32>
    %139 = arith.negf %138 : vector<2x32xf32>
    %140 = math.exp %139 : vector<2x32xf32>
    %cst_45 = arith.constant 1.000000e+00 : f32
    %141 = vector.broadcast %cst_45 : f32 to vector<2x32xf32>
    %142 = arith.addf %141, %140 : vector<2x32xf32>
    %143 = arith.divf %141, %142 : vector<2x32xf32>
    %144 = vector.extract_strided_slice %137 {offsets = [0, 32], sizes = [2, 32], strides = [1, 1]} : vector<2x128xf32> to vector<2x32xf32>
    %145 = arith.negf %144 : vector<2x32xf32>
    %146 = math.exp %145 : vector<2x32xf32>
    %cst_46 = arith.constant 1.000000e+00 : f32
    %147 = vector.broadcast %cst_46 : f32 to vector<2x32xf32>
    %148 = arith.addf %147, %146 : vector<2x32xf32>
    %149 = arith.divf %147, %148 : vector<2x32xf32>
    %150 = vector.extract_strided_slice %137 {offsets = [0, 64], sizes = [2, 32], strides = [1, 1]} : vector<2x128xf32> to vector<2x32xf32>
    %151 = math.tanh %150 : vector<2x32xf32>
    %152 = vector.extract_strided_slice %137 {offsets = [0, 96], sizes = [2, 32], strides = [1, 1]} : vector<2x128xf32> to vector<2x32xf32>
    %153 = arith.negf %152 : vector<2x32xf32>
    %154 = math.exp %153 : vector<2x32xf32>
    %cst_47 = arith.constant 1.000000e+00 : f32
    %155 = vector.broadcast %cst_47 : f32 to vector<2x32xf32>
    %156 = arith.addf %155, %154 : vector<2x32xf32>
    %157 = arith.divf %155, %156 : vector<2x32xf32>
    %158 = arith.mulf %149, %128 : vector<2x32xf32>
    %159 = arith.mulf %143, %151 : vector<2x32xf32>
    %160 = arith.addf %158, %159 : vector<2x32xf32>
    %161 = math.tanh %160 : vector<2x32xf32>
    %162 = arith.mulf %157, %161 : vector<2x32xf32>
    %c4_48 = arith.constant 4 : index
    %c0_49 = arith.constant 0 : index
    %c0_50 = arith.constant 0 : index
    %163 = vector.load %arg3[%c4_48, %c0_49, %c0_50] : memref<8x2x32xf32, #tpu.memory_space<vmem>>, vector<1x2x32xf32>
    %164 = vector.shape_cast %163 : vector<1x2x32xf32> to vector<2x32xf32>
    %165 = vector.shape_cast %162 : vector<2x32xf32> to vector<1x2x32xf32>
    tpu.vector_store %arg3[%c4_48, %c0_49, %c0_50], %165 {strides = array<i32>} : memref<8x2x32xf32, #tpu.memory_space<vmem>>, vector<1x2x32xf32>,
    %c5 = arith.constant 5 : index
    %c0_51 = arith.constant 0 : index
    %c0_52 = arith.constant 0 : index
    %166 = vector.load %arg1[%c5, %c0_51, %c0_52] : memref<8x2x128xf32, #tpu.memory_space<vmem>>, vector<1x2x128xf32>
    %167 = vector.shape_cast %166 : vector<1x2x128xf32> to vector<2x128xf32>
    %cst_53 = arith.constant dense<0.000000e+00> : vector<2x128xf32>
    %168 = tpu.matmul %162, %3, %cst_53 {dimension_numbers = #tpu.dot_dimension_numbers<[1], [0], [0], [1], [0, 0, 1, 1], [], []>} : vector<2x32xf32>, vector<32x128xf32>, vector<2x128xf32> -> vector<2x128xf32>
    %169 = arith.addf %167, %168 : vector<2x128xf32>
    %170 = vector.extract_strided_slice %169 {offsets = [0, 0], sizes = [2, 32], strides = [1, 1]} : vector<2x128xf32> to vector<2x32xf32>
    %171 = arith.negf %170 : vector<2x32xf32>
    %172 = math.exp %171 : vector<2x32xf32>
    %cst_54 = arith.constant 1.000000e+00 : f32
    %173 = vector.broadcast %cst_54 : f32 to vector<2x32xf32>
    %174 = arith.addf %173, %172 : vector<2x32xf32>
    %175 = arith.divf %173, %174 : vector<2x32xf32>
    %176 = vector.extract_strided_slice %169 {offsets = [0, 32], sizes = [2, 32], strides = [1, 1]} : vector<2x128xf32> to vector<2x32xf32>
    %177 = arith.negf %176 : vector<2x32xf32>
    %178 = math.exp %177 : vector<2x32xf32>
    %cst_55 = arith.constant 1.000000e+00 : f32
    %179 = vector.broadcast %cst_55 : f32 to vector<2x32xf32>
    %180 = arith.addf %179, %178 : vector<2x32xf32>
    %181 = arith.divf %179, %180 : vector<2x32xf32>
    %182 = vector.extract_strided_slice %169 {offsets = [0, 64], sizes = [2, 32], strides = [1, 1]} : vector<2x128xf32> to vector<2x32xf32>
    %183 = math.tanh %182 : vector<2x32xf32>
    %184 = vector.extract_strided_slice %169 {offsets = [0, 96], sizes = [2, 32], strides = [1, 1]} : vector<2x128xf32> to vector<2x32xf32>
    %185 = arith.negf %184 : vector<2x32xf32>
    %186 = math.exp %185 : vector<2x32xf32>
    %cst_56 = arith.constant 1.000000e+00 : f32
    %187 = vector.broadcast %cst_56 : f32 to vector<2x32xf32>
    %188 = arith.addf %187, %186 : vector<2x32xf32>
    %189 = arith.divf %187, %188 : vector<2x32xf32>
    %190 = arith.mulf %181, %160 : vector<2x32xf32>
    %191 = arith.mulf %175, %183 : vector<2x32xf32>
    %192 = arith.addf %190, %191 : vector<2x32xf32>
    %193 = math.tanh %192 : vector<2x32xf32>
    %194 = arith.mulf %189, %193 : vector<2x32xf32>
    %c5_57 = arith.constant 5 : index
    %c0_58 = arith.constant 0 : index
    %c0_59 = arith.constant 0 : index
    %195 = vector.load %arg3[%c5_57, %c0_58, %c0_59] : memref<8x2x32xf32, #tpu.memory_space<vmem>>, vector<1x2x32xf32>
    %196 = vector.shape_cast %195 : vector<1x2x32xf32> to vector<2x32xf32>
    %197 = vector.shape_cast %194 : vector<2x32xf32> to vector<1x2x32xf32>
    tpu.vector_store %arg3[%c5_57, %c0_58, %c0_59], %197 {strides = array<i32>} : memref<8x2x32xf32, #tpu.memory_space<vmem>>, vector<1x2x32xf32>,
    %c6 = arith.constant 6 : index
    %c0_60 = arith.constant 0 : index
    %c0_61 = arith.constant 0 : index
    %198 = vector.load %arg1[%c6, %c0_60, %c0_61] : memref<8x2x128xf32, #tpu.memory_space<vmem>>, vector<1x2x128xf32>
    %199 = vector.shape_cast %198 : vector<1x2x128xf32> to vector<2x128xf32>
    %cst_62 = arith.constant dense<0.000000e+00> : vector<2x128xf32>
    %200 = tpu.matmul %194, %3, %cst_62 {dimension_numbers = #tpu.dot_dimension_numbers<[1], [0], [0], [1], [0, 0, 1, 1], [], []>} : vector<2x32xf32>, vector<32x128xf32>, vector<2x128xf32> -> vector<2x128xf32>
    %201 = arith.addf %199, %200 : vector<2x128xf32>
    %202 = vector.extract_strided_slice %201 {offsets = [0, 0], sizes = [2, 32], strides = [1, 1]} : vector<2x128xf32> to vector<2x32xf32>
    %203 = arith.negf %202 : vector<2x32xf32>
    %204 = math.exp %203 : vector<2x32xf32>
    %cst_63 = arith.constant 1.000000e+00 : f32
    %205 = vector.broadcast %cst_63 : f32 to vector<2x32xf32>
    %206 = arith.addf %205, %204 : vector<2x32xf32>
    %207 = arith.divf %205, %206 : vector<2x32xf32>
    %208 = vector.extract_strided_slice %201 {offsets = [0, 32], sizes = [2, 32], strides = [1, 1]} : vector<2x128xf32> to vector<2x32xf32>
    %209 = arith.negf %208 : vector<2x32xf32>
    %210 = math.exp %209 : vector<2x32xf32>
    %cst_64 = arith.constant 1.000000e+00 : f32
    %211 = vector.broadcast %cst_64 : f32 to vector<2x32xf32>
    %212 = arith.addf %211, %210 : vector<2x32xf32>
    %213 = arith.divf %211, %212 : vector<2x32xf32>
    %214 = vector.extract_strided_slice %201 {offsets = [0, 64], sizes = [2, 32], strides = [1, 1]} : vector<2x128xf32> to vector<2x32xf32>
    %215 = math.tanh %214 : vector<2x32xf32>
    %216 = vector.extract_strided_slice %201 {offsets = [0, 96], sizes = [2, 32], strides = [1, 1]} : vector<2x128xf32> to vector<2x32xf32>
    %217 = arith.negf %216 : vector<2x32xf32>
    %218 = math.exp %217 : vector<2x32xf32>
    %cst_65 = arith.constant 1.000000e+00 : f32
    %219 = vector.broadcast %cst_65 : f32 to vector<2x32xf32>
    %220 = arith.addf %219, %218 : vector<2x32xf32>
    %221 = arith.divf %219, %220 : vector<2x32xf32>
    %222 = arith.mulf %213, %192 : vector<2x32xf32>
    %223 = arith.mulf %207, %215 : vector<2x32xf32>
    %224 = arith.addf %222, %223 : vector<2x32xf32>
    %225 = math.tanh %224 : vector<2x32xf32>
    %226 = arith.mulf %221, %225 : vector<2x32xf32>
    %c6_66 = arith.constant 6 : index
    %c0_67 = arith.constant 0 : index
    %c0_68 = arith.constant 0 : index
    %227 = vector.load %arg3[%c6_66, %c0_67, %c0_68] : memref<8x2x32xf32, #tpu.memory_space<vmem>>, vector<1x2x32xf32>
    %228 = vector.shape_cast %227 : vector<1x2x32xf32> to vector<2x32xf32>
    %229 = vector.shape_cast %226 : vector<2x32xf32> to vector<1x2x32xf32>
    tpu.vector_store %arg3[%c6_66, %c0_67, %c0_68], %229 {strides = array<i32>} : memref<8x2x32xf32, #tpu.memory_space<vmem>>, vector<1x2x32xf32>,
    %c7 = arith.constant 7 : index
    %c0_69 = arith.constant 0 : index
    %c0_70 = arith.constant 0 : index
    %230 = vector.load %arg1[%c7, %c0_69, %c0_70] : memref<8x2x128xf32, #tpu.memory_space<vmem>>, vector<1x2x128xf32>
    %231 = vector.shape_cast %230 : vector<1x2x128xf32> to vector<2x128xf32>
    %cst_71 = arith.constant dense<0.000000e+00> : vector<2x128xf32>
    %232 = tpu.matmul %226, %3, %cst_71 {dimension_numbers = #tpu.dot_dimension_numbers<[1], [0], [0], [1], [0, 0, 1, 1], [], []>} : vector<2x32xf32>, vector<32x128xf32>, vector<2x128xf32> -> vector<2x128xf32>
    %233 = arith.addf %231, %232 : vector<2x128xf32>
    %234 = vector.extract_strided_slice %233 {offsets = [0, 0], sizes = [2, 32], strides = [1, 1]} : vector<2x128xf32> to vector<2x32xf32>
    %235 = arith.negf %234 : vector<2x32xf32>
    %236 = math.exp %235 : vector<2x32xf32>
    %cst_72 = arith.constant 1.000000e+00 : f32
    %237 = vector.broadcast %cst_72 : f32 to vector<2x32xf32>
    %238 = arith.addf %237, %236 : vector<2x32xf32>
    %239 = arith.divf %237, %238 : vector<2x32xf32>
    %240 = vector.extract_strided_slice %233 {offsets = [0, 32], sizes = [2, 32], strides = [1, 1]} : vector<2x128xf32> to vector<2x32xf32>
    %241 = arith.negf %240 : vector<2x32xf32>
    %242 = math.exp %241 : vector<2x32xf32>
    %cst_73 = arith.constant 1.000000e+00 : f32
    %243 = vector.broadcast %cst_73 : f32 to vector<2x32xf32>
    %244 = arith.addf %243, %242 : vector<2x32xf32>
    %245 = arith.divf %243, %244 : vector<2x32xf32>
    %246 = vector.extract_strided_slice %233 {offsets = [0, 64], sizes = [2, 32], strides = [1, 1]} : vector<2x128xf32> to vector<2x32xf32>
    %247 = math.tanh %246 : vector<2x32xf32>
    %248 = vector.extract_strided_slice %233 {offsets = [0, 96], sizes = [2, 32], strides = [1, 1]} : vector<2x128xf32> to vector<2x32xf32>
    %249 = arith.negf %248 : vector<2x32xf32>
    %250 = math.exp %249 : vector<2x32xf32>
    %cst_74 = arith.constant 1.000000e+00 : f32
    %251 = vector.broadcast %cst_74 : f32 to vector<2x32xf32>
    %252 = arith.addf %251, %250 : vector<2x32xf32>
    %253 = arith.divf %251, %252 : vector<2x32xf32>
    %254 = arith.mulf %245, %224 : vector<2x32xf32>
    %255 = arith.mulf %239, %247 : vector<2x32xf32>
    %256 = arith.addf %254, %255 : vector<2x32xf32>
    %257 = math.tanh %256 : vector<2x32xf32>
    %258 = arith.mulf %253, %257 : vector<2x32xf32>
    %c7_75 = arith.constant 7 : index
    %c0_76 = arith.constant 0 : index
    %c0_77 = arith.constant 0 : index
    %259 = vector.load %arg3[%c7_75, %c0_76, %c0_77] : memref<8x2x32xf32, #tpu.memory_space<vmem>>, vector<1x2x32xf32>
    %260 = vector.shape_cast %259 : vector<1x2x32xf32> to vector<2x32xf32>
    %261 = vector.shape_cast %258 : vector<2x32xf32> to vector<1x2x32xf32>
    tpu.vector_store %arg3[%c7_75, %c0_76, %c0_77], %261 {strides = array<i32>} : memref<8x2x32xf32, #tpu.memory_space<vmem>>, vector<1x2x32xf32>,
    %c0_78 = arith.constant 0 : index
    %c0_79 = arith.constant 0 : index
    %262 = vector.load %arg4[%c0_78, %c0_79] : memref<2x32xf32, #tpu.memory_space<vmem>>, vector<2x32xf32>
    tpu.vector_store %arg4[%c0_78, %c0_79], %258 {strides = array<i32>} : memref<2x32xf32, #tpu.memory_space<vmem>>, vector<2x32xf32>,
    %c0_80 = arith.constant 0 : index
    %c0_81 = arith.constant 0 : index
    %263 = vector.load %arg5[%c0_80, %c0_81] : memref<2x32xf32, #tpu.memory_space<vmem>>, vector<2x32xf32>
    tpu.vector_store %arg5[%c0_80, %c0_81], %256 {strides = array<i32>} : memref<2x32xf32, #tpu.memory_space<vmem>>, vector<2x32xf32>,
    return
  }
  func.func @transform_0(%arg0: i32) -> (i32, i32, i32) {
    %c0_i32 = arith.constant 0 : i32
    %c0_i32_0 = arith.constant 0 : i32
    %c0_i32_1 = arith.constant 0 : i32
    return %arg0, %c0_i32, %c0_i32_0 : i32, i32, i32
  }
  func.func @transform_1(%arg0: i32) -> (i32, i32) {
    %c0_i32 = arith.constant 0 : i32
    %c0_i32_0 = arith.constant 0 : i32
    %c0_i32_1 = arith.constant 0 : i32
    return %c0_i32, %c0_i32_0 : i32, i32
  }
  func.func @transform_2(%arg0: i32) -> (i32, i32, i32) {
    %c0_i32 = arith.constant 0 : i32
    %c0_i32_0 = arith.constant 0 : i32
    %c0_i32_1 = arith.constant 0 : i32
    return %arg0, %c0_i32, %c0_i32_0 : i32, i32, i32
  }
}

module attributes {stable_mosaic.version = 11 : i64} {
  func.func @matmul_bias_kernel(%arg0: i32, %arg1: memref<16x32xf32, #tpu.memory_space<vmem>>, %arg2: memref<32x48xbf16, #tpu.memory_space<vmem>>, %arg3: memref<1x48xf32, #tpu.memory_space<vmem>>, %arg4: memref<16x48xf32, #tpu.memory_space<vmem>>) attributes {dimension_semantics = [#tpu.dimension_semantics<parallel>], iteration_bounds = array<i64: 1>, scalar_prefetch = 0 : i64, scratch_operands = 0 : i64, tpu.core_type = #tpu.core_type<tc>, window_params = [{transform_indices = @transform_0, window_bounds = array<i64: 16, 32>}, {pipeline_mode = #tpu.pipeline_mode<synchronous>, transform_indices = @transform_1, window_bounds = array<i64: 32, 48>}, {pipeline_mode = #tpu.pipeline_mode<synchronous>, transform_indices = @transform_2, window_bounds = array<i64: 1, 48>}, {transform_indices = @transform_3, window_bounds = array<i64: 16, 48>}]} {
    %c0 = arith.constant 0 : index
    %c0_0 = arith.constant 0 : index
    %0 = vector.load %arg1[%c0, %c0_0] : memref<16x32xf32, #tpu.memory_space<vmem>>, vector<16x32xf32>
    %1 = arith.truncf %0 : vector<16x32xf32> to vector<16x32xbf16>
    %c0_1 = arith.constant 0 : index
    %c0_2 = arith.constant 0 : index
    %2 = vector.load %arg2[%c0_1, %c0_2] : memref<32x48xbf16, #tpu.memory_space<vmem>>, vector<32x48xbf16>
    %cst = arith.constant dense<0.000000e+00> : vector<16x48xf32>
    %3 = tpu.matmul %1, %2, %cst {dimension_numbers = #tpu.dot_dimension_numbers<[1], [0], [0], [1], [0, 0, 1, 1], [], []>} : vector<16x32xbf16>, vector<32x48xbf16>, vector<16x48xf32> -> vector<16x48xf32>
    %c0_3 = arith.constant 0 : index
    %c0_4 = arith.constant 0 : index
    %4 = vector.load %arg3[%c0_3, %c0_4] : memref<1x48xf32, #tpu.memory_space<vmem>>, vector<1x48xf32>
    %5 = vector.broadcast %4 : vector<1x48xf32> to vector<16x48xf32>
    %6 = arith.addf %3, %5 : vector<16x48xf32>
    %c0_5 = arith.constant 0 : index
    %c0_6 = arith.constant 0 : index
    %7 = vector.load %arg4[%c0_5, %c0_6] : memref<16x48xf32, #tpu.memory_space<vmem>>, vector<16x48xf32>
    tpu.vector_store %arg4[%c0_5, %c0_6], %6 {strides = array<i32>} : memref<16x48xf32, #tpu.memory_space<vmem>>, vector<16x48xf32>,
    return
  }
  func.func @transform_0(%arg0: i32) -> (i32, i32) {
    %c0_i32 = arith.constant 0 : i32
    %c0_i32_0 = arith.constant 0 : i32
    return %arg0, %c0_i32 : i32, i32
  }
  func.func @transform_1(%arg0: i32) -> (i32, i32) {
    %c0_i32 = arith.constant 0 : i32
    %c0_i32_0 = arith.constant 0 : i32
    %c0_i32_1 = arith.constant 0 : i32
    return %c0_i32, %c0_i32_0 : i32, i32
  }
  func.func @transform_2(%arg0: i32) -> (i32, i32) {
    %c0_i32 = arith.constant 0 : i32
    %c0_i32_0 = arith.constant 0 : i32
    %c0_i32_1 = arith.constant 0 : i32
    return %c0_i32, %c0_i32_0 : i32, i32
  }
  func.func @transform_3(%arg0: i32) -> (i32, i32) {
    %c0_i32 = arith.constant 0 : i32
    %c0_i32_0 = arith.constant 0 : i32
    return %arg0, %c0_i32 : i32, i32
  }
}

module attributes {stable_mosaic.version = 11 : i64} {
  func.func @l1_loss_kernel(%arg0: i32, %arg1: memref<12x16xf32, #tpu.memory_space<vmem>>, %arg2: memref<12x16xf32, #tpu.memory_space<vmem>>, %arg3: memref<1x1xf32, #tpu.memory_space<vmem>>, %arg4: memref<1x1xf32, #tpu.memory_space<vmem>>) attributes {dimension_semantics = [#tpu.dimension_semantics<arbitrary>], iteration_bounds = array<i64: 1>, scalar_prefetch = 0 : i64, scratch_operands = 1 : i64, tpu.core_type = #tpu.core_type<tc>, window_params = [{transform_indices = @transform_0, window_bounds = array<i64: 12, 16>}, {transform_indices = @transform_1, window_bounds = array<i64: 12, 16>}, {pipeline_mode = #tpu.pipeline_mode<synchronous>, transform_indices = @transform_2, window_bounds = array<i64: 1, 1>}]} {
    %c0_i32 = arith.constant 0 : i32
    %0 = arith.cmpi eq, %arg0, %c0_i32 : i32
    %1 = arith.extui %0 : i1 to i32
    %c0_i32_0 = arith.constant 0 : i32
    %2 = arith.cmpi ne, %1, %c0_i32_0 : i32
    scf.if %2 {
      %cst_12 = arith.constant 0.000000e+00 : f32
      %26 = vector.broadcast %cst_12 : f32 to vector<1x1xf32>
      %c0_13 = arith.constant 0 : index
      %c0_14 = arith.constant 0 : index
      %27 = vector.load %arg4[%c0_13, %c0_14] : memref<1x1xf32, #tpu.memory_space<vmem>>, vector<1x1xf32>
      tpu.vector_store %arg4[%c0_13, %c0_14], %26 {strides = array<i32>} : memref<1x1xf32, #tpu.memory_space<vmem>>, vector<1x1xf32>,
    } else {
    }
    %c0 = arith.constant 0 : index
    %c0_1 = arith.constant 0 : index
    %3 = vector.load %arg2[%c0, %c0_1] : memref<12x16xf32, #tpu.memory_space<vmem>>, vector<12x16xf32>
    %c0_2 = arith.constant 0 : index
    %c0_3 = arith.constant 0 : index
    %4 = vector.load %arg1[%c0_2, %c0_3] : memref<12x16xf32, #tpu.memory_space<vmem>>, vector<12x16xf32>
    %5 = arith.subf %3, %4 : vector<12x16xf32>
    %6 = math.absf %5 : vector<12x16xf32>
    %7 = tpu.iota {dimensions = array<i32: 0>} : vector<12x16xi32>
    %c12_i32 = arith.constant 12 : i32
    %8 = arith.muli %arg0, %c12_i32 : i32
    %9 = vector.broadcast %8 : i32 to vector<12x16xi32>
    %10 = arith.addi %7, %9 : vector<12x16xi32>
    %c12_i32_4 = arith.constant 12 : i32
    %11 = vector.broadcast %c12_i32_4 : i32 to vector<12x16xi32>
    %12 = arith.cmpi slt, %10, %11 : vector<12x16xi32>
    %cst = arith.constant 0.000000e+00 : f32
    %13 = vector.broadcast %cst : f32 to vector<12x16xf32>
    %14 = arith.select %12, %6, %13 : vector<12x16xi1>, vector<12x16xf32>
    %c0_5 = arith.constant 0 : index
    %c0_6 = arith.constant 0 : index
    %15 = vector.load %arg4[%c0_5, %c0_6] : memref<1x1xf32, #tpu.memory_space<vmem>>, vector<1x1xf32>
    %16 = vector.shape_cast %14 : vector<12x16xf32> to vector<1x12x16xf32>
    %cst_7 = arith.constant dense<0.000000e+00> : vector<1xf32>
    %17 = vector.multi_reduction <add>, %16, %cst_7 [1, 2] : vector<1x12x16xf32> to vector<1xf32>
    %18 = vector.shape_cast %17 : vector<1xf32> to vector<1x1x1xf32>
    %19 = vector.extract %18[0, 0, 0] : f32 from vector<1x1x1xf32>
    %20 = vector.broadcast %19 : f32 to vector<1x1xf32>
    %21 = arith.addf %15, %20 : vector<1x1xf32>
    %c0_8 = arith.constant 0 : index
    %c0_9 = arith.constant 0 : index
    %22 = vector.load %arg4[%c0_8, %c0_9] : memref<1x1xf32, #tpu.memory_space<vmem>>, vector<1x1xf32>
    tpu.vector_store %arg4[%c0_8, %c0_9], %21 {strides = array<i32>} : memref<1x1xf32, #tpu.memory_space<vmem>>, vector<1x1xf32>,
    %c0_i32_10 = arith.constant 0 : i32
    %23 = arith.cmpi eq, %arg0, %c0_i32_10 : i32
    %24 = arith.extui %23 : i1 to i32
    %c0_i32_11 = arith.constant 0 : i32
    %25 = arith.cmpi ne, %24, %c0_i32_11 : i32
    scf.if %25 {
      %c0_12 = arith.constant 0 : index
      %c0_13 = arith.constant 0 : index
      %26 = vector.load %arg4[%c0_12, %c0_13] : memref<1x1xf32, #tpu.memory_space<vmem>>, vector<1x1xf32>
      %cst_14 = arith.constant 0.0833333358 : f32
      %27 = vector.broadcast %cst_14 : f32 to vector<1x1xf32>
      %28 = arith.mulf %26, %27 : vector<1x1xf32>
      %c0_15 = arith.constant 0 : index
      %c0_16 = arith.constant 0 : index
      %29 = vector.load %arg3[%c0_15, %c0_16] : memref<1x1xf32, #tpu.memory_space<vmem>>, vector<1x1xf32>
      tpu.vector_store %arg3[%c0_15, %c0_16], %28 {strides = array<i32>} : memref<1x1xf32, #tpu.memory_space<vmem>>, vector<1x1xf32>,
    } else {
    }
    return
  }
  func.func @transform_0(%arg0: i32) -> (i32, i32) {
    %c0_i32 = arith.constant 0 : i32
    %c0_i32_0 = arith.constant 0 : i32
    return %arg0, %c0_i32 : i32, i32
  }
  func.func @transform_1(%arg0: i32) -> (i32, i32) {
    %c0_i32 = arith.constant 0 : i32
    %c0_i32_0 = arith.constant 0 : i32
    return %arg0, %c0_i32 : i32, i32
  }
  func.func @transform_2(%arg0: i32) -> (i32, i32) {
    %c0_i32 = arith.constant 0 : i32
    %c0_i32_0 = arith.constant 0 : i32
    %c0_i32_1 = arith.constant 0 : i32
    return %c0_i32, %c0_i32_0 : i32, i32
  }
}

module attributes {stable_mosaic.version = 11 : i64} {
  func.func @l1_loss_kernel(%arg0: i32, %arg1: memref<10x16xf32, #tpu.memory_space<vmem>>, %arg2: memref<10x16xf32, #tpu.memory_space<vmem>>, %arg3: memref<1x1xf32, #tpu.memory_space<vmem>>, %arg4: memref<1x1xf32, #tpu.memory_space<vmem>>) attributes {dimension_semantics = [#tpu.dimension_semantics<arbitrary>], iteration_bounds = array<i64: 1>, scalar_prefetch = 0 : i64, scratch_operands = 1 : i64, tpu.core_type = #tpu.core_type<tc>, window_params = [{transform_indices = @transform_0, window_bounds = array<i64: 10, 16>}, {transform_indices = @transform_1, window_bounds = array<i64: 10, 16>}, {pipeline_mode = #tpu.pipeline_mode<synchronous>, transform_indices = @transform_2, window_bounds = array<i64: 1, 1>}]} {
    %c0_i32 = arith.constant 0 : i32
    %0 = arith.cmpi eq, %arg0, %c0_i32 : i32
    %1 = arith.extui %0 : i1 to i32
    %c0_i32_0 = arith.constant 0 : i32
    %2 = arith.cmpi ne, %1, %c0_i32_0 : i32
    scf.if %2 {
      %cst_12 = arith.constant 0.000000e+00 : f32
      %26 = vector.broadcast %cst_12 : f32 to vector<1x1xf32>
      %c0_13 = arith.constant 0 : index
      %c0_14 = arith.constant 0 : index
      %27 = vector.load %arg4[%c0_13, %c0_14] : memref<1x1xf32, #tpu.memory_space<vmem>>, vector<1x1xf32>
      tpu.vector_store %arg4[%c0_13, %c0_14], %26 {strides = array<i32>} : memref<1x1xf32, #tpu.memory_space<vmem>>, vector<1x1xf32>,
    } else {
    }
    %c0 = arith.constant 0 : index
    %c0_1 = arith.constant 0 : index
    %3 = vector.load %arg2[%c0, %c0_1] : memref<10x16xf32, #tpu.memory_space<vmem>>, vector<10x16xf32>
    %c0_2 = arith.constant 0 : index
    %c0_3 = arith.constant 0 : index
    %4 = vector.load %arg1[%c0_2, %c0_3] : memref<10x16xf32, #tpu.memory_space<vmem>>, vector<10x16xf32>
    %5 = arith.subf %3, %4 : vector<10x16xf32>
    %6 = math.absf %5 : vector<10x16xf32>
    %7 = tpu.iota {dimensions = array<i32: 0>} : vector<10x16xi32>
    %c10_i32 = arith.constant 10 : i32
    %8 = arith.muli %arg0, %c10_i32 : i32
    %9 = vector.broadcast %8 : i32 to vector<10x16xi32>
    %10 = arith.addi %7, %9 : vector<10x16xi32>
    %c10_i32_4 = arith.constant 10 : i32
    %11 = vector.broadcast %c10_i32_4 : i32 to vector<10x16xi32>
    %12 = arith.cmpi slt, %10, %11 : vector<10x16xi32>
    %cst = arith.constant 0.000000e+00 : f32
    %13 = vector.broadcast %cst : f32 to vector<10x16xf32>
    %14 = arith.select %12, %6, %13 : vector<10x16xi1>, vector<10x16xf32>
    %c0_5 = arith.constant 0 : index
    %c0_6 = arith.constant 0 : index
    %15 = vector.load %arg4[%c0_5, %c0_6] : memref<1x1xf32, #tpu.memory_space<vmem>>, vector<1x1xf32>
    %16 = vector.shape_cast %14 : vector<10x16xf32> to vector<1x10x16xf32>
    %cst_7 = arith.constant dense<0.000000e+00> : vector<1xf32>
    %17 = vector.multi_reduction <add>, %16, %cst_7 [1, 2] : vector<1x10x16xf32> to vector<1xf32>
    %18 = vector.shape_cast %17 : vector<1xf32> to vector<1x1x1xf32>
    %19 = vector.extract %18[0, 0, 0] : f32 from vector<1x1x1xf32>
    %20 = vector.broadcast %19 : f32 to vector<1x1xf32>
    %21 = arith.addf %15, %20 : vector<1x1xf32>
    %c0_8 = arith.constant 0 : index
    %c0_9 = arith.constant 0 : index
    %22 = vector.load %arg4[%c0_8, %c0_9] : memref<1x1xf32, #tpu.memory_space<vmem>>, vector<1x1xf32>
    tpu.vector_store %arg4[%c0_8, %c0_9], %21 {strides = array<i32>} : memref<1x1xf32, #tpu.memory_space<vmem>>, vector<1x1xf32>,
    %c0_i32_10 = arith.constant 0 : i32
    %23 = arith.cmpi eq, %arg0, %c0_i32_10 : i32
    %24 = arith.extui %23 : i1 to i32
    %c0_i32_11 = arith.constant 0 : i32
    %25 = arith.cmpi ne, %24, %c0_i32_11 : i32
    scf.if %25 {
      %c0_12 = arith.constant 0 : index
      %c0_13 = arith.constant 0 : index
      %26 = vector.load %arg4[%c0_12, %c0_13] : memref<1x1xf32, #tpu.memory_space<vmem>>, vector<1x1xf32>
      %cst_14 = arith.constant 1.000000e-01 : f32
      %27 = vector.broadcast %cst_14 : f32 to vector<1x1xf32>
      %28 = arith.mulf %26, %27 : vector<1x1xf32>
      %c0_15 = arith.constant 0 : index
      %c0_16 = arith.constant 0 : index
      %29 = vector.load %arg3[%c0_15, %c0_16] : memref<1x1xf32, #tpu.memory_space<vmem>>, vector<1x1xf32>
      tpu.vector_store %arg3[%c0_15, %c0_16], %28 {strides = array<i32>} : memref<1x1xf32, #tpu.memory_space<vmem>>, vector<1x1xf32>,
    } else {
    }
    return
  }
  func.func @transform_0(%arg0: i32) -> (i32, i32) {
    %c0_i32 = arith.constant 0 : i32
    %c0_i32_0 = arith.constant 0 : i32
    return %arg0, %c0_i32 : i32, i32
  }
  func.func @transform_1(%arg0: i32) -> (i32, i32) {
    %c0_i32 = arith.constant 0 : i32
    %c0_i32_0 = arith.constant 0 : i32
    return %arg0, %c0_i32 : i32, i32
  }
  func.func @transform_2(%arg0: i32) -> (i32, i32) {
    %c0_i32 = arith.constant 0 : i32
    %c0_i32_0 = arith.constant 0 : i32
    %c0_i32_1 = arith.constant 0 : i32
    return %c0_i32, %c0_i32_0 : i32, i32
  }
}

module attributes {stable_mosaic.version = 11 : i64} {
  func.func @l1_loss_kernel(%arg0: i32, %arg1: memref<14x16xf32, #tpu.memory_space<vmem>>, %arg2: memref<14x16xf32, #tpu.memory_space<vmem>>, %arg3: memref<1x1xf32, #tpu.memory_space<vmem>>, %arg4: memref<1x1xf32, #tpu.memory_space<vmem>>) attributes {dimension_semantics = [#tpu.dimension_semantics<arbitrary>], iteration_bounds = array<i64: 1>, scalar_prefetch = 0 : i64, scratch_operands = 1 : i64, tpu.core_type = #tpu.core_type<tc>, window_params = [{transform_indices = @transform_0, window_bounds = array<i64: 14, 16>}, {transform_indices = @transform_1, window_bounds = array<i64: 14, 16>}, {pipeline_mode = #tpu.pipeline_mode<synchronous>, transform_indices = @transform_2, window_bounds = array<i64: 1, 1>}]} {
    %c0_i32 = arith.constant 0 : i32
    %0 = arith.cmpi eq, %arg0, %c0_i32 : i32
    %1 = arith.extui %0 : i1 to i32
    %c0_i32_0 = arith.constant 0 : i32
    %2 = arith.cmpi ne, %1, %c0_i32_0 : i32
    scf.if %2 {
      %cst_12 = arith.constant 0.000000e+00 : f32
      %26 = vector.broadcast %cst_12 : f32 to vector<1x1xf32>
      %c0_13 = arith.constant 0 : index
      %c0_14 = arith.constant 0 : index
      %27 = vector.load %arg4[%c0_13, %c0_14] : memref<1x1xf32, #tpu.memory_space<vmem>>, vector<1x1xf32>
      tpu.vector_store %arg4[%c0_13, %c0_14], %26 {strides = array<i32>} : memref<1x1xf32, #tpu.memory_space<vmem>>, vector<1x1xf32>,
    } else {
    }
    %c0 = arith.constant 0 : index
    %c0_1 = arith.constant 0 : index
    %3 = vector.load %arg2[%c0, %c0_1] : memref<14x16xf32, #tpu.memory_space<vmem>>, vector<14x16xf32>
    %c0_2 = arith.constant 0 : index
    %c0_3 = arith.constant 0 : index
    %4 = vector.load %arg1[%c0_2, %c0_3] : memref<14x16xf32, #tpu.memory_space<vmem>>, vector<14x16xf32>
    %5 = arith.subf %3, %4 : vector<14x16xf32>
    %6 = math.absf %5 : vector<14x16xf32>
    %7 = tpu.iota {dimensions = array<i32: 0>} : vector<14x16xi32>
    %c14_i32 = arith.constant 14 : i32
    %8 = arith.muli %arg0, %c14_i32 : i32
    %9 = vector.broadcast %8 : i32 to vector<14x16xi32>
    %10 = arith.addi %7, %9 : vector<14x16xi32>
    %c14_i32_4 = arith.constant 14 : i32
    %11 = vector.broadcast %c14_i32_4 : i32 to vector<14x16xi32>
    %12 = arith.cmpi slt, %10, %11 : vector<14x16xi32>
    %cst = arith.constant 0.000000e+00 : f32
    %13 = vector.broadcast %cst : f32 to vector<14x16xf32>
    %14 = arith.select %12, %6, %13 : vector<14x16xi1>, vector<14x16xf32>
    %c0_5 = arith.constant 0 : index
    %c0_6 = arith.constant 0 : index
    %15 = vector.load %arg4[%c0_5, %c0_6] : memref<1x1xf32, #tpu.memory_space<vmem>>, vector<1x1xf32>
    %16 = vector.shape_cast %14 : vector<14x16xf32> to vector<1x14x16xf32>
    %cst_7 = arith.constant dense<0.000000e+00> : vector<1xf32>
    %17 = vector.multi_reduction <add>, %16, %cst_7 [1, 2] : vector<1x14x16xf32> to vector<1xf32>
    %18 = vector.shape_cast %17 : vector<1xf32> to vector<1x1x1xf32>
    %19 = vector.extract %18[0, 0, 0] : f32 from vector<1x1x1xf32>
    %20 = vector.broadcast %19 : f32 to vector<1x1xf32>
    %21 = arith.addf %15, %20 : vector<1x1xf32>
    %c0_8 = arith.constant 0 : index
    %c0_9 = arith.constant 0 : index
    %22 = vector.load %arg4[%c0_8, %c0_9] : memref<1x1xf32, #tpu.memory_space<vmem>>, vector<1x1xf32>
    tpu.vector_store %arg4[%c0_8, %c0_9], %21 {strides = array<i32>} : memref<1x1xf32, #tpu.memory_space<vmem>>, vector<1x1xf32>,
    %c0_i32_10 = arith.constant 0 : i32
    %23 = arith.cmpi eq, %arg0, %c0_i32_10 : i32
    %24 = arith.extui %23 : i1 to i32
    %c0_i32_11 = arith.constant 0 : i32
    %25 = arith.cmpi ne, %24, %c0_i32_11 : i32
    scf.if %25 {
      %c0_12 = arith.constant 0 : index
      %c0_13 = arith.constant 0 : index
      %26 = vector.load %arg4[%c0_12, %c0_13] : memref<1x1xf32, #tpu.memory_space<vmem>>, vector<1x1xf32>
      %cst_14 = arith.constant 0.0714285746 : f32
      %27 = vector.broadcast %cst_14 : f32 to vector<1x1xf32>
      %28 = arith.mulf %26, %27 : vector<1x1xf32>
      %c0_15 = arith.constant 0 : index
      %c0_16 = arith.constant 0 : index
      %29 = vector.load %arg3[%c0_15, %c0_16] : memref<1x1xf32, #tpu.memory_space<vmem>>, vector<1x1xf32>
      tpu.vector_store %arg3[%c0_15, %c0_16], %28 {strides = array<i32>} : memref<1x1xf32, #tpu.memory_space<vmem>>, vector<1x1xf32>,
    } else {
    }
    return
  }
  func.func @transform_0(%arg0: i32) -> (i32, i32) {
    %c0_i32 = arith.constant 0 : i32
    %c0_i32_0 = arith.constant 0 : i32
    return %arg0, %c0_i32 : i32, i32
  }
  func.func @transform_1(%arg0: i32) -> (i32, i32) {
    %c0_i32 = arith.constant 0 : i32
    %c0_i32_0 = arith.constant 0 : i32
    return %arg0, %c0_i32 : i32, i32
  }
  func.func @transform_2(%arg0: i32) -> (i32, i32) {
    %c0_i32 = arith.constant 0 : i32
    %c0_i32_0 = arith.constant 0 : i32
    %c0_i32_1 = arith.constant 0 : i32
    return %c0_i32, %c0_i32_0 : i32, i32
  }
}

</mosaic_0001>

<llo_original>
// kernel: apc_forward.11
$region0: #{apc_forward.11}
  #allocation0 [shape = 'u32[]', space=smem, size = 0x4, offset = 0x4, fixed_abs, tag = 'smem constant byte address 0x4 - core index']
  #allocation1 [shape = 'u32[72,128]{1,0:T(1,128)}', space=vmem, size = 0x9000, scoped, tag = 'internal scratch']
  %s0 = inlined_call_operand.vmem [shape: f32[16,16], index: 0, kind: input, shape index: {}]
  %s1 = inlined_call_operand.hbm [shape: bf16[16,128], index: 1, kind: input, shape index: {}]
  %s2 = inlined_call_operand.vmem [shape: f32[1,128], index: 2, kind: input, shape index: {}]
  %s3 = inlined_call_operand.vmem [shape: f32[16,128], index: 3, kind: output, shape index: {}]
  %s4 = sld [smem:[#allocation0]]
  $region26: #{apc_forward.11} parent=0
    _
  %s6 = ssub.s32 1, %s4
  %s7 = scalar_select 0, %s6, %s4
  $region1: #{apc_forward.11} parent=0
    #allocation2 [shape = 'u8[4096]{0}', space=vmem, size = 0x1000, scoped, tag = 'input window, operand 1, single buffered']
    #allocation3 [shape = 's32[1]{0}', space=sflag, size = 0x4, scoped, tag = 'scoped memory for apc_forward.11']
    %8 = vsyncpa [#allocation3], 0
    // Predicated region
    $region2: #{apc_forward.11} parent=1 // pred_check
      _
    $region3: #{apc_forward.11} parent=1 // pred_check_branch
      %10 = sbr.rel (0) target = $region5
    $region4: #{apc_forward.11} parent=1 // pred_region
      _
    $region5: #{apc_forward.11} parent=1 // pred_fallthru
      _
    // Predicated region
    $region6: #{apc_forward.11} parent=1 // pred_check
      _
    $region7: #{apc_forward.11} parent=1 // pred_check_branch
      %12 = sbr.rel (0) target = $region9
    $region8: #{apc_forward.11} parent=1 // pred_region
      %14 = vsyncadd [#allocation3], 0
      %s15 = sshll.u32 %s1, 4
      %s16 = int_to_ptr.hbm [resolvable:$true] %s15
      %s17 = sshll.u32 [#allocation2], 4
      %s18 = int_to_ptr.vmem [resolvable:$true] %s17
      %23 = dma.hbm_to_vmem [thread:$0]  %s16, 128, %s18, [#allocation3], 64, 64, 4
    $region9: #{apc_forward.11} parent=1 // pred_fallthru
      _
    // Predicated region
    $region10: #{apc_forward.11} parent=1 // pred_check
      _
    $region11: #{apc_forward.11} parent=1 // pred_check_branch
      %25 = sbr.rel (0) target = $region13
    $region12: #{apc_forward.11} parent=1 // pred_region
      _
    $region13: #{apc_forward.11} parent=1 // pred_fallthru
      _
    // Predicated region
    $region14: #{apc_forward.11} parent=1 // pred_check
      _
    $region15: #{apc_forward.11} parent=1 // pred_check_branch
      %27 = sbr.rel (0) target = $region17
    $region16: #{apc_forward.11} parent=1 // pred_region
      %29 = dma.done [#allocation3], 128
    $region17: #{apc_forward.11} parent=1 // pred_fallthru
      _
    %v31 = vld [vmem:[%s0] sm:$0xff]
    %v32 = vld [vmem:[%s0 + $0x8] sm:$0xff]
    %v33 = vpack.c.bf16 %v32, %v31
    %v34 = vld [vmem:[#allocation2] sm:$0xf]
    %v35 = vld [vmem:[#allocation2 + $0x4] sm:$0xf]
    %v36 = vld [vmem:[%s2] sm:$0x1]
    %v38 = vperm.slane %v36, 0
    %v42 = vunpack.c.l.b16 %v34
    %v43 = vunpack.c.l.b16 %v35
    %v44 = vpack.c.b16 %v43, %v42
    %vm46 = vcmask 130048
    %v48 = vsel %vm46, %v33, 0
    %50 = vmatpush.bf16.msra.mxu0 0
    %51 = vmatpush.bf16.msra.mxu0 0
    %52 = vmatpush.bf16.msra.mxu0 0
    %53 = vmatpush.bf16.msra.mxu0 0
    %54 = vmatpush.bf16.msra.mxu0 0
    %55 = vmatpush.bf16.msra.mxu0 0
    %56 = vmatpush.bf16.msra.mxu0 0
    %57 = vmatpush.bf16.msra.mxu0 %v44
    %58 = vmatmul.bf16.gmra.mxu0 %v48
    %v59 = vpop.f32.mrf.mxu0
    %v60 = vadd.f32 %v38, %v59
    %v61 = vpop.f32.mrf.mxu0
    %v62 = vadd.f32 %v38, %v61
    %63 = vdwg.mxu0
    %64 = vst [vmem:[%s3] sm:$0xff] %v60
    %65 = vst [vmem:[%s3 + $0x8] sm:$0xff] %v62
    // Predicated region
    $region18: #{apc_forward.11} parent=1 // pred_check
      _
    $region19: #{apc_forward.11} parent=1 // pred_check_branch
      %67 = sbr.rel (0) target = $region21
    $region20: #{apc_forward.11} parent=1 // pred_region
      _
    $region21: #{apc_forward.11} parent=1 // pred_fallthru
      _
    // Predicated region
    $region22: #{apc_forward.11} parent=1 // pred_check
      _
    $region23: #{apc_forward.11} parent=1 // pred_check_branch
      %69 = sbr.rel (0) target = $region25
    $region24: #{apc_forward.11} parent=1 // pred_region
      _
    $region25: #{apc_forward.11} parent=1 // pred_fallthru
      _
    %70 = vsyncpa [#allocation3], 1

// kernel: apc_forward.10
$region0: #{apc_forward.10}
  #allocation0 [shape = 'u32[]', space=smem, size = 0x4, offset = 0x4, fixed_abs, tag = 'smem constant byte address 0x4 - core index']
  #allocation1 [shape = 'u32[72,128]{1,0:T(1,128)}', space=vmem, size = 0x9000, scoped, tag = 'internal scratch']
  %s0 = inlined_call_operand.hbm [shape: f32[16,16], index: 0, kind: input, shape index: {}]
  %s1 = inlined_call_operand.vmem [shape: f32[16,16], index: 1, kind: output, shape index: {}]
  %s2 = sld [smem:[#allocation0]]
  $region18: #{apc_forward.10} parent=0
    _
  %s4 = ssub.s32 1, %s2
  %s5 = scalar_select 0, %s4, %s2
  $region1: #{apc_forward.10} parent=0
    #allocation2 [shape = 'u8[8192]{0}', space=vmem, size = 0x2000, scoped, tag = 'input window, operand 0, single buffered']
    #allocation3 [shape = 's32[1]{0}', space=sflag, size = 0x4, scoped, tag = 'scoped memory for apc_forward.10']
    %6 = vsyncpa [#allocation3], 0
    // Predicated region
    $region2: #{apc_forward.10} parent=1 // pred_check
      _
    $region3: #{apc_forward.10} parent=1 // pred_check_branch
      %8 = sbr.rel (0) target = $region5
    $region4: #{apc_forward.10} parent=1 // pred_region
      %10 = vsyncadd [#allocation3], 0
      %s11 = sshll.u32 %s0, 4
      %s12 = int_to_ptr.hbm [resolvable:$true] %s11
      %s13 = sshll.u32 [#allocation2], 4
      %s14 = int_to_ptr.vmem [resolvable:$true] %s13
      %19 = dma.hbm_to_vmem [thread:$0]  %s12, 256, %s14, [#allocation3], 128, 128, 8
    $region5: #{apc_forward.10} parent=1 // pred_fallthru
      _
    // Predicated region
    $region6: #{apc_forward.10} parent=1 // pred_check
      _
    $region7: #{apc_forward.10} parent=1 // pred_check_branch
      %21 = sbr.rel (0) target = $region9
    $region8: #{apc_forward.10} parent=1 // pred_region
      %23 = dma.done [#allocation3], 256
    $region9: #{apc_forward.10} parent=1 // pred_fallthru
      _
    %v24 = vld [vmem:[#allocation2] sm:$0xff]
    %v25 = vld [vmem:[#allocation2 + $0x8] sm:$0xff]
    %vm26 = vcmask 130048
    %v27 = vsel %vm26, %v24, 0.0
    %28 = vadd.xlane.f32.xlu0 %v27
    %v29 = vpop.xlane.xlu0 %28
    %v30 = vsel %vm26, %v25, 0.0
    %31 = vadd.xlane.f32.xlu0 %v30
    %v32 = vpop.xlane.xlu0 %31
    %v33 = vrcp.pop 16.0
    %v34 = vmul.f32 16.0, %v33
    %v35 = vsub.f32 1.0, %v34
    %v36 = vmul.f32 %v33, %v35
    %v37 = vadd.f32 %v33, %v36
    %vm38 = vweird.f32 %v33
    %v39 = vsel %vm38, %v33, %v37
    %v40 = vmul.f32 %v29, %v39
    %v41 = vmul.f32 %v32, %v39
    %v42 = vsub.f32 %v24, %v40
    %v43 = vsub.f32 %v25, %v41
    %v44 = vmul.f32 %v42, %v42
    %v45 = vmul.f32 %v43, %v43
    %v46 = vsel %vm26, %v44, 0.0
    %47 = vadd.xlane.f32.xlu0 %v46
    %v48 = vpop.xlane.xlu0 %47
    %v49 = vsel %vm26, %v45, 0.0
    %50 = vadd.xlane.f32.xlu0 %v49
    %v51 = vpop.xlane.xlu0 %50
    %v52 = vmul.f32 %v48, %v39
    %v53 = vmul.f32 %v51, %v39
    %v54 = vadd.f32 %v52, 1e-05
    %v55 = vadd.f32 %v53, 1e-05
    %v56 = vrsqrt.pop %v54
    %v57 = vmul.f32 %v56, %v54
    %v58 = vmul.f32 %v57, %v56
    %v59 = vmul.f32 0.5, %v58
    %v60 = vsub.f32 1.5, %v59
    %v61 = vmul.f32 %v56, %v60
    %vm62 = vweird.f32 %v54
    %vm63 = vweird.f32 %v56
    %vm64 = vmor %vm62, %vm63
    %v65 = vsel %vm64, %v56, %v61
    %v66 = vrsqrt.pop %v55
    %v67 = vmul.f32 %v66, %v55
    %v68 = vmul.f32 %v67, %v66
    %v69 = vmul.f32 0.5, %v68
    %v70 = vsub.f32 1.5, %v69
    %v71 = vmul.f32 %v66, %v70
    %vm72 = vweird.f32 %v55
    %vm73 = vweird.f32 %v66
    %vm74 = vmor %vm72, %vm73
    %v75 = vsel %vm74, %v66, %v71
    %v76 = vmul.f32 %v42, %v65
    %v77 = vmul.f32 %v43, %v75
    %78 = vst.msk [vmem:[%s1] sm:$0xff] %vm26, %v76
    %79 = vst.msk [vmem:[%s1 + $0x8] sm:$0xff] %vm26, %v77
    // Predicated region
    $region10: #{apc_forward.10} parent=1 // pred_check
      _
    $region11: #{apc_forward.10} parent=1 // pred_check_branch
      %81 = sbr.rel (0) target = $region13
    $region12: #{apc_forward.10} parent=1 // pred_region
      _
    $region13: #{apc_forward.10} parent=1 // pred_fallthru
      _
    // Predicated region
    $region14: #{apc_forward.10} parent=1 // pred_check
      _
    $region15: #{apc_forward.10} parent=1 // pred_check_branch
      %83 = sbr.rel (0) target = $region17
    $region16: #{apc_forward.10} parent=1 // pred_region
      _
    $region17: #{apc_forward.10} parent=1 // pred_fallthru
      _
    %84 = vsyncpa [#allocation3], 1

// kernel: apc_forward.12
$region0: #{apc_forward.12}
  #allocation0 [shape = 'u32[]', space=smem, size = 0x4, offset = 0x4, fixed_abs, tag = 'smem constant byte address 0x4 - core index']
  #allocation1 [shape = 'u32[72,128]{1,0:T(1,128)}', space=vmem, size = 0x9000, scoped, tag = 'internal scratch']
  #allocation2 [shape = 'f32[2,32]{1,0:T(2,128)}', space=vmem, size = 0x400, scoped, tag = 'scratch operand']
  #allocation3 [shape = 'f32[2,32]{1,0:T(2,128)}', space=vmem, size = 0x400, scoped, tag = 'scratch operand']
  %s0 = inlined_call_operand.vmem [shape: f32[8,2,128], index: 0, kind: input, shape index: {}]
  %s1 = inlined_call_operand.vmem [shape: f32[32,128], index: 1, kind: input, shape index: {}]
  %s2 = inlined_call_operand.vmem [shape: f32[8,2,32], index: 2, kind: output, shape index: {}]
  %s3 = sld [smem:[#allocation0]]
  $region22: #{apc_forward.12} parent=0
    _
  %s5 = ssub.s32 1, %s3
  %s6 = scalar_select 0, %s5, %s3
  // Predicated region
  $region2: #{apc_forward.12} parent=0 // pred_check
    _
  $region3: #{apc_forward.12} parent=0 // pred_check_branch
    %8 = sbr.rel (0) target = $region5
  $region4: #{apc_forward.12} parent=0 // pred_region
    _
  $region5: #{apc_forward.12} parent=0 // pred_fallthru
    _
  // Predicated region
  $region6: #{apc_forward.12} parent=0 // pred_check
    _
  $region7: #{apc_forward.12} parent=0 // pred_check_branch
    %10 = sbr.rel (0) target = $region9
  $region8: #{apc_forward.12} parent=0 // pred_region
    _
  $region9: #{apc_forward.12} parent=0 // pred_fallthru
    _
  %p11 = scmp.eq.s32.totalorder 0, 0
  // Predicated region
  $region10: #{apc_forward.12} parent=0 // pred_check
    %p12 = pneg %p11
  $region11: #{apc_forward.12} parent=0 // pred_check_branch
    %14 = sbr.rel (%p12) target = $region13
  $region12: #{apc_forward.12} parent=0 // pred_region
    %vm15 = vcmask 254976
    %16 = vst.msk [vmem:[#allocation2] sm:$0x3] %vm15, 0.0
    %17 = vst.msk [vmem:[#allocation3] sm:$0x3] %vm15, 0.0
  $region13: #{apc_forward.12} parent=0 // pred_fallthru
    _
  %v18 = vld [vmem:[%s1] sm:$0xff]
  %v19 = vld [vmem:[%s1 + $0x8] sm:$0xff]
  %v20 = vld [vmem:[%s1 + $0x10] sm:$0xff]
  %v21 = vld [vmem:[%s1 + $0x18] sm:$0xff]
  %v22 = vld [vmem:[#allocation2] sm:$0x3]
  %v23 = vld [vmem:[#allocation3] sm:$0x3]
  %v24 = vld [vmem:[%s0] sm:$0x3]
  %vm25 = vcmask 261120
  %v27 = vsel %vm25, %v22, 0
  %29 = vmatpush.msra.mxu0 0.0
  %30 = vmatpush.msra.mxu0 0.0
  %31 = vmatpush.msra.mxu0 0.0
  %32 = vmatpush.msra.mxu0 0.0
  %33 = vmatpush.msra.mxu0 0.0
  %34 = vmatpush.msra.mxu0 0.0
  %35 = vmatpush.msra.mxu0 0.0
  %36 = vmatpush.msra.mxu0 0.0
  %37 = vmatpush.msra.mxu0 0.0
  %38 = vmatpush.msra.mxu0 0.0
  %39 = vmatpush.msra.mxu0 0.0
  %40 = vmatpush.msra.mxu0 0.0
  %41 = vmatpush.msra.mxu0 %v21
  %42 = vmatpush.msra.mxu0 %v20
  %43 = vmatpush.msra.mxu0 %v19
  %44 = vmatpush.msra.mxu0 %v18
  %45 = vmatmul.f32.gmra.mxu0 %v27
  %v46 = vpop.f32.mrf.mxu0
  %v47 = vadd.f32 0.0, %v46
  %48 = vdwg.mxu0
  %v49 = vadd.f32 %v24, %v47
  %v50 = vxor.u32 %v49, 2147483648
  %v51 = vmul.f32 %v50, 1.442695
  %v52 = vpow.pop %v51
  %v53 = vadd.f32 %v52, 1.0
  %v54 = vrcp.pop %v53
  %v55 = vmul.f32 %v53, %v54
  %v56 = vsub.f32 1.0, %v55
  %v57 = vmul.f32 %v54, %v56
  %v58 = vadd.f32 %v54, %v57
  %vm59 = vweird.f32 %v53
  %vm60 = vweird.f32 %v54
  %vm61 = vmor %vm59, %vm60
  %v62 = vsel %vm61, %v54, %v58
  %v63 = vand.u32 2147483647, %v53
  %vm64 = vcmp.eq.f32.partialorder %v63, 8.507059e+37
  %v65 = vand.u32 %v53, 2147483648
  %v66 = vor.u32 1.1754944e-38, %v65
  %v67 = vsel %vm64, %v66, %v62
  %v68 = vmul.f32 1.0, %v67
  %v69 = vtanh.pop %v49
  %71 = vrot.lane.b32.xlu0 %v23, 32
  %v72 = vpop.permute.xlu0 %71
  %v74 = vmul.f32 %v68, %v72
  %76 = vrot.lane.b32.xlu0 %v69, 64
  %v77 = vpop.permute.xlu0 %76
  %v79 = vmul.f32 %v68, %v77
  %81 = vrot.lane.b32.xlu0 %v79, 32
  %v82 = vpop.permute.xlu0 %81
  %v84 = vadd.f32 %v74, %v82
  %v85 = vtanh.pop %v84
  %87 = vrot.lane.b32.xlu0 %v85, 64
  %v88 = vpop.permute.xlu0 %87
  %v90 = vmul.f32 %v68, %v88
  %92 = vrot.lane.b32.xlu0 %v90, 32
  %v93 = vpop.permute.xlu0 %92
  %vm95 = vcmask 254976
  %96 = vst.msk [vmem:[%s2] sm:$0x3] %vm95, %v93
  %s97 = scalar_lea.vmem %s0, 2
  %v98 = vld [vmem:[%s97] sm:$0x3]
  %v99 = vsel %vm25, %v93, 0
  %101 = vmatpush.msra.mxu0 0.0
  %102 = vmatpush.msra.mxu0 0.0
  %103 = vmatpush.msra.mxu0 0.0
  %104 = vmatpush.msra.mxu0 0.0
  %105 = vmatpush.msra.mxu0 0.0
  %106 = vmatpush.msra.mxu0 0.0
  %107 = vmatpush.msra.mxu0 0.0
  %108 = vmatpush.msra.mxu0 0.0
  %109 = vmatpush.msra.mxu0 0.0
  %110 = vmatpush.msra.mxu0 0.0
  %111 = vmatpush.msra.mxu0 0.0
  %112 = vmatpush.msra.mxu0 0.0
  %113 = vmatpush.msra.mxu0 %v21
  %114 = vmatpush.msra.mxu0 %v20
  %115 = vmatpush.msra.mxu0 %v19
  %116 = vmatpush.msra.mxu0 %v18
  %117 = vmatmul.f32.gmra.mxu0 %v99
  %v118 = vpop.f32.mrf.mxu0
  %v119 = vadd.f32 0.0, %v118
  %120 = vdwg.mxu0
  %v121 = vadd.f32 %v98, %v119
  %v122 = vxor.u32 %v121, 2147483648
  %v123 = vmul.f32 %v122, 1.442695
  %v124 = vpow.pop %v123
  %v125 = vadd.f32 %v124, 1.0
  %v126 = vrcp.pop %v125
  %v127 = vmul.f32 %v125, %v126
  %v128 = vsub.f32 1.0, %v127
  %v129 = vmul.f32 %v126, %v128
  %v130 = vadd.f32 %v126, %v129
  %vm131 = vweird.f32 %v125
  %vm132 = vweird.f32 %v126
  %vm133 = vmor %vm131, %vm132
  %v134 = vsel %vm133, %v126, %v130
  %v135 = vand.u32 2147483647, %v125
  %vm136 = vcmp.eq.f32.partialorder %v135, 8.507059e+37
  %v137 = vand.u32 %v125, 2147483648
  %v138 = vor.u32 1.1754944e-38, %v137
  %v139 = vsel %vm136, %v138, %v134
  %v140 = vmul.f32 1.0, %v139
  %v141 = vtanh.pop %v121
  %v142 = vmul.f32 %v140, %v84
  %144 = vrot.lane.b32.xlu0 %v141, 64
  %v145 = vpop.permute.xlu0 %144
  %v147 = vmul.f32 %v140, %v145
  %149 = vrot.lane.b32.xlu0 %v147, 32
  %v150 = vpop.permute.xlu0 %149
  %v152 = vadd.f32 %v142, %v150
  %v153 = vtanh.pop %v152
  %155 = vrot.lane.b32.xlu0 %v153, 64
  %v156 = vpop.permute.xlu0 %155
  %v158 = vmul.f32 %v140, %v156
  %160 = vrot.lane.b32.xlu0 %v158, 32
  %v161 = vpop.permute.xlu0 %160
  %s163 = scalar_lea.vmem %s2, 2
  %164 = vst.msk [vmem:[%s163] sm:$0x3] %vm95, %v161
  %s165 = scalar_lea.vmem %s0, 4
  %v166 = vld [vmem:[%s165] sm:$0x3]
  %v167 = vsel %vm25, %v161, 0
  %169 = vmatpush.msra.mxu0 0.0
  %170 = vmatpush.msra.mxu0 0.0
  %171 = vmatpush.msra.mxu0 0.0
  %172 = vmatpush.msra.mxu0 0.0
  %173 = vmatpush.msra.mxu0 0.0
  %174 = vmatpush.msra.mxu0 0.0
  %175 = vmatpush.msra.mxu0 0.0
  %176 = vmatpush.msra.mxu0 0.0
  %177 = vmatpush.msra.mxu0 0.0
  %178 = vmatpush.msra.mxu0 0.0
  %179 = vmatpush.msra.mxu0 0.0
  %180 = vmatpush.msra.mxu0 0.0
  %181 = vmatpush.msra.mxu0 %v21
  %182 = vmatpush.msra.mxu0 %v20
  %183 = vmatpush.msra.mxu0 %v19
  %184 = vmatpush.msra.mxu0 %v18
  %185 = vmatmul.f32.gmra.mxu0 %v167
  %v186 = vpop.f32.mrf.mxu0
  %v187 = vadd.f32 0.0, %v186
  %188 = vdwg.mxu0
  %v189 = vadd.f32 %v166, %v187
  %v190 = vxor.u32 %v189, 2147483648
  %v191 = vmul.f32 %v190, 1.442695
  %v192 = vpow.pop %v191
  %v193 = vadd.f32 %v192, 1.0
  %v194 = vrcp.pop %v193
  %v195 = vmul.f32 %v193, %v194
  %v196 = vsub.f32 1.0, %v195
  %v197 = vmul.f32 %v194, %v196
  %v198 = vadd.f32 %v194, %v197
  %vm199 = vweird.f32 %v193
  %vm200 = vweird.f32 %v194
  %vm201 = vmor %vm199, %vm200
  %v202 = vsel %vm201, %v194, %v198
  %v203 = vand.u32 2147483647, %v193
  %vm204 = vcmp.eq.f32.partialorder %v203, 8.507059e+37
  %v205 = vand.u32 %v193, 2147483648
  %v206 = vor.u32 1.1754944e-38, %v205
  %v207 = vsel %vm204, %v206, %v202
  %v208 = vmul.f32 1.0, %v207
  %v209 = vtanh.pop %v189
  %v210 = vmul.f32 %v208, %v152
  %212 = vrot.lane.b32.xlu0 %v209, 64
  %v213 = vpop.permute.xlu0 %212
  %v215 = vmul.f32 %v208, %v213
  %217 = vrot.lane.b32.xlu0 %v215, 32
  %v218 = vpop.permute.xlu0 %217
  %v220 = vadd.f32 %v210, %v218
  %v221 = vtanh.pop %v220
  %223 = vrot.lane.b32.xlu0 %v221, 64
  %v224 = vpop.permute.xlu0 %223
  %v226 = vmul.f32 %v208, %v224
  %228 = vrot.lane.b32.xlu0 %v226, 32
  %v229 = vpop.permute.xlu0 %228
  %s231 = scalar_lea.vmem %s2, 4
  %232 = vst.msk [vmem:[%s231] sm:$0x3] %vm95, %v229
  %s233 = scalar_lea.vmem %s0, 6
  %v234 = vld [vmem:[%s233] sm:$0x3]
  %v235 = vsel %vm25, %v229, 0
  %237 = vmatpush.msra.mxu0 0.0
  %238 = vmatpush.msra.mxu0 0.0
  %239 = vmatpush.msra.mxu0 0.0
  %240 = vmatpush.msra.mxu0 0.0
  %241 = vmatpush.msra.mxu0 0.0
  %242 = vmatpush.msra.mxu0 0.0
  %243 = vmatpush.msra.mxu0 0.0
  %244 = vmatpush.msra.mxu0 0.0
  %245 = vmatpush.msra.mxu0 0.0
  %246 = vmatpush.msra.mxu0 0.0
  %247 = vmatpush.msra.mxu0 0.0
  %248 = vmatpush.msra.mxu0 0.0
  %249 = vmatpush.msra.mxu0 %v21
  %250 = vmatpush.msra.mxu0 %v20
  %251 = vmatpush.msra.mxu0 %v19
  %252 = vmatpush.msra.mxu0 %v18
  %253 = vmatmul.f32.gmra.mxu0 %v235
  %v254 = vpop.f32.mrf.mxu0
  %v255 = vadd.f32 0.0, %v254
  %256 = vdwg.mxu0
  %v257 = vadd.f32 %v234, %v255
  %v258 = vxor.u32 %v257, 2147483648
  %v259 = vmul.f32 %v258, 1.442695
  %v260 = vpow.pop %v259
  %v261 = vadd.f32 %v260, 1.0
  %v262 = vrcp.pop %v261
  %v263 = vmul.f32 %v261, %v262
  %v264 = vsub.f32 1.0, %v263
  %v265 = vmul.f32 %v262, %v264
  %v266 = vadd.f32 %v262, %v265
  %vm267 = vweird.f32 %v261
  %vm268 = vweird.f32 %v262
  %vm269 = vmor %vm267, %vm268
  %v270 = vsel %vm269, %v262, %v266
  %v271 = vand.u32 2147483647, %v261
  %vm272 = vcmp.eq.f32.partialorder %v271, 8.507059e+37
  %v273 = vand.u32 %v261, 2147483648
  %v274 = vor.u32 1.1754944e-38, %v273
  %v275 = vsel %vm272, %v274, %v270
  %v276 = vmul.f32 1.0, %v275
  %v277 = vtanh.pop %v257
  %v278 = vmul.f32 %v276, %v220
  %280 = vrot.lane.b32.xlu0 %v277, 64
  %v281 = vpop.permute.xlu0 %280
  %v283 = vmul.f32 %v276, %v281
  %285 = vrot.lane.b32.xlu0 %v283, 32
  %v286 = vpop.permute.xlu0 %285
  %v288 = vadd.f32 %v278, %v286
  %v289 = vtanh.pop %v288
  %291 = vrot.lane.b32.xlu0 %v289, 64
  %v292 = vpop.permute.xlu0 %291
  %v294 = vmul.f32 %v276, %v292
  %296 = vrot.lane.b32.xlu0 %v294, 32
  %v297 = vpop.permute.xlu0 %296
  %s299 = scalar_lea.vmem %s2, 6
  %300 = vst.msk [vmem:[%s299] sm:$0x3] %vm95, %v297
  %s301 = scalar_lea.vmem %s0, 8
  %v302 = vld [vmem:[%s301] sm:$0x3]
  %v303 = vsel %vm25, %v297, 0
  %305 = vmatpush.msra.mxu0 0.0
  %306 = vmatpush.msra.mxu0 0.0
  %307 = vmatpush.msra.mxu0 0.0
  %308 = vmatpush.msra.mxu0 0.0
  %309 = vmatpush.msra.mxu0 0.0
  %310 = vmatpush.msra.mxu0 0.0
  %311 = vmatpush.msra.mxu0 0.0
  %312 = vmatpush.msra.mxu0 0.0
  %313 = vmatpush.msra.mxu0 0.0
  %314 = vmatpush.msra.mxu0 0.0
  %315 = vmatpush.msra.mxu0 0.0
  %316 = vmatpush.msra.mxu0 0.0
  %317 = vmatpush.msra.mxu0 %v21
  %318 = vmatpush.msra.mxu0 %v20
  %319 = vmatpush.msra.mxu0 %v19
  %320 = vmatpush.msra.mxu0 %v18
  %321 = vmatmul.f32.gmra.mxu0 %v303
  %v322 = vpop.f32.mrf.mxu0
  %v323 = vadd.f32 0.0, %v322
  %324 = vdwg.mxu0
  %v325 = vadd.f32 %v302, %v323
  %v326 = vxor.u32 %v325, 2147483648
  %v327 = vmul.f32 %v326, 1.442695
  %v328 = vpow.pop %v327
  %v329 = vadd.f32 %v328, 1.0
  %v330 = vrcp.pop %v329
  %v331 = vmul.f32 %v329, %v330
  %v332 = vsub.f32 1.0, %v331
  %v333 = vmul.f32 %v330, %v332
  %v334 = vadd.f32 %v330, %v333
  %vm335 = vweird.f32 %v329
  %vm336 = vweird.f32 %v330
  %vm337 = vmor %vm335, %vm336
  %v338 = vsel %vm337, %v330, %v334
  %v339 = vand.u32 2147483647, %v329
  %vm340 = vcmp.eq.f32.partialorder %v339, 8.507059e+37
  %v341 = vand.u32 %v329, 2147483648
  %v342 = vor.u32 1.1754944e-38, %v341
  %v343 = vsel %vm340, %v342, %v338
  %v344 = vmul.f32 1.0, %v343
  %v345 = vtanh.pop %v325
  %v346 = vmul.f32 %v344, %v288
  %348 = vrot.lane.b32.xlu0 %v345, 64
  %v349 = vpop.permute.xlu0 %348
  %v351 = vmul.f32 %v344, %v349
  %353 = vrot.lane.b32.xlu0 %v351, 32
  %v354 = vpop.permute.xlu0 %353
  %v356 = vadd.f32 %v346, %v354
  %v357 = vtanh.pop %v356
  %359 = vrot.lane.b32.xlu0 %v357, 64
  %v360 = vpop.permute.xlu0 %359
  %v362 = vmul.f32 %v344, %v360
  %364 = vrot.lane.b32.xlu0 %v362, 32
  %v365 = vpop.permute.xlu0 %364
  %s367 = scalar_lea.vmem %s2, 8
  %368 = vst.msk [vmem:[%s367] sm:$0x3] %vm95, %v365
  %s369 = scalar_lea.vmem %s0, 10
  %v370 = vld [vmem:[%s369] sm:$0x3]
  %v371 = vsel %vm25, %v365, 0
  %373 = vmatpush.msra.mxu0 0.0
  %374 = vmatpush.msra.mxu0 0.0
  %375 = vmatpush.msra.mxu0 0.0
  %376 = vmatpush.msra.mxu0 0.0
  %377 = vmatpush.msra.mxu0 0.0
  %378 = vmatpush.msra.mxu0 0.0
  %379 = vmatpush.msra.mxu0 0.0
  %380 = vmatpush.msra.mxu0 0.0
  %381 = vmatpush.msra.mxu0 0.0
  %382 = vmatpush.msra.mxu0 0.0
  %383 = vmatpush.msra.mxu0 0.0
  %384 = vmatpush.msra.mxu0 0.0
  %385 = vmatpush.msra.mxu0 %v21
  %386 = vmatpush.msra.mxu0 %v20
  %387 = vmatpush.msra.mxu0 %v19
  %388 = vmatpush.msra.mxu0 %v18
  %389 = vmatmul.f32.gmra.mxu0 %v371
  %v390 = vpop.f32.mrf.mxu0
  %v391 = vadd.f32 0.0, %v390
  %392 = vdwg.mxu0
  %v393 = vadd.f32 %v370, %v391
  %v394 = vxor.u32 %v393, 2147483648
  %v395 = vmul.f32 %v394, 1.442695
  %v396 = vpow.pop %v395
  %v397 = vadd.f32 %v396, 1.0
  %v398 = vrcp.pop %v397
  %v399 = vmul.f32 %v397, %v398
  %v400 = vsub.f32 1.0, %v399
  %v401 = vmul.f32 %v398, %v400
  %v402 = vadd.f32 %v398, %v401
  %vm403 = vweird.f32 %v397
  %vm404 = vweird.f32 %v398
  %vm405 = vmor %vm403, %vm404
  %v406 = vsel %vm405, %v398, %v402
  %v407 = vand.u32 2147483647, %v397
  %vm408 = vcmp.eq.f32.partialorder %v407, 8.507059e+37
  %v409 = vand.u32 %v397, 2147483648
  %v410 = vor.u32 1.1754944e-38, %v409
  %v411 = vsel %vm408, %v410, %v406
  %v412 = vmul.f32 1.0, %v411
  %v413 = vtanh.pop %v393
  %v414 = vmul.f32 %v412, %v356
  %416 = vrot.lane.b32.xlu0 %v413, 64
  %v417 = vpop.permute.xlu0 %416
  %v419 = vmul.f32 %v412, %v417
  %421 = vrot.lane.b32.xlu0 %v419, 32
  %v422 = vpop.permute.xlu0 %421
  %v424 = vadd.f32 %v414, %v422
  %v425 = vtanh.pop %v424
  %427 = vrot.lane.b32.xlu0 %v425, 64
  %v428 = vpop.permute.xlu0 %427
  %v430 = vmul.f32 %v412, %v428
  %432 = vrot.lane.b32.xlu0 %v430, 32
  %v433 = vpop.permute.xlu0 %432
  %s435 = scalar_lea.vmem %s2, 10
  %436 = vst.msk [vmem:[%s435] sm:$0x3] %vm95, %v433
  %s437 = scalar_lea.vmem %s0, 12
  %v438 = vld [vmem:[%s437] sm:$0x3]
  %v439 = vsel %vm25, %v433, 0
  %441 = vmatpush.msra.mxu0 0.0
  %442 = vmatpush.msra.mxu0 0.0
  %443 = vmatpush.msra.mxu0 0.0
  %444 = vmatpush.msra.mxu0 0.0
  %445 = vmatpush.msra.mxu0 0.0
  %446 = vmatpush.msra.mxu0 0.0
  %447 = vmatpush.msra.mxu0 0.0
  %448 = vmatpush.msra.mxu0 0.0
  %449 = vmatpush.msra.mxu0 0.0
  %450 = vmatpush.msra.mxu0 0.0
  %451 = vmatpush.msra.mxu0 0.0
  %452 = vmatpush.msra.mxu0 0.0
  %453 = vmatpush.msra.mxu0 %v21
  %454 = vmatpush.msra.mxu0 %v20
  %455 = vmatpush.msra.mxu0 %v19
  %456 = vmatpush.msra.mxu0 %v18
  %457 = vmatmul.f32.gmra.mxu0 %v439
  %v458 = vpop.f32.mrf.mxu0
  %v459 = vadd.f32 0.0, %v458
  %460 = vdwg.mxu0
  %v461 = vadd.f32 %v438, %v459
  %v462 = vxor.u32 %v461, 2147483648
  %v463 = vmul.f32 %v462, 1.442695
  %v464 = vpow.pop %v463
  %v465 = vadd.f32 %v464, 1.0
  %v466 = vrcp.pop %v465
  %v467 = vmul.f32 %v465, %v466
  %v468 = vsub.f32 1.0, %v467
  %v469 = vmul.f32 %v466, %v468
  %v470 = vadd.f32 %v466, %v469
  %vm471 = vweird.f32 %v465
  %vm472 = vweird.f32 %v466
  %vm473 = vmor %vm471, %vm472
  %v474 = vsel %vm473, %v466, %v470
  %v475 = vand.u32 2147483647, %v465
  %vm476 = vcmp.eq.f32.partialorder %v475, 8.507059e+37
  %v477 = vand.u32 %v465, 2147483648
  %v478 = vor.u32 1.1754944e-38, %v477
  %v479 = vsel %vm476, %v478, %v474
  %v480 = vmul.f32 1.0, %v479
  %v481 = vtanh.pop %v461
  %v482 = vmul.f32 %v480, %v424
  %484 = vrot.lane.b32.xlu0 %v481, 64
  %v485 = vpop.permute.xlu0 %484
  %v487 = vmul.f32 %v480, %v485
  %489 = vrot.lane.b32.xlu0 %v487, 32
  %v490 = vpop.permute.xlu0 %489
  %v492 = vadd.f32 %v482, %v490
  %v493 = vtanh.pop %v492
  %495 = vrot.lane.b32.xlu0 %v493, 64
  %v496 = vpop.permute.xlu0 %495
  %v498 = vmul.f32 %v480, %v496
  %500 = vrot.lane.b32.xlu0 %v498, 32
  %v501 = vpop.permute.xlu0 %500
  %s503 = scalar_lea.vmem %s2, 12
  %504 = vst.msk [vmem:[%s503] sm:$0x3] %vm95, %v501
  %s505 = scalar_lea.vmem %s0, 14
  %v506 = vld [vmem:[%s505] sm:$0x3]
  %v507 = vsel %vm25, %v501, 0
  %509 = vmatpush.msra.mxu0 0.0
  %510 = vmatpush.msra.mxu0 0.0
  %511 = vmatpush.msra.mxu0 0.0
  %512 = vmatpush.msra.mxu0 0.0
  %513 = vmatpush.msra.mxu0 0.0
  %514 = vmatpush.msra.mxu0 0.0
  %515 = vmatpush.msra.mxu0 0.0
  %516 = vmatpush.msra.mxu0 0.0
  %517 = vmatpush.msra.mxu0 0.0
  %518 = vmatpush.msra.mxu0 0.0
  %519 = vmatpush.msra.mxu0 0.0
  %520 = vmatpush.msra.mxu0 0.0
  %521 = vmatpush.msra.mxu0 %v21
  %522 = vmatpush.msra.mxu0 %v20
  %523 = vmatpush.msra.mxu0 %v19
  %524 = vmatpush.msra.mxu0 %v18
  %525 = vmatmul.f32.gmra.mxu0 %v507
  %v526 = vpop.f32.mrf.mxu0
  %v527 = vadd.f32 0.0, %v526
  %528 = vdwg.mxu0
  %v529 = vadd.f32 %v506, %v527
  %v530 = vxor.u32 %v529, 2147483648
  %v531 = vmul.f32 %v530, 1.442695
  %v532 = vpow.pop %v531
  %v533 = vadd.f32 %v532, 1.0
  %v534 = vrcp.pop %v533
  %v535 = vmul.f32 %v533, %v534
  %v536 = vsub.f32 1.0, %v535
  %v537 = vmul.f32 %v534, %v536
  %v538 = vadd.f32 %v534, %v537
  %vm539 = vweird.f32 %v533
  %vm540 = vweird.f32 %v534
  %vm541 = vmor %vm539, %vm540
  %v542 = vsel %vm541, %v534, %v538
  %v543 = vand.u32 2147483647, %v533
  %vm544 = vcmp.eq.f32.partialorder %v543, 8.507059e+37
  %v545 = vand.u32 %v533, 2147483648
  %v546 = vor.u32 1.1754944e-38, %v545
  %v547 = vsel %vm544, %v546, %v542
  %v548 = vmul.f32 1.0, %v547
  %v549 = vtanh.pop %v529
  %v550 = vmul.f32 %v548, %v492
  %552 = vrot.lane.b32.xlu0 %v549, 64
  %v553 = vpop.permute.xlu0 %552
  %v555 = vmul.f32 %v548, %v553
  %557 = vrot.lane.b32.xlu0 %v555, 32
  %v558 = vpop.permute.xlu0 %557
  %v560 = vadd.f32 %v550, %v558
  %v561 = vtanh.pop %v560
  %563 = vrot.lane.b32.xlu0 %v561, 64
  %v564 = vpop.permute.xlu0 %563
  %v566 = vmul.f32 %v548, %v564
  %568 = vrot.lane.b32.xlu0 %v566, 32
  %v569 = vpop.permute.xlu0 %568
  %s571 = scalar_lea.vmem %s2, 14
  %572 = vst.msk [vmem:[%s571] sm:$0x3] %vm95, %v569
  %573 = vst.msk [vmem:[#allocation2] sm:$0x3] %vm95, %v569
  %575 = vrot.lane.b32.xlu0 %v560, 96
  %v576 = vpop.permute.xlu0 %575
  %578 = vst.msk [vmem:[#allocation3] sm:$0x3] %vm95, %v576
  // Predicated region
  $region14: #{apc_forward.12} parent=0 // pred_check
    _
  $region15: #{apc_forward.12} parent=0 // pred_check_branch
    %580 = sbr.rel (0) target = $region17
  $region16: #{apc_forward.12} parent=0 // pred_region
    _
  $region17: #{apc_forward.12} parent=0 // pred_fallthru
    _
  // Predicated region
  $region18: #{apc_forward.12} parent=0 // pred_check
    _
  $region19: #{apc_forward.12} parent=0 // pred_check_branch
    %582 = sbr.rel (0) target = $region21
  $region20: #{apc_forward.12} parent=0 // pred_region
    _
  $region21: #{apc_forward.12} parent=0 // pred_fallthru
    _

// kernel: apc_forward.13
$region0: #{apc_forward.13}
  #allocation0 [shape = 'u32[]', space=smem, size = 0x4, offset = 0x4, fixed_abs, tag = 'smem constant byte address 0x4 - core index']
  #allocation1 [shape = 'u32[72,128]{1,0:T(1,128)}', space=vmem, size = 0x9000, scoped, tag = 'internal scratch']
  %s0 = inlined_call_operand.vmem [shape: f32[16,32], index: 0, kind: input, shape index: {}]
  %s1 = inlined_call_operand.vmem [shape: bf16[32,128], index: 1, kind: input, shape index: {}]
  %s2 = inlined_call_operand.vmem [shape: f32[1,128], index: 2, kind: input, shape index: {}]
  %s3 = inlined_call_operand.vmem [shape: f32[16,128], index: 3, kind: output, shape index: {}]
  %s4 = sld [smem:[#allocation0]]
  $region22: #{apc_forward.13} parent=0
    _
  %s6 = ssub.s32 1, %s4
  %s7 = scalar_select 0, %s6, %s4
  // Predicated region
  $region2: #{apc_forward.13} parent=0 // pred_check
    _
  $region3: #{apc_forward.13} parent=0 // pred_check_branch
    %9 = sbr.rel (0) target = $region5
  $region4: #{apc_forward.13} parent=0 // pred_region
    _
  $region5: #{apc_forward.13} parent=0 // pred_fallthru
    _
  // Predicated region
  $region6: #{apc_forward.13} parent=0 // pred_check
    _
  $region7: #{apc_forward.13} parent=0 // pred_check_branch
    %11 = sbr.rel (0) target = $region9
  $region8: #{apc_forward.13} parent=0 // pred_region
    _
  $region9: #{apc_forward.13} parent=0 // pred_fallthru
    _
  // Predicated region
  $region10: #{apc_forward.13} parent=0 // pred_check
    _
  $region11: #{apc_forward.13} parent=0 // pred_check_branch
    %13 = sbr.rel (0) target = $region13
  $region12: #{apc_forward.13} parent=0 // pred_region
    _
  $region13: #{apc_forward.13} parent=0 // pred_fallthru
    _
  %v15 = vld [vmem:[%s0] sm:$0xff]
  %v16 = vld [vmem:[%s0 + $0x8] sm:$0xff]
  %v17 = vpack.c.bf16 %v16, %v15
  %v18 = vld [vmem:[%s1] sm:$0xf]
  %v19 = vld [vmem:[%s1 + $0x4] sm:$0xf]
  %v20 = vld [vmem:[%s1 + $0x8] sm:$0xf]
  %v21 = vld [vmem:[%s1 + $0xc] sm:$0xf]
  %v22 = vld [vmem:[%s2] sm:$0x1]
  %v24 = vperm.slane %v22, 0
  %v30 = vunpack.c.l.b16 %v18
  %v31 = vunpack.c.l.b16 %v19
  %v32 = vunpack.c.l.b16 %v20
  %v33 = vunpack.c.l.b16 %v21
  %v34 = vpack.c.b16 %v31, %v30
  %v35 = vpack.c.b16 %v33, %v32
  %vm38 = vcmask 261120
  %v40 = vsel %vm38, %v17, 0
  %42 = vmatpush.bf16.msra.mxu0 0
  %43 = vmatpush.bf16.msra.mxu0 0
  %44 = vmatpush.bf16.msra.mxu0 0
  %45 = vmatpush.bf16.msra.mxu0 0
  %46 = vmatpush.bf16.msra.mxu0 0
  %47 = vmatpush.bf16.msra.mxu0 0
  %48 = vmatpush.bf16.msra.mxu0 %v35
  %49 = vmatpush.bf16.msra.mxu0 %v34
  %50 = vmatmul.bf16.gmra.mxu0 %v40
  %v51 = vpop.f32.mrf.mxu0
  %v52 = vadd.f32 %v24, %v51
  %v53 = vpop.f32.mrf.mxu0
  %v54 = vadd.f32 %v24, %v53
  %55 = vdwg.mxu0
  %56 = vst [vmem:[%s3] sm:$0xff] %v52
  %57 = vst [vmem:[%s3 + $0x8] sm:$0xff] %v54
  // Predicated region
  $region14: #{apc_forward.13} parent=0 // pred_check
    _
  $region15: #{apc_forward.13} parent=0 // pred_check_branch
    %59 = sbr.rel (0) target = $region17
  $region16: #{apc_forward.13} parent=0 // pred_region
    _
  $region17: #{apc_forward.13} parent=0 // pred_fallthru
    _
  // Predicated region
  $region18: #{apc_forward.13} parent=0 // pred_check
    _
  $region19: #{apc_forward.13} parent=0 // pred_check_branch
    %61 = sbr.rel (0) target = $region21
  $region20: #{apc_forward.13} parent=0 // pred_region
    _
  $region21: #{apc_forward.13} parent=0 // pred_fallthru
    _

// kernel: apc_forward.15
$region0: #{apc_forward.15}
  #allocation0 [shape = 'u32[]', space=smem, size = 0x4, offset = 0x4, fixed_abs, tag = 'smem constant byte address 0x4 - core index']
  #allocation1 [shape = 'u32[72,128]{1,0:T(1,128)}', space=vmem, size = 0x9000, scoped, tag = 'internal scratch']
  %s0 = inlined_call_operand.vmem [shape: f32[16,32], index: 0, kind: input, shape index: {}]
  %s1 = inlined_call_operand.vmem [shape: f32[1,32], index: 1, kind: input, shape index: {}]
  %s2 = inlined_call_operand.vmem [shape: f32[1,32], index: 2, kind: input, shape index: {}]
  %s3 = inlined_call_operand.vmem [shape: f32[16,32], index: 3, kind: output, shape index: {}]
  %s4 = sld [smem:[#allocation0]]
  $region22: #{apc_forward.15} parent=0
    _
  %s6 = ssub.s32 1, %s4
  %s7 = scalar_select 0, %s6, %s4
  // Predicated region
  $region2: #{apc_forward.15} parent=0 // pred_check
    _
  $region3: #{apc_forward.15} parent=0 // pred_check_branch
    %9 = sbr.rel (0) target = $region5
  $region4: #{apc_forward.15} parent=0 // pred_region
    _
  $region5: #{apc_forward.15} parent=0 // pred_fallthru
    _
  // Predicated region
  $region6: #{apc_forward.15} parent=0 // pred_check
    _
  $region7: #{apc_forward.15} parent=0 // pred_check_branch
    %11 = sbr.rel (0) target = $region9
  $region8: #{apc_forward.15} parent=0 // pred_region
    _
  $region9: #{apc_forward.15} parent=0 // pred_fallthru
    _
  // Predicated region
  $region10: #{apc_forward.15} parent=0 // pred_check
    _
  $region11: #{apc_forward.15} parent=0 // pred_check_branch
    %13 = sbr.rel (0) target = $region13
  $region12: #{apc_forward.15} parent=0 // pred_region
    _
  $region13: #{apc_forward.15} parent=0 // pred_fallthru
    _
  %v14 = vld [vmem:[%s0] sm:$0xff]
  %v15 = vld [vmem:[%s0 + $0x8] sm:$0xff]
  %vm16 = vcmask 261120
  %v17 = vsel %vm16, %v14, 0.0
  %18 = vadd.xlane.f32.xlu0 %v17
  %v19 = vpop.xlane.xlu0 %18
  %v20 = vsel %vm16, %v15, 0.0
  %21 = vadd.xlane.f32.xlu0 %v20
  %v22 = vpop.xlane.xlu0 %21
  %v23 = vrcp.pop 32.0
  %v24 = vmul.f32 32.0, %v23
  %v25 = vsub.f32 1.0, %v24
  %v26 = vmul.f32 %v23, %v25
  %v27 = vadd.f32 %v23, %v26
  %vm28 = vweird.f32 %v23
  %v29 = vsel %vm28, %v23, %v27
  %v30 = vmul.f32 %v19, %v29
  %v31 = vmul.f32 %v22, %v29
  %v32 = vsub.f32 %v14, %v30
  %v33 = vsub.f32 %v15, %v31
  %v34 = vmul.f32 %v32, %v32
  %v35 = vmul.f32 %v33, %v33
  %v36 = vsel %vm16, %v34, 0.0
  %37 = vadd.xlane.f32.xlu0 %v36
  %v38 = vpop.xlane.xlu0 %37
  %v39 = vsel %vm16, %v35, 0.0
  %40 = vadd.xlane.f32.xlu0 %v39
  %v41 = vpop.xlane.xlu0 %40
  %v42 = vmul.f32 %v38, %v29
  %v43 = vmul.f32 %v41, %v29
  %v44 = vadd.f32 %v42, 1e-05
  %v45 = vadd.f32 %v43, 1e-05
  %v46 = vrsqrt.pop %v44
  %v47 = vmul.f32 %v46, %v44
  %v48 = vmul.f32 %v47, %v46
  %v49 = vmul.f32 0.5, %v48
  %v50 = vsub.f32 1.5, %v49
  %v51 = vmul.f32 %v46, %v50
  %vm52 = vweird.f32 %v44
  %vm53 = vweird.f32 %v46
  %vm54 = vmor %vm52, %vm53
  %v55 = vsel %vm54, %v46, %v51
  %v56 = vrsqrt.pop %v45
  %v57 = vmul.f32 %v56, %v45
  %v58 = vmul.f32 %v57, %v56
  %v59 = vmul.f32 0.5, %v58
  %v60 = vsub.f32 1.5, %v59
  %v61 = vmul.f32 %v56, %v60
  %vm62 = vweird.f32 %v45
  %vm63 = vweird.f32 %v56
  %vm64 = vmor %vm62, %vm63
  %v65 = vsel %vm64, %v56, %v61
  %v66 = vmul.f32 %v32, %v55
  %v67 = vmul.f32 %v33, %v65
  %v68 = vld [vmem:[%s1] sm:$0x1]
  %v70 = vperm.slane %v68, 0
  %v72 = vmul.f32 %v66, %v70
  %v73 = vmul.f32 %v67, %v70
  %v74 = vld [vmem:[%s2] sm:$0x1]
  %v76 = vperm.slane %v74, 0
  %v78 = vadd.f32 %v72, %v76
  %v79 = vadd.f32 %v73, %v76
  %80 = vst.msk [vmem:[%s3] sm:$0xff] %vm16, %v78
  %81 = vst.msk [vmem:[%s3 + $0x8] sm:$0xff] %vm16, %v79
  // Predicated region
  $region14: #{apc_forward.15} parent=0 // pred_check
    _
  $region15: #{apc_forward.15} parent=0 // pred_check_branch
    %83 = sbr.rel (0) target = $region17
  $region16: #{apc_forward.15} parent=0 // pred_region
    _
  $region17: #{apc_forward.15} parent=0 // pred_fallthru
    _
  // Predicated region
  $region18: #{apc_forward.15} parent=0 // pred_check
    _
  $region19: #{apc_forward.15} parent=0 // pred_check_branch
    %85 = sbr.rel (0) target = $region21
  $region20: #{apc_forward.15} parent=0 // pred_region
    _
  $region21: #{apc_forward.15} parent=0 // pred_fallthru
    _

// kernel: apc_forward.14
$region0: #{apc_forward.14}
  #allocation0 [shape = 'u32[]', space=smem, size = 0x4, offset = 0x4, fixed_abs, tag = 'smem constant byte address 0x4 - core index']
  #allocation1 [shape = 'u32[72,128]{1,0:T(1,128)}', space=vmem, size = 0x9000, scoped, tag = 'internal scratch']
  #allocation2 [shape = 'f32[2,32]{1,0:T(2,128)}', space=vmem, size = 0x400, scoped, tag = 'scratch operand']
  #allocation3 [shape = 'f32[2,32]{1,0:T(2,128)}', space=vmem, size = 0x400, scoped, tag = 'scratch operand']
  %s0 = inlined_call_operand.vmem [shape: f32[8,2,128], index: 0, kind: input, shape index: {}]
  %s1 = inlined_call_operand.hbm [shape: f32[32,128], index: 1, kind: input, shape index: {}]
  %s2 = inlined_call_operand.vmem [shape: f32[8,2,32], index: 2, kind: output, shape index: {}]
  %s3 = sld [smem:[#allocation0]]
  $region26: #{apc_forward.14} parent=0
    _
  %s5 = ssub.s32 1, %s3
  %s6 = scalar_select 0, %s5, %s3
  $region1: #{apc_forward.14} parent=0
    #allocation4 [shape = 'u8[16384]{0}', space=vmem, size = 0x4000, scoped, tag = 'input window, operand 1, single buffered']
    #allocation5 [shape = 's32[1]{0}', space=sflag, size = 0x4, scoped, tag = 'scoped memory for apc_forward.14']
    %7 = vsyncpa [#allocation5], 0
    // Predicated region
    $region2: #{apc_forward.14} parent=1 // pred_check
      _
    $region3: #{apc_forward.14} parent=1 // pred_check_branch
      %9 = sbr.rel (0) target = $region5
    $region4: #{apc_forward.14} parent=1 // pred_region
      _
    $region5: #{apc_forward.14} parent=1 // pred_fallthru
      _
    // Predicated region
    $region6: #{apc_forward.14} parent=1 // pred_check
      _
    $region7: #{apc_forward.14} parent=1 // pred_check_branch
      %11 = sbr.rel (0) target = $region9
    $region8: #{apc_forward.14} parent=1 // pred_region
      %13 = vsyncadd [#allocation5], 0
      %s14 = sshll.u32 %s1, 4
      %s15 = int_to_ptr.hbm [resolvable:$true] %s14
      %s16 = sshll.u32 [#allocation4], 4
      %s17 = int_to_ptr.vmem [resolvable:$true] %s16
      %22 = dma.hbm_to_vmem [thread:$0]  %s15, 512, %s17, [#allocation5], 128, 128, 8
    $region9: #{apc_forward.14} parent=1 // pred_fallthru
      _
    // Predicated region
    $region10: #{apc_forward.14} parent=1 // pred_check
      _
    $region11: #{apc_forward.14} parent=1 // pred_check_branch
      %24 = sbr.rel (0) target = $region13
    $region12: #{apc_forward.14} parent=1 // pred_region
      %26 = dma.done [#allocation5], 512
    $region13: #{apc_forward.14} parent=1 // pred_fallthru
      _
    %p27 = scmp.eq.s32.totalorder 0, 0
    // Predicated region
    $region14: #{apc_forward.14} parent=1 // pred_check
      %p28 = pneg %p27
    $region15: #{apc_forward.14} parent=1 // pred_check_branch
      %30 = sbr.rel (%p28) target = $region17
    $region16: #{apc_forward.14} parent=1 // pred_region
      %vm31 = vcmask 254976
      %32 = vst.msk [vmem:[#allocation2] sm:$0x3] %vm31, 0.0
      %33 = vst.msk [vmem:[#allocation3] sm:$0x3] %vm31, 0.0
    $region17: #{apc_forward.14} parent=1 // pred_fallthru
      _
    %v34 = vld [vmem:[#allocation4] sm:$0xff]
    %v35 = vld [vmem:[#allocation4 + $0x8] sm:$0xff]
    %v36 = vld [vmem:[#allocation4 + $0x10] sm:$0xff]
    %v37 = vld [vmem:[#allocation4 + $0x18] sm:$0xff]
    %v38 = vld [vmem:[#allocation2] sm:$0x3]
    %v39 = vld [vmem:[#allocation3] sm:$0x3]
    %v40 = vld [vmem:[%s0] sm:$0x3]
    %vm41 = vcmask 261120
    %v43 = vsel %vm41, %v38, 0
    %45 = vmatpush.msra.mxu0 0.0
    %46 = vmatpush.msra.mxu0 0.0
    %47 = vmatpush.msra.mxu0 0.0
    %48 = vmatpush.msra.mxu0 0.0
    %49 = vmatpush.msra.mxu0 0.0
    %50 = vmatpush.msra.mxu0 0.0
    %51 = vmatpush.msra.mxu0 0.0
    %52 = vmatpush.msra.mxu0 0.0
    %53 = vmatpush.msra.mxu0 0.0
    %54 = vmatpush.msra.mxu0 0.0
    %55 = vmatpush.msra.mxu0 0.0
    %56 = vmatpush.msra.mxu0 0.0
    %57 = vmatpush.msra.mxu0 %v37
    %58 = vmatpush.msra.mxu0 %v36
    %59 = vmatpush.msra.mxu0 %v35
    %60 = vmatpush.msra.mxu0 %v34
    %61 = vmatmul.f32.gmra.mxu0 %v43
    %v62 = vpop.f32.mrf.mxu0
    %v63 = vadd.f32 0.0, %v62
    %64 = vdwg.mxu0
    %v65 = vadd.f32 %v40, %v63
    %v66 = vxor.u32 %v65, 2147483648
    %v67 = vmul.f32 %v66, 1.442695
    %v68 = vpow.pop %v67
    %v69 = vadd.f32 %v68, 1.0
    %v70 = vrcp.pop %v69
    %v71 = vmul.f32 %v69, %v70
    %v72 = vsub.f32 1.0, %v71
    %v73 = vmul.f32 %v70, %v72
    %v74 = vadd.f32 %v70, %v73
    %vm75 = vweird.f32 %v69
    %vm76 = vweird.f32 %v70
    %vm77 = vmor %vm75, %vm76
    %v78 = vsel %vm77, %v70, %v74
    %v79 = vand.u32 2147483647, %v69
    %vm80 = vcmp.eq.f32.partialorder %v79, 8.507059e+37
    %v81 = vand.u32 %v69, 2147483648
    %v82 = vor.u32 1.1754944e-38, %v81
    %v83 = vsel %vm80, %v82, %v78
    %v84 = vmul.f32 1.0, %v83
    %v85 = vtanh.pop %v65
    %87 = vrot.lane.b32.xlu0 %v39, 32
    %v88 = vpop.permute.xlu0 %87
    %v90 = vmul.f32 %v84, %v88
    %92 = vrot.lane.b32.xlu0 %v85, 64
    %v93 = vpop.permute.xlu0 %92
    %v95 = vmul.f32 %v84, %v93
    %97 = vrot.lane.b32.xlu0 %v95, 32
    %v98 = vpop.permute.xlu0 %97
    %v100 = vadd.f32 %v90, %v98
    %v101 = vtanh.pop %v100
    %103 = vrot.lane.b32.xlu0 %v101, 64
    %v104 = vpop.permute.xlu0 %103
    %v106 = vmul.f32 %v84, %v104
    %108 = vrot.lane.b32.xlu0 %v106, 32
    %v109 = vpop.permute.xlu0 %108
    %vm111 = vcmask 254976
    %112 = vst.msk [vmem:[%s2] sm:$0x3] %vm111, %v109
    %s113 = scalar_lea.vmem %s0, 2
    %v114 = vld [vmem:[%s113] sm:$0x3]
    %v115 = vsel %vm41, %v109, 0
    %117 = vmatpush.msra.mxu0 0.0
    %118 = vmatpush.msra.mxu0 0.0
    %119 = vmatpush.msra.mxu0 0.0
    %120 = vmatpush.msra.mxu0 0.0
    %121 = vmatpush.msra.mxu0 0.0
    %122 = vmatpush.msra.mxu0 0.0
    %123 = vmatpush.msra.mxu0 0.0
    %124 = vmatpush.msra.mxu0 0.0
    %125 = vmatpush.msra.mxu0 0.0
    %126 = vmatpush.msra.mxu0 0.0
    %127 = vmatpush.msra.mxu0 0.0
    %128 = vmatpush.msra.mxu0 0.0
    %129 = vmatpush.msra.mxu0 %v37
    %130 = vmatpush.msra.mxu0 %v36
    %131 = vmatpush.msra.mxu0 %v35
    %132 = vmatpush.msra.mxu0 %v34
    %133 = vmatmul.f32.gmra.mxu0 %v115
    %v134 = vpop.f32.mrf.mxu0
    %v135 = vadd.f32 0.0, %v134
    %136 = vdwg.mxu0
    %v137 = vadd.f32 %v114, %v135
    %v138 = vxor.u32 %v137, 2147483648
    %v139 = vmul.f32 %v138, 1.442695
    %v140 = vpow.pop %v139
    %v141 = vadd.f32 %v140, 1.0
    %v142 = vrcp.pop %v141
    %v143 = vmul.f32 %v141, %v142
    %v144 = vsub.f32 1.0, %v143
    %v145 = vmul.f32 %v142, %v144
    %v146 = vadd.f32 %v142, %v145
    %vm147 = vweird.f32 %v141
    %vm148 = vweird.f32 %v142
    %vm149 = vmor %vm147, %vm148
    %v150 = vsel %vm149, %v142, %v146
    %v151 = vand.u32 2147483647, %v141
    %vm152 = vcmp.eq.f32.partialorder %v151, 8.507059e+37
    %v153 = vand.u32 %v141, 2147483648
    %v154 = vor.u32 1.1754944e-38, %v153
    %v155 = vsel %vm152, %v154, %v150
    %v156 = vmul.f32 1.0, %v155
    %v157 = vtanh.pop %v137
    %v158 = vmul.f32 %v156, %v100
    %160 = vrot.lane.b32.xlu0 %v157, 64
    %v161 = vpop.permute.xlu0 %160
    %v163 = vmul.f32 %v156, %v161
    %165 = vrot.lane.b32.xlu0 %v163, 32
    %v166 = vpop.permute.xlu0 %165
    %v168 = vadd.f32 %v158, %v166
    %v169 = vtanh.pop %v168
    %171 = vrot.lane.b32.xlu0 %v169, 64
    %v172 = vpop.permute.xlu0 %171
    %v174 = vmul.f32 %v156, %v172
    %176 = vrot.lane.b32.xlu0 %v174, 32
    %v177 = vpop.permute.xlu0 %176
    %s179 = scalar_lea.vmem %s2, 2
    %180 = vst.msk [vmem:[%s179] sm:$0x3] %vm111, %v177
    %s181 = scalar_lea.vmem %s0, 4
    %v182 = vld [vmem:[%s181] sm:$0x3]
    %v183 = vsel %vm41, %v177, 0
    %185 = vmatpush.msra.mxu0 0.0
    %186 = vmatpush.msra.mxu0 0.0
    %187 = vmatpush.msra.mxu0 0.0
    %188 = vmatpush.msra.mxu0 0.0
    %189 = vmatpush.msra.mxu0 0.0
    %190 = vmatpush.msra.mxu0 0.0
    %191 = vmatpush.msra.mxu0 0.0
    %192 = vmatpush.msra.mxu0 0.0
    %193 = vmatpush.msra.mxu0 0.0
    %194 = vmatpush.msra.mxu0 0.0
    %195 = vmatpush.msra.mxu0 0.0
    %196 = vmatpush.msra.mxu0 0.0
    %197 = vmatpush.msra.mxu0 %v37
    %198 = vmatpush.msra.mxu0 %v36
    %199 = vmatpush.msra.mxu0 %v35
    %200 = vmatpush.msra.mxu0 %v34
    %201 = vmatmul.f32.gmra.mxu0 %v183
    %v202 = vpop.f32.mrf.mxu0
    %v203 = vadd.f32 0.0, %v202
    %204 = vdwg.mxu0
    %v205 = vadd.f32 %v182, %v203
    %v206 = vxor.u32 %v205, 2147483648
    %v207 = vmul.f32 %v206, 1.442695
    %v208 = vpow.pop %v207
    %v209 = vadd.f32 %v208, 1.0
    %v210 = vrcp.pop %v209
    %v211 = vmul.f32 %v209, %v210
    %v212 = vsub.f32 1.0, %v211
    %v213 = vmul.f32 %v210, %v212
    %v214 = vadd.f32 %v210, %v213
    %vm215 = vweird.f32 %v209
    %vm216 = vweird.f32 %v210
    %vm217 = vmor %vm215, %vm216
    %v218 = vsel %vm217, %v210, %v214
    %v219 = vand.u32 2147483647, %v209
    %vm220 = vcmp.eq.f32.partialorder %v219, 8.507059e+37
    %v221 = vand.u32 %v209, 2147483648
    %v222 = vor.u32 1.1754944e-38, %v221
    %v223 = vsel %vm220, %v222, %v218
    %v224 = vmul.f32 1.0, %v223
    %v225 = vtanh.pop %v205
    %v226 = vmul.f32 %v224, %v168
    %228 = vrot.lane.b32.xlu0 %v225, 64
    %v229 = vpop.permute.xlu0 %228
    %v231 = vmul.f32 %v224, %v229
    %233 = vrot.lane.b32.xlu0 %v231, 32
    %v234 = vpop.permute.xlu0 %233
    %v236 = vadd.f32 %v226, %v234
    %v237 = vtanh.pop %v236
    %239 = vrot.lane.b32.xlu0 %v237, 64
    %v240 = vpop.permute.xlu0 %239
    %v242 = vmul.f32 %v224, %v240
    %244 = vrot.lane.b32.xlu0 %v242, 32
    %v245 = vpop.permute.xlu0 %244
    %s247 = scalar_lea.vmem %s2, 4
    %248 = vst.msk [vmem:[%s247] sm:$0x3] %vm111, %v245
    %s249 = scalar_lea.vmem %s0, 6
    %v250 = vld [vmem:[%s249] sm:$0x3]
    %v251 = vsel %vm41, %v245, 0
    %253 = vmatpush.msra.mxu0 0.0
    %254 = vmatpush.msra.mxu0 0.0
    %255 = vmatpush.msra.mxu0 0.0
    %256 = vmatpush.msra.mxu0 0.0
    %257 = vmatpush.msra.mxu0 0.0
    %258 = vmatpush.msra.mxu0 0.0
    %259 = vmatpush.msra.mxu0 0.0
    %260 = vmatpush.msra.mxu0 0.0
    %261 = vmatpush.msra.mxu0 0.0
    %262 = vmatpush.msra.mxu0 0.0
    %263 = vmatpush.msra.mxu0 0.0
    %264 = vmatpush.msra.mxu0 0.0
    %265 = vmatpush.msra.mxu0 %v37
    %266 = vmatpush.msra.mxu0 %v36
    %267 = vmatpush.msra.mxu0 %v35
    %268 = vmatpush.msra.mxu0 %v34
    %269 = vmatmul.f32.gmra.mxu0 %v251
    %v270 = vpop.f32.mrf.mxu0
    %v271 = vadd.f32 0.0, %v270
    %272 = vdwg.mxu0
    %v273 = vadd.f32 %v250, %v271
    %v274 = vxor.u32 %v273, 2147483648
    %v275 = vmul.f32 %v274, 1.442695
    %v276 = vpow.pop %v275
    %v277 = vadd.f32 %v276, 1.0
    %v278 = vrcp.pop %v277
    %v279 = vmul.f32 %v277, %v278
    %v280 = vsub.f32 1.0, %v279
    %v281 = vmul.f32 %v278, %v280
    %v282 = vadd.f32 %v278, %v281
    %vm283 = vweird.f32 %v277
    %vm284 = vweird.f32 %v278
    %vm285 = vmor %vm283, %vm284
    %v286 = vsel %vm285, %v278, %v282
    %v287 = vand.u32 2147483647, %v277
    %vm288 = vcmp.eq.f32.partialorder %v287, 8.507059e+37
    %v289 = vand.u32 %v277, 2147483648
    %v290 = vor.u32 1.1754944e-38, %v289
    %v291 = vsel %vm288, %v290, %v286
    %v292 = vmul.f32 1.0, %v291
    %v293 = vtanh.pop %v273
    %v294 = vmul.f32 %v292, %v236
    %296 = vrot.lane.b32.xlu0 %v293, 64
    %v297 = vpop.permute.xlu0 %296
    %v299 = vmul.f32 %v292, %v297
    %301 = vrot.lane.b32.xlu0 %v299, 32
    %v302 = vpop.permute.xlu0 %301
    %v304 = vadd.f32 %v294, %v302
    %v305 = vtanh.pop %v304
    %307 = vrot.lane.b32.xlu0 %v305, 64
    %v308 = vpop.permute.xlu0 %307
    %v310 = vmul.f32 %v292, %v308
    %312 = vrot.lane.b32.xlu0 %v310, 32
    %v313 = vpop.permute.xlu0 %312
    %s315 = scalar_lea.vmem %s2, 6
    %316 = vst.msk [vmem:[%s315] sm:$0x3] %vm111, %v313
    %s317 = scalar_lea.vmem %s0, 8
    %v318 = vld [vmem:[%s317] sm:$0x3]
    %v319 = vsel %vm41, %v313, 0
    %321 = vmatpush.msra.mxu0 0.0
    %322 = vmatpush.msra.mxu0 0.0
    %323 = vmatpush.msra.mxu0 0.0
    %324 = vmatpush.msra.mxu0 0.0
    %325 = vmatpush.msra.mxu0 0.0
    %326 = vmatpush.msra.mxu0 0.0
    %327 = vmatpush.msra.mxu0 0.0
    %328 = vmatpush.msra.mxu0 0.0
    %329 = vmatpush.msra.mxu0 0.0
    %330 = vmatpush.msra.mxu0 0.0
    %331 = vmatpush.msra.mxu0 0.0
    %332 = vmatpush.msra.mxu0 0.0
    %333 = vmatpush.msra.mxu0 %v37
    %334 = vmatpush.msra.mxu0 %v36
    %335 = vmatpush.msra.mxu0 %v35
    %336 = vmatpush.msra.mxu0 %v34
    %337 = vmatmul.f32.gmra.mxu0 %v319
    %v338 = vpop.f32.mrf.mxu0
    %v339 = vadd.f32 0.0, %v338
    %340 = vdwg.mxu0
    %v341 = vadd.f32 %v318, %v339
    %v342 = vxor.u32 %v341, 2147483648
    %v343 = vmul.f32 %v342, 1.442695
    %v344 = vpow.pop %v343
    %v345 = vadd.f32 %v344, 1.0
    %v346 = vrcp.pop %v345
    %v347 = vmul.f32 %v345, %v346
    %v348 = vsub.f32 1.0, %v347
    %v349 = vmul.f32 %v346, %v348
    %v350 = vadd.f32 %v346, %v349
    %vm351 = vweird.f32 %v345
    %vm352 = vweird.f32 %v346
    %vm353 = vmor %vm351, %vm352
    %v354 = vsel %vm353, %v346, %v350
    %v355 = vand.u32 2147483647, %v345
    %vm356 = vcmp.eq.f32.partialorder %v355, 8.507059e+37
    %v357 = vand.u32 %v345, 2147483648
    %v358 = vor.u32 1.1754944e-38, %v357
    %v359 = vsel %vm356, %v358, %v354
    %v360 = vmul.f32 1.0, %v359
    %v361 = vtanh.pop %v341
    %v362 = vmul.f32 %v360, %v304
    %364 = vrot.lane.b32.xlu0 %v361, 64
    %v365 = vpop.permute.xlu0 %364
    %v367 = vmul.f32 %v360, %v365
    %369 = vrot.lane.b32.xlu0 %v367, 32
    %v370 = vpop.permute.xlu0 %369
    %v372 = vadd.f32 %v362, %v370
    %v373 = vtanh.pop %v372
    %375 = vrot.lane.b32.xlu0 %v373, 64
    %v376 = vpop.permute.xlu0 %375
    %v378 = vmul.f32 %v360, %v376
    %380 = vrot.lane.b32.xlu0 %v378, 32
    %v381 = vpop.permute.xlu0 %380
    %s383 = scalar_lea.vmem %s2, 8
    %384 = vst.msk [vmem:[%s383] sm:$0x3] %vm111, %v381
    %s385 = scalar_lea.vmem %s0, 10
    %v386 = vld [vmem:[%s385] sm:$0x3]
    %v387 = vsel %vm41, %v381, 0
    %389 = vmatpush.msra.mxu0 0.0
    %390 = vmatpush.msra.mxu0 0.0
    %391 = vmatpush.msra.mxu0 0.0
    %392 = vmatpush.msra.mxu0 0.0
    %393 = vmatpush.msra.mxu0 0.0
    %394 = vmatpush.msra.mxu0 0.0
    %395 = vmatpush.msra.mxu0 0.0
    %396 = vmatpush.msra.mxu0 0.0
    %397 = vmatpush.msra.mxu0 0.0
    %398 = vmatpush.msra.mxu0 0.0
    %399 = vmatpush.msra.mxu0 0.0
    %400 = vmatpush.msra.mxu0 0.0
    %401 = vmatpush.msra.mxu0 %v37
    %402 = vmatpush.msra.mxu0 %v36
    %403 = vmatpush.msra.mxu0 %v35
    %404 = vmatpush.msra.mxu0 %v34
    %405 = vmatmul.f32.gmra.mxu0 %v387
    %v406 = vpop.f32.mrf.mxu0
    %v407 = vadd.f32 0.0, %v406
    %408 = vdwg.mxu0
    %v409 = vadd.f32 %v386, %v407
    %v410 = vxor.u32 %v409, 2147483648
    %v411 = vmul.f32 %v410, 1.442695
    %v412 = vpow.pop %v411
    %v413 = vadd.f32 %v412, 1.0
    %v414 = vrcp.pop %v413
    %v415 = vmul.f32 %v413, %v414
    %v416 = vsub.f32 1.0, %v415
    %v417 = vmul.f32 %v414, %v416
    %v418 = vadd.f32 %v414, %v417
    %vm419 = vweird.f32 %v413
    %vm420 = vweird.f32 %v414
    %vm421 = vmor %vm419, %vm420
    %v422 = vsel %vm421, %v414, %v418
    %v423 = vand.u32 2147483647, %v413
    %vm424 = vcmp.eq.f32.partialorder %v423, 8.507059e+37
    %v425 = vand.u32 %v413, 2147483648
    %v426 = vor.u32 1.1754944e-38, %v425
    %v427 = vsel %vm424, %v426, %v422
    %v428 = vmul.f32 1.0, %v427
    %v429 = vtanh.pop %v409
    %v430 = vmul.f32 %v428, %v372
    %432 = vrot.lane.b32.xlu0 %v429, 64
    %v433 = vpop.permute.xlu0 %432
    %v435 = vmul.f32 %v428, %v433
    %437 = vrot.lane.b32.xlu0 %v435, 32
    %v438 = vpop.permute.xlu0 %437
    %v440 = vadd.f32 %v430, %v438
    %v441 = vtanh.pop %v440
    %443 = vrot.lane.b32.xlu0 %v441, 64
    %v444 = vpop.permute.xlu0 %443
    %v446 = vmul.f32 %v428, %v444
    %448 = vrot.lane.b32.xlu0 %v446, 32
    %v449 = vpop.permute.xlu0 %448
    %s451 = scalar_lea.vmem %s2, 10
    %452 = vst.msk [vmem:[%s451] sm:$0x3] %vm111, %v449
    %s453 = scalar_lea.vmem %s0, 12
    %v454 = vld [vmem:[%s453] sm:$0x3]
    %v455 = vsel %vm41, %v449, 0
    %457 = vmatpush.msra.mxu0 0.0
    %458 = vmatpush.msra.mxu0 0.0
    %459 = vmatpush.msra.mxu0 0.0
    %460 = vmatpush.msra.mxu0 0.0
    %461 = vmatpush.msra.mxu0 0.0
    %462 = vmatpush.msra.mxu0 0.0
    %463 = vmatpush.msra.mxu0 0.0
    %464 = vmatpush.msra.mxu0 0.0
    %465 = vmatpush.msra.mxu0 0.0
    %466 = vmatpush.msra.mxu0 0.0
    %467 = vmatpush.msra.mxu0 0.0
    %468 = vmatpush.msra.mxu0 0.0
    %469 = vmatpush.msra.mxu0 %v37
    %470 = vmatpush.msra.mxu0 %v36
    %471 = vmatpush.msra.mxu0 %v35
    %472 = vmatpush.msra.mxu0 %v34
    %473 = vmatmul.f32.gmra.mxu0 %v455
    %v474 = vpop.f32.mrf.mxu0
    %v475 = vadd.f32 0.0, %v474
    %476 = vdwg.mxu0
    %v477 = vadd.f32 %v454, %v475
    %v478 = vxor.u32 %v477, 2147483648
    %v479 = vmul.f32 %v478, 1.442695
    %v480 = vpow.pop %v479
    %v481 = vadd.f32 %v480, 1.0
    %v482 = vrcp.pop %v481
    %v483 = vmul.f32 %v481, %v482
    %v484 = vsub.f32 1.0, %v483
    %v485 = vmul.f32 %v482, %v484
    %v486 = vadd.f32 %v482, %v485
    %vm487 = vweird.f32 %v481
    %vm488 = vweird.f32 %v482
    %vm489 = vmor %vm487, %vm488
    %v490 = vsel %vm489, %v482, %v486
    %v491 = vand.u32 2147483647, %v481
    %vm492 = vcmp.eq.f32.partialorder %v491, 8.507059e+37
    %v493 = vand.u32 %v481, 2147483648
    %v494 = vor.u32 1.1754944e-38, %v493
    %v495 = vsel %vm492, %v494, %v490
    %v496 = vmul.f32 1.0, %v495
    %v497 = vtanh.pop %v477
    %v498 = vmul.f32 %v496, %v440
    %500 = vrot.lane.b32.xlu0 %v497, 64
    %v501 = vpop.permute.xlu0 %500
    %v503 = vmul.f32 %v496, %v501
    %505 = vrot.lane.b32.xlu0 %v503, 32
    %v506 = vpop.permute.xlu0 %505
    %v508 = vadd.f32 %v498, %v506
    %v509 = vtanh.pop %v508
    %511 = vrot.lane.b32.xlu0 %v509, 64
    %v512 = vpop.permute.xlu0 %511
    %v514 = vmul.f32 %v496, %v512
    %516 = vrot.lane.b32.xlu0 %v514, 32
    %v517 = vpop.permute.xlu0 %516
    %s519 = scalar_lea.vmem %s2, 12
    %520 = vst.msk [vmem:[%s519] sm:$0x3] %vm111, %v517
    %s521 = scalar_lea.vmem %s0, 14
    %v522 = vld [vmem:[%s521] sm:$0x3]
    %v523 = vsel %vm41, %v517, 0
    %525 = vmatpush.msra.mxu0 0.0
    %526 = vmatpush.msra.mxu0 0.0
    %527 = vmatpush.msra.mxu0 0.0
    %528 = vmatpush.msra.mxu0 0.0
    %529 = vmatpush.msra.mxu0 0.0
    %530 = vmatpush.msra.mxu0 0.0
    %531 = vmatpush.msra.mxu0 0.0
    %532 = vmatpush.msra.mxu0 0.0
    %533 = vmatpush.msra.mxu0 0.0
    %534 = vmatpush.msra.mxu0 0.0
    %535 = vmatpush.msra.mxu0 0.0
    %536 = vmatpush.msra.mxu0 0.0
    %537 = vmatpush.msra.mxu0 %v37
    %538 = vmatpush.msra.mxu0 %v36
    %539 = vmatpush.msra.mxu0 %v35
    %540 = vmatpush.msra.mxu0 %v34
    %541 = vmatmul.f32.gmra.mxu0 %v523
    %v542 = vpop.f32.mrf.mxu0
    %v543 = vadd.f32 0.0, %v542
    %544 = vdwg.mxu0
    %v545 = vadd.f32 %v522, %v543
    %v546 = vxor.u32 %v545, 2147483648
    %v547 = vmul.f32 %v546, 1.442695
    %v548 = vpow.pop %v547
    %v549 = vadd.f32 %v548, 1.0
    %v550 = vrcp.pop %v549
    %v551 = vmul.f32 %v549, %v550
    %v552 = vsub.f32 1.0, %v551
    %v553 = vmul.f32 %v550, %v552
    %v554 = vadd.f32 %v550, %v553
    %vm555 = vweird.f32 %v549
    %vm556 = vweird.f32 %v550
    %vm557 = vmor %vm555, %vm556
    %v558 = vsel %vm557, %v550, %v554
    %v559 = vand.u32 2147483647, %v549
    %vm560 = vcmp.eq.f32.partialorder %v559, 8.507059e+37
    %v561 = vand.u32 %v549, 2147483648
    %v562 = vor.u32 1.1754944e-38, %v561
    %v563 = vsel %vm560, %v562, %v558
    %v564 = vmul.f32 1.0, %v563
    %v565 = vtanh.pop %v545
    %v566 = vmul.f32 %v564, %v508
    %568 = vrot.lane.b32.xlu0 %v565, 64
    %v569 = vpop.permute.xlu0 %568
    %v571 = vmul.f32 %v564, %v569
    %573 = vrot.lane.b32.xlu0 %v571, 32
    %v574 = vpop.permute.xlu0 %573
    %v576 = vadd.f32 %v566, %v574
    %v577 = vtanh.pop %v576
    %579 = vrot.lane.b32.xlu0 %v577, 64
    %v580 = vpop.permute.xlu0 %579
    %v582 = vmul.f32 %v564, %v580
    %584 = vrot.lane.b32.xlu0 %v582, 32
    %v585 = vpop.permute.xlu0 %584
    %s587 = scalar_lea.vmem %s2, 14
    %588 = vst.msk [vmem:[%s587] sm:$0x3] %vm111, %v585
    %589 = vst.msk [vmem:[#allocation2] sm:$0x3] %vm111, %v585
    %591 = vrot.lane.b32.xlu0 %v576, 96
    %v592 = vpop.permute.xlu0 %591
    %594 = vst.msk [vmem:[#allocation3] sm:$0x3] %vm111, %v592
    // Predicated region
    $region18: #{apc_forward.14} parent=1 // pred_check
      _
    $region19: #{apc_forward.14} parent=1 // pred_check_branch
      %596 = sbr.rel (0) target = $region21
    $region20: #{apc_forward.14} parent=1 // pred_region
      _
    $region21: #{apc_forward.14} parent=1 // pred_fallthru
      _
    // Predicated region
    $region22: #{apc_forward.14} parent=1 // pred_check
      _
    $region23: #{apc_forward.14} parent=1 // pred_check_branch
      %598 = sbr.rel (0) target = $region25
    $region24: #{apc_forward.14} parent=1 // pred_region
      _
    $region25: #{apc_forward.14} parent=1 // pred_fallthru
      _
    %599 = vsyncpa [#allocation5], 1

// kernel: apc_forward.16
$region0: #{apc_forward.16}
  #allocation0 [shape = 'u32[]', space=smem, size = 0x4, offset = 0x4, fixed_abs, tag = 'smem constant byte address 0x4 - core index']
  #allocation1 [shape = 'u32[72,128]{1,0:T(1,128)}', space=vmem, size = 0x9000, scoped, tag = 'internal scratch']
  %s0 = inlined_call_operand.vmem [shape: f32[16,32], index: 0, kind: input, shape index: {}]
  %s1 = inlined_call_operand.vmem [shape: bf16[32,48], index: 1, kind: input, shape index: {}]
  %s2 = inlined_call_operand.vmem [shape: f32[1,48], index: 2, kind: input, shape index: {}]
  %s3 = inlined_call_operand.vmem [shape: f32[16,48], index: 3, kind: output, shape index: {}]
  %s4 = sld [smem:[#allocation0]]
  $region22: #{apc_forward.16} parent=0
    _
  %s6 = ssub.s32 1, %s4
  %s7 = scalar_select 0, %s6, %s4
  // Predicated region
  $region2: #{apc_forward.16} parent=0 // pred_check
    _
  $region3: #{apc_forward.16} parent=0 // pred_check_branch
    %9 = sbr.rel (0) target = $region5
  $region4: #{apc_forward.16} parent=0 // pred_region
    _
  $region5: #{apc_forward.16} parent=0 // pred_fallthru
    _
  // Predicated region
  $region6: #{apc_forward.16} parent=0 // pred_check
    _
  $region7: #{apc_forward.16} parent=0 // pred_check_branch
    %11 = sbr.rel (0) target = $region9
  $region8: #{apc_forward.16} parent=0 // pred_region
    _
  $region9: #{apc_forward.16} parent=0 // pred_fallthru
    _
  // Predicated region
  $region10: #{apc_forward.16} parent=0 // pred_check
    _
  $region11: #{apc_forward.16} parent=0 // pred_check_branch
    %13 = sbr.rel (0) target = $region13
  $region12: #{apc_forward.16} parent=0 // pred_region
    _
  $region13: #{apc_forward.16} parent=0 // pred_fallthru
    _
  %v15 = vld [vmem:[%s0] sm:$0xff]
  %v16 = vld [vmem:[%s0 + $0x8] sm:$0xff]
  %v17 = vpack.c.bf16 %v16, %v15
  %v18 = vld [vmem:[%s1] sm:$0xf]
  %v19 = vld [vmem:[%s1 + $0x4] sm:$0xf]
  %v20 = vld [vmem:[%s1 + $0x8] sm:$0xf]
  %v21 = vld [vmem:[%s1 + $0xc] sm:$0xf]
  %v22 = vld [vmem:[%s2] sm:$0x1]
  %v24 = vperm.slane %v22, 0
  %v30 = vunpack.c.l.b16 %v18
  %v31 = vunpack.c.l.b16 %v19
  %v32 = vunpack.c.l.b16 %v20
  %v33 = vunpack.c.l.b16 %v21
  %v34 = vpack.c.b16 %v31, %v30
  %v35 = vpack.c.b16 %v33, %v32
  %vm38 = vcmask 261120
  %v40 = vsel %vm38, %v17, 0
  %42 = vmatpush.bf16.msra.mxu0 0
  %43 = vmatpush.bf16.msra.mxu0 0
  %44 = vmatpush.bf16.msra.mxu0 0
  %45 = vmatpush.bf16.msra.mxu0 0
  %46 = vmatpush.bf16.msra.mxu0 0
  %47 = vmatpush.bf16.msra.mxu0 0
  %48 = vmatpush.bf16.msra.mxu0 %v35
  %49 = vmatpush.bf16.msra.mxu0 %v34
  %50 = vmatmul.bf16.gmra.mxu0 %v40
  %v51 = vpop.f32.mrf.mxu0
  %v52 = vadd.f32 %v24, %v51
  %v53 = vpop.f32.mrf.mxu0
  %v54 = vadd.f32 %v24, %v53
  %55 = vdwg.mxu0
  %vm56 = vcmask 392192
  %57 = vst.msk [vmem:[%s3] sm:$0xff] %vm56, %v52
  %58 = vst.msk [vmem:[%s3 + $0x8] sm:$0xff] %vm56, %v54
  // Predicated region
  $region14: #{apc_forward.16} parent=0 // pred_check
    _
  $region15: #{apc_forward.16} parent=0 // pred_check_branch
    %60 = sbr.rel (0) target = $region17
  $region16: #{apc_forward.16} parent=0 // pred_region
    _
  $region17: #{apc_forward.16} parent=0 // pred_fallthru
    _
  // Predicated region
  $region18: #{apc_forward.16} parent=0 // pred_check
    _
  $region19: #{apc_forward.16} parent=0 // pred_check_branch
    %62 = sbr.rel (0) target = $region21
  $region20: #{apc_forward.16} parent=0 // pred_region
    _
  $region21: #{apc_forward.16} parent=0 // pred_fallthru
    _

// kernel: apc_forward.18
$region0: #{apc_forward.18}
  #allocation0 [shape = 'u32[]', space=smem, size = 0x4, offset = 0x4, fixed_abs, tag = 'smem constant byte address 0x4 - core index']
  #allocation1 [shape = 'u32[72,128]{1,0:T(1,128)}', space=vmem, size = 0x9000, scoped, tag = 'internal scratch']
  #allocation2 [shape = 'f32[1,1]{1,0:T(1,128)}', space=vmem, size = 0x200, scoped, tag = 'scratch operand']
  %s0 = inlined_call_operand.vmem [shape: f32[12,16], index: 0, kind: input, shape index: {}]
  %s1 = inlined_call_operand.vmem [shape: f32[12,16], index: 1, kind: input, shape index: {}]
  %s2 = inlined_call_operand.hbm [shape: f32[1,1], index: 2, kind: output, shape index: {}]
  %s3 = sld [smem:[#allocation0]]
  $region26: #{apc_forward.18} parent=0
    _
  %s5 = ssub.s32 1, %s3
  %s6 = scalar_select 0, %s5, %s3
  $region1: #{apc_forward.18} parent=0
    #allocation3 [shape = 'u8[512]{0}', space=vmem, size = 0x400, scoped, tag = 'output window, operand 0, single buffered']
    #allocation4 [shape = 's32[1]{0}', space=sflag, size = 0x4, scoped, tag = 'scoped memory for apc_forward.18']
    %7 = vsyncpa [#allocation4], 0
    // Predicated region
    $region2: #{apc_forward.18} parent=1 // pred_check
      _
    $region3: #{apc_forward.18} parent=1 // pred_check_branch
      %9 = sbr.rel (0) target = $region5
    $region4: #{apc_forward.18} parent=1 // pred_region
      _
    $region5: #{apc_forward.18} parent=1 // pred_fallthru
      _
    // Predicated region
    $region6: #{apc_forward.18} parent=1 // pred_check
      _
    $region7: #{apc_forward.18} parent=1 // pred_check_branch
      %11 = sbr.rel (0) target = $region9
    $region8: #{apc_forward.18} parent=1 // pred_region
      _
    $region9: #{apc_forward.18} parent=1 // pred_fallthru
      _
    %p12 = scmp.eq.s32.totalorder 0, 0
    // Predicated region
    $region10: #{apc_forward.18} parent=1 // pred_check
      %p13 = pneg %p12
    $region11: #{apc_forward.18} parent=1 // pred_check_branch
      %15 = sbr.rel (%p13) target = $region13
    $region12: #{apc_forward.18} parent=1 // pred_region
      %vm16 = vcmask 0
      %17 = vst.msk [vmem:[#allocation2] sm:$0x1] %vm16, 0.0
    $region13: #{apc_forward.18} parent=1 // pred_fallthru
      _
    %v18 = vld [vmem:[%s1] sm:$0xff]
    %v19 = vld [vmem:[%s1 + $0x8] sm:$0xf]
    %v20 = vld [vmem:[%s0] sm:$0xff]
    %v21 = vld [vmem:[%s0 + $0x8] sm:$0xf]
    %v22 = vsub.f32 %v18, %v20
    %v23 = vsub.f32 %v19, %v21
    %v24 = vand.u32 2147483647, %v22
    %v25 = vand.u32 2147483647, %v23
    %v26 = vlaneseq
    %v27 = vshrl.u32 %v26, 7
    %v28 = vadd.s32 %v27, 8
    %s29 = smul.u32 0, 12
    %v30 = vstv %s29
    %v31 = vadd.s32 %v27, %v30
    %v32 = vadd.s32 %v28, %v30
    %vm33 = vcmp.lt.s32.totalorder %v31, 12
    %vm34 = vcmp.lt.s32.totalorder %v32, 12
    %v35 = vsel %vm33, %v24, 0.0
    %v36 = vsel %vm34, %v25, 0.0
    %v37 = vld [vmem:[#allocation2] sm:$0x1]
    %vm38 = vcmask 130048
    %v39 = vsel %vm38, %v35, 0.0
    %vm40 = vcmask 125952
    %v41 = vsel %vm40, %v36, 0.0
    %v42 = vadd.f32 %v39, %v41
    %43 = vadd.xlane.f32.xlu0 %v42
    %v44 = vpop.xlane.xlu0 %43
    %v45 = vrot.slane %v44, 4
    %v46 = vadd.f32 %v44, %v45
    %v47 = vrot.slane %v46, 2
    %v48 = vadd.f32 %v46, %v47
    %v49 = vrot.slane %v48, 1
    %v50 = vadd.f32 %v48, %v49
    %s51 = vtos %v50
    %v52 = vstv %s51
    %v53 = vadd.f32 %v37, %v52
    %vm54 = vcmask 0
    %55 = vst.msk [vmem:[#allocation2] sm:$0x1] %vm54, %v53
    // Predicated region
    $region14: #{apc_forward.18} parent=1 // pred_check
      %p56 = pneg %p12
    $region15: #{apc_forward.18} parent=1 // pred_check_branch
      %58 = sbr.rel (%p56) target = $region17
    $region16: #{apc_forward.18} parent=1 // pred_region
      %v59 = vld [vmem:[#allocation2] sm:$0x1]
      %v60 = vmul.f32 %v59, 0.083333336
      %61 = vst.msk [vmem:[#allocation3] sm:$0x1] %vm54, %v60
    $region17: #{apc_forward.18} parent=1 // pred_fallthru
      _
    // Predicated region
    $region18: #{apc_forward.18} parent=1 // pred_check
      _
    $region19: #{apc_forward.18} parent=1 // pred_check_branch
      %63 = sbr.rel (0) target = $region21
    $region20: #{apc_forward.18} parent=1 // pred_region
      %65 = vsyncadd [#allocation4], 0
      %s67 = sshll.u32 [#allocation3], 4
      %s68 = int_to_ptr.vmem [resolvable:$true] %s67
      %s69 = sshll.u32 %s2, 4
      %s70 = int_to_ptr.hbm [resolvable:$true] %s69
      %72 = dma.vmem_to_hbm [thread:$0]  %s68, 16, %s70, [#allocation4]
    $region21: #{apc_forward.18} parent=1 // pred_fallthru
      _
    // Predicated region
    $region22: #{apc_forward.18} parent=1 // pred_check
      _
    $region23: #{apc_forward.18} parent=1 // pred_check_branch
      %74 = sbr.rel (0) target = $region25
    $region24: #{apc_forward.18} parent=1 // pred_region
      %76 = dma.done [#allocation4], 16
    $region25: #{apc_forward.18} parent=1 // pred_fallthru
      _
    %77 = vsyncpa [#allocation4], 1

// kernel: apc_forward.19
$region0: #{apc_forward.19}
  #allocation0 [shape = 'u32[]', space=smem, size = 0x4, offset = 0x4, fixed_abs, tag = 'smem constant byte address 0x4 - core index']
  #allocation1 [shape = 'u32[72,128]{1,0:T(1,128)}', space=vmem, size = 0x9000, scoped, tag = 'internal scratch']
  #allocation2 [shape = 'f32[1,1]{1,0:T(1,128)}', space=vmem, size = 0x200, scoped, tag = 'scratch operand']
  %s0 = inlined_call_operand.vmem [shape: f32[10,16], index: 0, kind: input, shape index: {}]
  %s1 = inlined_call_operand.vmem [shape: f32[10,16], index: 1, kind: input, shape index: {}]
  %s2 = inlined_call_operand.hbm [shape: f32[1,1], index: 2, kind: output, shape index: {}]
  %s3 = sld [smem:[#allocation0]]
  $region26: #{apc_forward.19} parent=0
    _
  %s5 = ssub.s32 1, %s3
  %s6 = scalar_select 0, %s5, %s3
  $region1: #{apc_forward.19} parent=0
    #allocation3 [shape = 'u8[512]{0}', space=vmem, size = 0x400, scoped, tag = 'output window, operand 0, single buffered']
    #allocation4 [shape = 's32[1]{0}', space=sflag, size = 0x4, scoped, tag = 'scoped memory for apc_forward.19']
    %7 = vsyncpa [#allocation4], 0
    // Predicated region
    $region2: #{apc_forward.19} parent=1 // pred_check
      _
    $region3: #{apc_forward.19} parent=1 // pred_check_branch
      %9 = sbr.rel (0) target = $region5
    $region4: #{apc_forward.19} parent=1 // pred_region
      _
    $region5: #{apc_forward.19} parent=1 // pred_fallthru
      _
    // Predicated region
    $region6: #{apc_forward.19} parent=1 // pred_check
      _
    $region7: #{apc_forward.19} parent=1 // pred_check_branch
      %11 = sbr.rel (0) target = $region9
    $region8: #{apc_forward.19} parent=1 // pred_region
      _
    $region9: #{apc_forward.19} parent=1 // pred_fallthru
      _
    %p12 = scmp.eq.s32.totalorder 0, 0
    // Predicated region
    $region10: #{apc_forward.19} parent=1 // pred_check
      %p13 = pneg %p12
    $region11: #{apc_forward.19} parent=1 // pred_check_branch
      %15 = sbr.rel (%p13) target = $region13
    $region12: #{apc_forward.19} parent=1 // pred_region
      %vm16 = vcmask 0
      %17 = vst.msk [vmem:[#allocation2] sm:$0x1] %vm16, 0.0
    $region13: #{apc_forward.19} parent=1 // pred_fallthru
      _
    %v18 = vld [vmem:[%s1] sm:$0xff]
    %v19 = vld [vmem:[%s1 + $0x8] sm:$0x3]
    %v20 = vld [vmem:[%s0] sm:$0xff]
    %v21 = vld [vmem:[%s0 + $0x8] sm:$0x3]
    %v22 = vsub.f32 %v18, %v20
    %v23 = vsub.f32 %v19, %v21
    %v24 = vand.u32 2147483647, %v22
    %v25 = vand.u32 2147483647, %v23
    %v26 = vlaneseq
    %v27 = vshrl.u32 %v26, 7
    %v28 = vadd.s32 %v27, 8
    %s29 = smul.u32 0, 10
    %v30 = vstv %s29
    %v31 = vadd.s32 %v27, %v30
    %v32 = vadd.s32 %v28, %v30
    %vm33 = vcmp.lt.s32.totalorder %v31, 10
    %vm34 = vcmp.lt.s32.totalorder %v32, 10
    %v35 = vsel %vm33, %v24, 0.0
    %v36 = vsel %vm34, %v25, 0.0
    %v37 = vld [vmem:[#allocation2] sm:$0x1]
    %vm38 = vcmask 130048
    %v39 = vsel %vm38, %v35, 0.0
    %vm40 = vcmask 123904
    %v41 = vsel %vm40, %v36, 0.0
    %v42 = vadd.f32 %v39, %v41
    %43 = vadd.xlane.f32.xlu0 %v42
    %v44 = vpop.xlane.xlu0 %43
    %v45 = vrot.slane %v44, 4
    %v46 = vadd.f32 %v44, %v45
    %v47 = vrot.slane %v46, 2
    %v48 = vadd.f32 %v46, %v47
    %v49 = vrot.slane %v48, 1
    %v50 = vadd.f32 %v48, %v49
    %s51 = vtos %v50
    %v52 = vstv %s51
    %v53 = vadd.f32 %v37, %v52
    %vm54 = vcmask 0
    %55 = vst.msk [vmem:[#allocation2] sm:$0x1] %vm54, %v53
    // Predicated region
    $region14: #{apc_forward.19} parent=1 // pred_check
      %p56 = pneg %p12
    $region15: #{apc_forward.19} parent=1 // pred_check_branch
      %58 = sbr.rel (%p56) target = $region17
    $region16: #{apc_forward.19} parent=1 // pred_region
      %v59 = vld [vmem:[#allocation2] sm:$0x1]
      %v60 = vmul.f32 %v59, 0.1
      %61 = vst.msk [vmem:[#allocation3] sm:$0x1] %vm54, %v60
    $region17: #{apc_forward.19} parent=1 // pred_fallthru
      _
    // Predicated region
    $region18: #{apc_forward.19} parent=1 // pred_check
      _
    $region19: #{apc_forward.19} parent=1 // pred_check_branch
      %63 = sbr.rel (0) target = $region21
    $region20: #{apc_forward.19} parent=1 // pred_region
      %65 = vsyncadd [#allocation4], 0
      %s67 = sshll.u32 [#allocation3], 4
      %s68 = int_to_ptr.vmem [resolvable:$true] %s67
      %s69 = sshll.u32 %s2, 4
      %s70 = int_to_ptr.hbm [resolvable:$true] %s69
      %72 = dma.vmem_to_hbm [thread:$0]  %s68, 16, %s70, [#allocation4]
    $region21: #{apc_forward.19} parent=1 // pred_fallthru
      _
    // Predicated region
    $region22: #{apc_forward.19} parent=1 // pred_check
      _
    $region23: #{apc_forward.19} parent=1 // pred_check_branch
      %74 = sbr.rel (0) target = $region25
    $region24: #{apc_forward.19} parent=1 // pred_region
      %76 = dma.done [#allocation4], 16
    $region25: #{apc_forward.19} parent=1 // pred_fallthru
      _
    %77 = vsyncpa [#allocation4], 1

// kernel: apc_forward.17
$region0: #{apc_forward.17}
  #allocation0 [shape = 'u32[]', space=smem, size = 0x4, offset = 0x4, fixed_abs, tag = 'smem constant byte address 0x4 - core index']
  #allocation1 [shape = 'u32[72,128]{1,0:T(1,128)}', space=vmem, size = 0x9000, scoped, tag = 'internal scratch']
  #allocation2 [shape = 'f32[1,1]{1,0:T(1,128)}', space=vmem, size = 0x200, scoped, tag = 'scratch operand']
  %s0 = inlined_call_operand.vmem [shape: f32[14,16], index: 0, kind: input, shape index: {}]
  %s1 = inlined_call_operand.vmem [shape: f32[14,16], index: 1, kind: input, shape index: {}]
  %s2 = inlined_call_operand.hbm [shape: f32[1,1], index: 2, kind: output, shape index: {}]
  %s3 = sld [smem:[#allocation0]]
  $region26: #{apc_forward.17} parent=0
    _
  %s5 = ssub.s32 1, %s3
  %s6 = scalar_select 0, %s5, %s3
  $region1: #{apc_forward.17} parent=0
    #allocation3 [shape = 'u8[512]{0}', space=vmem, size = 0x400, scoped, tag = 'output window, operand 0, single buffered']
    #allocation4 [shape = 's32[1]{0}', space=sflag, size = 0x4, scoped, tag = 'scoped memory for apc_forward.17']
    %7 = vsyncpa [#allocation4], 0
    // Predicated region
    $region2: #{apc_forward.17} parent=1 // pred_check
      _
    $region3: #{apc_forward.17} parent=1 // pred_check_branch
      %9 = sbr.rel (0) target = $region5
    $region4: #{apc_forward.17} parent=1 // pred_region
      _
    $region5: #{apc_forward.17} parent=1 // pred_fallthru
      _
    // Predicated region
    $region6: #{apc_forward.17} parent=1 // pred_check
      _
    $region7: #{apc_forward.17} parent=1 // pred_check_branch
      %11 = sbr.rel (0) target = $region9
    $region8: #{apc_forward.17} parent=1 // pred_region
      _
    $region9: #{apc_forward.17} parent=1 // pred_fallthru
      _
    %p12 = scmp.eq.s32.totalorder 0, 0
    // Predicated region
    $region10: #{apc_forward.17} parent=1 // pred_check
      %p13 = pneg %p12
    $region11: #{apc_forward.17} parent=1 // pred_check_branch
      %15 = sbr.rel (%p13) target = $region13
    $region12: #{apc_forward.17} parent=1 // pred_region
      %vm16 = vcmask 0
      %17 = vst.msk [vmem:[#allocation2] sm:$0x1] %vm16, 0.0
    $region13: #{apc_forward.17} parent=1 // pred_fallthru
      _
    %v18 = vld [vmem:[%s1] sm:$0xff]
    %v19 = vld [vmem:[%s1 + $0x8] sm:$0x3f]
    %v20 = vld [vmem:[%s0] sm:$0xff]
    %v21 = vld [vmem:[%s0 + $0x8] sm:$0x3f]
    %v22 = vsub.f32 %v18, %v20
    %v23 = vsub.f32 %v19, %v21
    %v24 = vand.u32 2147483647, %v22
    %v25 = vand.u32 2147483647, %v23
    %v26 = vlaneseq
    %v27 = vshrl.u32 %v26, 7
    %v28 = vadd.s32 %v27, 8
    %s29 = smul.u32 0, 14
    %v30 = vstv %s29
    %v31 = vadd.s32 %v27, %v30
    %v32 = vadd.s32 %v28, %v30
    %vm33 = vcmp.lt.s32.totalorder %v31, 14
    %vm34 = vcmp.lt.s32.totalorder %v32, 14
    %v35 = vsel %vm33, %v24, 0.0
    %v36 = vsel %vm34, %v25, 0.0
    %v37 = vld [vmem:[#allocation2] sm:$0x1]
    %vm38 = vcmask 130048
    %v39 = vsel %vm38, %v35, 0.0
    %vm40 = vcmask 128000
    %v41 = vsel %vm40, %v36, 0.0
    %v42 = vadd.f32 %v39, %v41
    %43 = vadd.xlane.f32.xlu0 %v42
    %v44 = vpop.xlane.xlu0 %43
    %v45 = vrot.slane %v44, 4
    %v46 = vadd.f32 %v44, %v45
    %v47 = vrot.slane %v46, 2
    %v48 = vadd.f32 %v46, %v47
    %v49 = vrot.slane %v48, 1
    %v50 = vadd.f32 %v48, %v49
    %s51 = vtos %v50
    %v52 = vstv %s51
    %v53 = vadd.f32 %v37, %v52
    %vm54 = vcmask 0
    %55 = vst.msk [vmem:[#allocation2] sm:$0x1] %vm54, %v53
    // Predicated region
    $region14: #{apc_forward.17} parent=1 // pred_check
      %p56 = pneg %p12
    $region15: #{apc_forward.17} parent=1 // pred_check_branch
      %58 = sbr.rel (%p56) target = $region17
    $region16: #{apc_forward.17} parent=1 // pred_region
      %v59 = vld [vmem:[#allocation2] sm:$0x1]
      %v60 = vmul.f32 %v59, 0.071428575
      %61 = vst.msk [vmem:[#allocation3] sm:$0x1] %vm54, %v60
    $region17: #{apc_forward.17} parent=1 // pred_fallthru
      _
    // Predicated region
    $region18: #{apc_forward.17} parent=1 // pred_check
      _
    $region19: #{apc_forward.17} parent=1 // pred_check_branch
      %63 = sbr.rel (0) target = $region21
    $region20: #{apc_forward.17} parent=1 // pred_region
      %65 = vsyncadd [#allocation4], 0
      %s67 = sshll.u32 [#allocation3], 4
      %s68 = int_to_ptr.vmem [resolvable:$true] %s67
      %s69 = sshll.u32 %s2, 4
      %s70 = int_to_ptr.hbm [resolvable:$true] %s69
      %72 = dma.vmem_to_hbm [thread:$0]  %s68, 16, %s70, [#allocation4]
    $region21: #{apc_forward.17} parent=1 // pred_fallthru
      _
    // Predicated region
    $region22: #{apc_forward.17} parent=1 // pred_check
      _
    $region23: #{apc_forward.17} parent=1 // pred_check_branch
      %74 = sbr.rel (0) target = $region25
    $region24: #{apc_forward.17} parent=1 // pred_region
      %76 = dma.done [#allocation4], 16
    $region25: #{apc_forward.17} parent=1 // pred_fallthru
      _
    %77 = vsyncpa [#allocation4], 1

</llo_original>
